<compile_context>
chip_gen: v7x
topology: tpu7x:2x2x1
jax: 0.10.0
libtpu: 0.0.40
codegen_flags: <defaults>
</compile_context>

<pallas_src>
import functools

import jax
import jax.numpy as jnp
from jax import lax
from jax.experimental import pallas as pl
from jax.experimental.pallas import tpu as pltpu


# Packed small-parameter buffer row layout (per layer), see prepare_params().
_ROWS_PER_LAYER = 8
(_R_LN1G, _R_LN1B, _R_LN2G, _R_LN2B,
 _R_BQKV, _R_BPROJ, _R_B1, _R_B2) = range(_ROWS_PER_LAYER)


def _transformer_kernel(x_ref, wqkv_ref, wproj_ref, w1_ref, w2_ref, wout_ref,
                        pvec_ref, o_ref, *, num_layers, num_heads, head_dim):
    B, T, E = x_ref.shape
    H, D = num_heads, head_dim
    HD = H * D
    BT = B * T
    MLP_H = w1_ref.shape[-1]
    O = wout_ref.shape[-1]

    def pvrow(r, w):
        # One packed small-parameter row, shape (1, w) -> broadcasts over rows.
        return pvec_ref[r:r + 1, :w]

    def layer_norm(h, g, b):
        # torch.nn.LayerNorm (eps=1e-5, biased variance).
        mu = jnp.mean(h, axis=-1, keepdims=True)
        var = jnp.mean(jnp.square(h - mu), axis=-1, keepdims=True)
        return (h - mu) / jnp.sqrt(var + jnp.float32(1e-5)) * g + b

    # (T, T) causal mask built once, broadcast over the (H*B) batch dim.
    rows = lax.broadcasted_iota(jnp.int32, (T, T), 0)
    cols = lax.broadcasted_iota(jnp.int32, (T, T), 1)
    causal = (cols <= rows)[None, :, :]
    neg_big = jnp.float32(-1e30)   # finite => NaN-safe even for fully-masked rows

    # Persistent 2-D activations; (B, T, ...) views only where attention needs them.
    x2 = x_ref[...].astype(jnp.float32).reshape(BT, E)

    for l in range(num_layers):                       # tiny static unroll
        r0 = _ROWS_PER_LAYER * l

        # ---------------- multi-head causal self-attention -------------------
        h2 = layer_norm(x2, pvrow(r0 + _R_LN1G, E), pvrow(r0 + _R_LN1B, E))
        # Fused Q|K|V projection for all heads: one lane-dense MXU pass.
        # (1/sqrt(D) is already folded into the Q columns/bias on the host.)
        qkv = (jnp.dot(h2, wqkv_ref[l], preferred_element_type=jnp.float32)
               + pvrow(r0 + _R_BQKV, 3 * HD))                    # (B*T, 3*H*D)
        qkv = qkv.reshape(B, T, 3 * HD)

        # Stack heads on the leading (batch) axis: z = h*B + b.
        def head_stack(off):
            return jnp.concatenate(
                [qkv[:, :, off + h * D: off + (h + 1) * D] for h in range(H)],
                axis=0)                                          # (H*B, T, D)

        q = head_stack(0)
        k = head_stack(HD)
        v = head_stack(2 * HD)

        # ONE batched score matmul + ONE masked softmax for all heads/batches.
        # Contraction is on the last axes of both operands (no explicit K.T).
        s = jnp.einsum('zqd,zkd->zqk', q, k,
                       preferred_element_type=jnp.float32)       # (H*B, T, T)
        s = jnp.where(causal, s, neg_big)
        m = jnp.max(s, axis=-1, keepdims=True)
        p = jnp.exp(s - m)
        p = p / jnp.sum(p, axis=-1, keepdims=True)               # exact softmax
        o = jnp.einsum('zqk,zkd->zqd', p, v,
                       preferred_element_type=jnp.float32)       # (H*B, T, D)
        o = jnp.maximum(o, 0.0)                                  # relu before proj

        # Distributed output projection (no lane-dim concat of head outputs):
        # mha = sum_h relu(o_h) @ Wproj_h  -- exact because relu is elementwise.
        mha = pvrow(r0 + _R_BPROJ, E)                            # (1, E) bias
        for h in range(H):
            oh = o[h * B:(h + 1) * B].reshape(BT, D)
            mha = mha + jnp.dot(oh, wproj_ref[l, h],
                                preferred_element_type=jnp.float32)
        x2 = x2 + mha                                            # residual

        # ---------------- MLP sublayer ----------------------------------------
        h2 = layer_norm(x2, pvrow(r0 + _R_LN2G, E), pvrow(r0 + _R_LN2B, E))
        m1 = jnp.maximum(
            jnp.dot(h2, w1_ref[l], preferred_element_type=jnp.float32)
            + pvrow(r0 + _R_B1, MLP_H), 0.0)
        m2 = (jnp.dot(m1, w2_ref[l], preferred_element_type=jnp.float32)
              + pvrow(r0 + _R_B2, E))
        x2 = x2 + m2                                             # residual

    # -------- final head (eval): relu -> LayerNorm -> proj of LAST token -----
    rf = _ROWS_PER_LAYER * num_layers
    xl = jnp.maximum(x2.reshape(B, T, E)[:, T - 1:T, :], 0.0).reshape(B, E)
    xl = layer_norm(xl, pvrow(rf + 0, E), pvrow(rf + 1, E))
    y = (jnp.dot(xl, wout_ref[...], preferred_element_type=jnp.float32)
         + pvrow(rf + 2, O))
    o_ref[...] = y.reshape(o_ref.shape).astype(o_ref.dtype)


def _is_v7x():
    try:
        kind = jax.devices()[0].device_kind.lower()
    except Exception:
        return False
    return ("v7" in kind) or ("tpu7" in kind) or ("7x" in kind)


def prepare_params(ln1_g, ln1_b, wqkv, bqkv, wproj, bproj,
                   ln2_g, ln2_b, w1, b1, w2, b2,
                   lnf_g, lnf_b, wout, bout, *, num_heads):
    """One-time host-side parameter prep for the kernel.

    * weights are (in, out) so the kernel computes y = x @ W + b,
    * wqkv columns are ordered [Q_h0..Q_hH | K_h0.. | V_h0..],
    * folds the 1/sqrt(D) attention scale into the Q weights/bias,
    * reshapes wproj to (L, H, D, E) for the per-head distributed projection,
    * packs every small vector (LN gamma/beta + all biases) into one
      (8*L + 3, max_width) f32 buffer -> a single DMA instead of 11.
    """
    L, E, C = wqkv.shape
    HD = C // 3
    D = HD // num_heads
    MLP_H = w1.shape[-1]
    O = wout.shape[-1]

    scale = float(D) ** -0.5
    wqkv = wqkv.astype(jnp.float32).at[:, :, :HD].multiply(scale)
    bqkv = bqkv.astype(jnp.float32).at[:, :HD].multiply(scale)

    width = max(E, C, MLP_H, O)

    def row(v):
        v = jnp.asarray(v, jnp.float32).reshape(-1)
        return jnp.pad(v, (0, width - v.shape[0]))

    rows = []
    for l in range(L):
        rows += [row(ln1_g[l]), row(ln1_b[l]), row(ln2_g[l]), row(ln2_b[l]),
                 row(bqkv[l]), row(bproj[l]), row(b1[l]), row(b2[l])]
    rows += [row(lnf_g), row(lnf_b), row(bout)]
    pvec = jnp.stack(rows)                                   # (8L+3, width)

    wproj_h = wproj.astype(jnp.float32).reshape(L, num_heads, D, E)
    return (wqkv, wproj_h, w1.astype(jnp.float32), w2.astype(jnp.float32),
            wout.astype(jnp.float32), pvec)


def my_transformer_forward(x, wqkv, wproj, w1, w2, wout, pvec, *,
                           num_heads, batch_grid=None):
    """Eval-mode MyTransformer forward -> (B, 1, output_size).

    Takes the kernel-layout params from prepare_params().  batch_grid=None
    auto-selects: a parallel grid over batch on v7x (2 TensorCores/chip),
    a single gridless call on v5e/v6e.
    """
    B, T, E = x.shape
    L = wproj.shape[0]
    D = wproj.shape[2]
    O = wout.shape[-1]

    kernel = functools.partial(_transformer_kernel, num_layers=L,
                               num_heads=num_heads, head_dim=D)
    out_shape = jax.ShapeDtypeStruct((B, 1, O), x.dtype)
    args = (x, wqkv, wproj, w1, w2, wout, pvec)

    if batch_grid is None:
        batch_grid = _is_v7x() and B > 1

    if not batch_grid:
        # Gridless: whole problem (<1 MiB) lives in VMEM in one invocation;
        # BlockSpec tiling / pipelining would only add per-step overhead.
        return pl.pallas_call(kernel, out_shape=out_shape)(*args)

    def full(a):
        zeros = (0,) * a.ndim
        return pl.BlockSpec(a.shape, lambda b: zeros)

    return pl.pallas_call(
        kernel,
        out_shape=out_shape,
        grid=(B,),
        in_specs=[pl.BlockSpec((1, T, E), lambda b: (b, 0, 0)),
                  full(wqkv), full(wproj), full(w1), full(w2), full(wout),
                  full(pvec)],
        out_specs=pl.BlockSpec((1, 1, O), lambda b: (b, 0, 0)),
        compiler_params=pltpu.CompilerParams(
            dimension_semantics=("parallel",)),
    )(*args)


def _reference(x, ln1_g, ln1_b, wqkv, bqkv, wproj, bproj,
               ln2_g, ln2_b, w1, b1, w2, b2, lnf_g, lnf_b, wout, bout,
               *, num_heads):
    """Pure-JAX mirror of the PyTorch MyTransformer eval forward."""
    B, T, E = x.shape
    L = wqkv.shape[0]
    HD = wqkv.shape[-1] // 3
    D = HD // num_heads

    def layer_norm(h, g, b, eps=1e-5):
        mu = h.mean(-1, keepdims=True)
        var = ((h - mu) ** 2).mean(-1, keepdims=True)
        return (h - mu) / jnp.sqrt(var + eps) * g + b

    mask = jnp.tril(jnp.ones((T, T), dtype=bool))
    for l in range(L):
        h = layer_norm(x, ln1_g[l], ln1_b[l])
        qkv = h @ wqkv[l] + bqkv[l]
        heads = []
        for hd in range(num_heads):
            q = qkv[..., hd * D:(hd + 1) * D]
            k = qkv[..., HD + hd * D:HD + (hd + 1) * D]
            v = qkv[..., 2 * HD + hd * D:2 * HD + (hd + 1) * D]
            s = jnp.einsum('btd,bsd->bts', q, k) / jnp.sqrt(jnp.float32(D))
            s = jnp.where(mask, s, -jnp.inf)
            w = jax.nn.softmax(s, axis=-1)
            heads.append(jnp.einsum('bts,bsd->btd', w, v))
        attn = jax.nn.relu(jnp.concatenate(heads, axis=-1))
        x = x + (attn @ wproj[l] + bproj[l])
        h2 = layer_norm(x, ln2_g[l], ln2_b[l])
        x = x + (jax.nn.relu(h2 @ w1[l] + b1[l]) @ w2[l] + b2[l])
    xl = layer_norm(jax.nn.relu(x), lnf_g, lnf_b)
    return xl[:, -1:, :] @ wout + bout


if __name__ == "__main__":
    # Hyperparams: input_size=32, context_size=8, num_layers=2, num_head=4,
    # atten_kqv_size=16 (per-head q/k/v emb), atten_output=32 (== input_size
    # so residuals are valid), mlp_hidden_size=64, output_size=16, dropout=0.
    B, T = 2, 8
    E, L, H, D = 32, 2, 4, 16
    HD = H * D
    MLP_H, O = 64, 16

    key = jax.random.PRNGKey(0)
    ks = jax.random.split(key, 17)

    def u(k, shape, fan_in):
        bound = 1.0 / (fan_in ** 0.5)
        return jax.random.uniform(k, shape, minval=-bound, maxval=bound,
                                  dtype=jnp.float32)

    x = jax.random.normal(ks[0], (B, T, E), dtype=jnp.float32)

    # Per-layer weights stacked on a leading layer axis, stored (in, out).
    wqkv = u(ks[1], (L, E, 3 * HD), E)   # [Q_h0..Q_h3 | K_h0..K_h3 | V_h0..V_h3]
    bqkv = u(ks[2], (L, 3 * HD), E)
    wproj = u(ks[3], (L, HD, E), HD)
    bproj = u(ks[4], (L, E), HD)
    w1 = u(ks[5], (L, E, MLP_H), E)
    b1 = u(ks[6], (L, MLP_H), E)
    w2 = u(ks[7], (L, MLP_H, E), MLP_H)
    b2 = u(ks[8], (L, E), MLP_H)
    ln1_g = 1.0 + 0.1 * jax.random.normal(ks[9], (L, E), dtype=jnp.float32)
    ln1_b = 0.1 * jax.random.normal(ks[10], (L, E), dtype=jnp.float32)
    ln2_g = 1.0 + 0.1 * jax.random.normal(ks[11], (L, E), dtype=jnp.float32)
    ln2_b = 0.1 * jax.random.normal(ks[12], (L, E), dtype=jnp.float32)
    lnf_g = 1.0 + 0.1 * jax.random.normal(ks[13], (E,), dtype=jnp.float32)
    lnf_b = 0.1 * jax.random.normal(ks[14], (E,), dtype=jnp.float32)
    wout = u(ks[15], (E, O), E)
    bout = u(ks[16], (O,), E)

    prepped = prepare_params(ln1_g, ln1_b, wqkv, bqkv, wproj, bproj,
                             ln2_g, ln2_b, w1, b1, w2, b2,
                             lnf_g, lnf_b, wout, bout, num_heads=H)

    # Auto-selected path (gridless on v5e/v6e, parallel batch grid on v7x).
    out = jax.block_until_ready(
        my_transformer_forward(x, *prepped, num_heads=H))

    # Exercise the other path too so both variants are validated on this chip.
    auto_grid = _is_v7x() and B > 1
    out_other = jax.block_until_ready(
        my_transformer_forward(x, *prepped, num_heads=H,
                               batch_grid=not auto_grid))

    with jax.default_matmul_precision("highest"):
        ref = _reference(x, ln1_g, ln1_b, wqkv, bqkv, wproj, bproj,
                         ln2_g, ln2_b, w1, b1, w2, b2, lnf_g, lnf_b, wout, bout,
                         num_heads=H)

    assert out.shape == (B, 1, O)
    assert jnp.allclose(out, ref, atol=1e-4, rtol=1e-4), "mismatch vs reference"
    assert jnp.allclose(out_other, ref, atol=1e-4, rtol=1e-4), \
        "mismatch vs reference (alternate grid path)"

    print("KERNEL_OK")
</pallas_src>

<mosaic_0001>
module attributes {stable_mosaic.version = 11 : i64} {
  func.func @_transformer_kernel(%arg0: memref<2x8x32xf32, #tpu.memory_space<vmem>>, %arg1: memref<2x32x192xf32, #tpu.memory_space<vmem>>, %arg2: memref<2x4x16x32xf32, #tpu.memory_space<vmem>>, %arg3: memref<2x32x64xf32, #tpu.memory_space<vmem>>, %arg4: memref<2x64x32xf32, #tpu.memory_space<vmem>>, %arg5: memref<32x16xf32, #tpu.memory_space<vmem>>, %arg6: memref<19x192xf32, #tpu.memory_space<vmem>>, %arg7: memref<2x1x16xf32, #tpu.memory_space<vmem>>) attributes {dimension_semantics = [], scalar_prefetch = 0 : i64, scratch_operands = 0 : i64, tpu.core_type = #tpu.core_type<tc>} {
    %0 = tpu.iota {dimensions = array<i32: 0>} : vector<8x8xi32>
    %1 = tpu.iota {dimensions = array<i32: 1>} : vector<8x8xi32>
    %2 = arith.cmpi sle, %1, %0 : vector<8x8xi32>
    %3 = vector.shape_cast %2 : vector<8x8xi1> to vector<1x8x8xi1>
    %c0 = arith.constant 0 : index
    %c0_0 = arith.constant 0 : index
    %c0_1 = arith.constant 0 : index
    %4 = vector.load %arg0[%c0, %c0_0, %c0_1] : memref<2x8x32xf32, #tpu.memory_space<vmem>>, vector<2x8x32xf32>
    %5 = vector.shape_cast %4 : vector<2x8x32xf32> to vector<16x32xf32>
    %c0_2 = arith.constant 0 : index
    %c0_3 = arith.constant 0 : index
    %6 = vector.load %arg6[%c0_2, %c0_3] : memref<19x192xf32, #tpu.memory_space<vmem>>, vector<1x32xf32>
    %c1 = arith.constant 1 : index
    %c0_4 = arith.constant 0 : index
    %7 = vector.load %arg6[%c1, %c0_4] : memref<19x192xf32, #tpu.memory_space<vmem>>, vector<1x32xf32>
    %cst = arith.constant dense<0.000000e+00> : vector<16xf32>
    %8 = vector.multi_reduction <add>, %5, %cst [1] : vector<16x32xf32> to vector<16xf32>
    %9 = vector.shape_cast %8 : vector<16xf32> to vector<16x1xf32>
    %cst_5 = arith.constant 3.200000e+01 : f32
    %10 = vector.broadcast %cst_5 : f32 to vector<16x1xf32>
    %11 = arith.divf %9, %10 : vector<16x1xf32>
    %12 = vector.broadcast %11 : vector<16x1xf32> to vector<16x32xf32>
    %13 = arith.subf %5, %12 : vector<16x32xf32>
    %14 = arith.mulf %13, %13 : vector<16x32xf32>
    %cst_6 = arith.constant dense<0.000000e+00> : vector<16xf32>
    %15 = vector.multi_reduction <add>, %14, %cst_6 [1] : vector<16x32xf32> to vector<16xf32>
    %16 = vector.shape_cast %15 : vector<16xf32> to vector<16x1xf32>
    %cst_7 = arith.constant 3.200000e+01 : f32
    %17 = vector.broadcast %cst_7 : f32 to vector<16x1xf32>
    %18 = arith.divf %16, %17 : vector<16x1xf32>
    %19 = vector.broadcast %11 : vector<16x1xf32> to vector<16x32xf32>
    %20 = arith.subf %5, %19 : vector<16x32xf32>
    %cst_8 = arith.constant 9.99999974E-6 : f32
    %21 = vector.broadcast %cst_8 : f32 to vector<16x1xf32>
    %22 = arith.addf %18, %21 : vector<16x1xf32>
    %23 = math.sqrt %22 : vector<16x1xf32>
    %24 = vector.broadcast %23 : vector<16x1xf32> to vector<16x32xf32>
    %25 = arith.divf %20, %24 : vector<16x32xf32>
    %26 = vector.broadcast %6 : vector<1x32xf32> to vector<16x32xf32>
    %27 = arith.mulf %25, %26 : vector<16x32xf32>
    %28 = vector.broadcast %7 : vector<1x32xf32> to vector<16x32xf32>
    %29 = arith.addf %27, %28 : vector<16x32xf32>
    %c0_9 = arith.constant 0 : index
    %c0_10 = arith.constant 0 : index
    %c0_11 = arith.constant 0 : index
    %30 = vector.load %arg1[%c0_9, %c0_10, %c0_11] : memref<2x32x192xf32, #tpu.memory_space<vmem>>, vector<1x32x192xf32>
    %31 = vector.shape_cast %30 : vector<1x32x192xf32> to vector<32x192xf32>
    %cst_12 = arith.constant dense<0.000000e+00> : vector<16x192xf32>
    %32 = tpu.matmul %29, %31, %cst_12 {dimension_numbers = #tpu.dot_dimension_numbers<[1], [0], [0], [1], [0, 0, 1, 1], [], []>} : vector<16x32xf32>, vector<32x192xf32>, vector<16x192xf32> -> vector<16x192xf32>
    %c4 = arith.constant 4 : index
    %c0_13 = arith.constant 0 : index
    %33 = vector.load %arg6[%c4, %c0_13] : memref<19x192xf32, #tpu.memory_space<vmem>>, vector<1x192xf32>
    %34 = vector.broadcast %33 : vector<1x192xf32> to vector<16x192xf32>
    %35 = arith.addf %32, %34 : vector<16x192xf32>
    %36 = vector.shape_cast %35 : vector<16x192xf32> to vector<2x8x192xf32>
    %37 = vector.extract_strided_slice %36 {offsets = [0, 0, 0], sizes = [2, 8, 16], strides = [1, 1, 1]} : vector<2x8x192xf32> to vector<2x8x16xf32>
    %38 = vector.extract_strided_slice %36 {offsets = [0, 0, 16], sizes = [2, 8, 16], strides = [1, 1, 1]} : vector<2x8x192xf32> to vector<2x8x16xf32>
    %39 = vector.extract_strided_slice %36 {offsets = [0, 0, 32], sizes = [2, 8, 16], strides = [1, 1, 1]} : vector<2x8x192xf32> to vector<2x8x16xf32>
    %40 = vector.extract_strided_slice %36 {offsets = [0, 0, 48], sizes = [2, 8, 16], strides = [1, 1, 1]} : vector<2x8x192xf32> to vector<2x8x16xf32>
    %41 = tpu.concatenate %37, %38, %39, %40 in 0 : vector<2x8x16xf32>, vector<2x8x16xf32>, vector<2x8x16xf32>, vector<2x8x16xf32> -> vector<8x8x16xf32>
    %42 = vector.extract_strided_slice %36 {offsets = [0, 0, 64], sizes = [2, 8, 16], strides = [1, 1, 1]} : vector<2x8x192xf32> to vector<2x8x16xf32>
    %43 = vector.extract_strided_slice %36 {offsets = [0, 0, 80], sizes = [2, 8, 16], strides = [1, 1, 1]} : vector<2x8x192xf32> to vector<2x8x16xf32>
    %44 = vector.extract_strided_slice %36 {offsets = [0, 0, 96], sizes = [2, 8, 16], strides = [1, 1, 1]} : vector<2x8x192xf32> to vector<2x8x16xf32>
    %45 = vector.extract_strided_slice %36 {offsets = [0, 0, 112], sizes = [2, 8, 16], strides = [1, 1, 1]} : vector<2x8x192xf32> to vector<2x8x16xf32>
    %46 = tpu.concatenate %42, %43, %44, %45 in 0 : vector<2x8x16xf32>, vector<2x8x16xf32>, vector<2x8x16xf32>, vector<2x8x16xf32> -> vector<8x8x16xf32>
    %47 = vector.extract_strided_slice %36 {offsets = [0, 0, 128], sizes = [2, 8, 16], strides = [1, 1, 1]} : vector<2x8x192xf32> to vector<2x8x16xf32>
    %48 = vector.extract_strided_slice %36 {offsets = [0, 0, 144], sizes = [2, 8, 16], strides = [1, 1, 1]} : vector<2x8x192xf32> to vector<2x8x16xf32>
    %49 = vector.extract_strided_slice %36 {offsets = [0, 0, 160], sizes = [2, 8, 16], strides = [1, 1, 1]} : vector<2x8x192xf32> to vector<2x8x16xf32>
    %50 = vector.extract_strided_slice %36 {offsets = [0, 0, 176], sizes = [2, 8, 16], strides = [1, 1, 1]} : vector<2x8x192xf32> to vector<2x8x16xf32>
    %51 = tpu.concatenate %47, %48, %49, %50 in 0 : vector<2x8x16xf32>, vector<2x8x16xf32>, vector<2x8x16xf32>, vector<2x8x16xf32> -> vector<8x8x16xf32>
    "tpu.trace_start"() <{level = 10 : i32, message = "zqd,zkd->zqk"}> : () -> ()
    %cst_14 = arith.constant dense<0.000000e+00> : vector<8x8x8xf32>
    %52 = tpu.matmul %41, %46, %cst_14 {dimension_numbers = #tpu.dot_dimension_numbers<[2], [2], [1], [1], [0, 0, 0, 1, 1, 1], [0], [0]>} : vector<8x8x16xf32>, vector<8x8x16xf32>, vector<8x8x8xf32> -> vector<8x8x8xf32>
    %cst_15 = arith.constant -1.000000e+30 : f32
    "tpu.trace_stop"() : () -> ()
    %53 = vector.shape_cast %3 : vector<1x8x8xi1> to vector<1x8x8xi1>
    %54 = vector.broadcast %53 : vector<1x8x8xi1> to vector<8x8x8xi1>
    %55 = vector.broadcast %cst_15 : f32 to vector<8x8x8xf32>
    %56 = arith.select %54, %52, %55 : vector<8x8x8xi1>, vector<8x8x8xf32>
    %cst_16 = arith.constant dense<0xFF800000> : vector<8x8xf32>
    %57 = vector.multi_reduction <maximumf>, %56, %cst_16 [2] : vector<8x8x8xf32> to vector<8x8xf32>
    %58 = vector.shape_cast %57 : vector<8x8xf32> to vector<8x8x1xf32>
    %59 = vector.broadcast %58 : vector<8x8x1xf32> to vector<8x8x8xf32>
    %60 = arith.subf %56, %59 : vector<8x8x8xf32>
    %61 = math.exp %60 : vector<8x8x8xf32>
    %cst_17 = arith.constant dense<0.000000e+00> : vector<8x8xf32>
    %62 = vector.multi_reduction <add>, %61, %cst_17 [2] : vector<8x8x8xf32> to vector<8x8xf32>
    %63 = vector.shape_cast %62 : vector<8x8xf32> to vector<8x8x1xf32>
    %64 = vector.broadcast %63 : vector<8x8x1xf32> to vector<8x8x8xf32>
    %65 = arith.divf %61, %64 : vector<8x8x8xf32>
    "tpu.trace_start"() <{level = 10 : i32, message = "zqk,zkd->zqd"}> : () -> ()
    %cst_18 = arith.constant dense<0.000000e+00> : vector<8x8x16xf32>
    %66 = tpu.matmul %65, %51, %cst_18 {dimension_numbers = #tpu.dot_dimension_numbers<[2], [1], [1], [2], [0, 0, 0, 1, 1, 2], [0], [0]>} : vector<8x8x8xf32>, vector<8x8x16xf32>, vector<8x8x16xf32> -> vector<8x8x16xf32>
    "tpu.trace_stop"() : () -> ()
    %cst_19 = arith.constant 0.000000e+00 : f32
    %67 = vector.broadcast %cst_19 : f32 to vector<8x8x16xf32>
    %68 = arith.maximumf %66, %67 : vector<8x8x16xf32>
    %c5 = arith.constant 5 : index
    %c0_20 = arith.constant 0 : index
    %69 = vector.load %arg6[%c5, %c0_20] : memref<19x192xf32, #tpu.memory_space<vmem>>, vector<1x32xf32>
    %70 = vector.extract_strided_slice %68 {offsets = [0, 0, 0], sizes = [2, 8, 16], strides = [1, 1, 1]} : vector<8x8x16xf32> to vector<2x8x16xf32>
    %71 = vector.shape_cast %70 : vector<2x8x16xf32> to vector<16x16xf32>
    %c0_21 = arith.constant 0 : index
    %c0_22 = arith.constant 0 : index
    %c0_23 = arith.constant 0 : index
    %c0_24 = arith.constant 0 : index
    %72 = vector.load %arg2[%c0_21, %c0_22, %c0_23, %c0_24] : memref<2x4x16x32xf32, #tpu.memory_space<vmem>>, vector<1x1x16x32xf32>
    %73 = vector.shape_cast %72 : vector<1x1x16x32xf32> to vector<16x32xf32>
    %cst_25 = arith.constant dense<0.000000e+00> : vector<16x32xf32>
    %74 = tpu.matmul %71, %73, %cst_25 {dimension_numbers = #tpu.dot_dimension_numbers<[1], [0], [0], [1], [0, 0, 1, 1], [], []>} : vector<16x16xf32>, vector<16x32xf32>, vector<16x32xf32> -> vector<16x32xf32>
    %75 = vector.broadcast %69 : vector<1x32xf32> to vector<16x32xf32>
    %76 = arith.addf %75, %74 : vector<16x32xf32>
    %77 = vector.extract_strided_slice %68 {offsets = [2, 0, 0], sizes = [2, 8, 16], strides = [1, 1, 1]} : vector<8x8x16xf32> to vector<2x8x16xf32>
    %78 = vector.shape_cast %77 : vector<2x8x16xf32> to vector<16x16xf32>
    %c0_26 = arith.constant 0 : index
    %c1_27 = arith.constant 1 : index
    %c0_28 = arith.constant 0 : index
    %c0_29 = arith.constant 0 : index
    %79 = vector.load %arg2[%c0_26, %c1_27, %c0_28, %c0_29] : memref<2x4x16x32xf32, #tpu.memory_space<vmem>>, vector<1x1x16x32xf32>
    %80 = vector.shape_cast %79 : vector<1x1x16x32xf32> to vector<16x32xf32>
    %cst_30 = arith.constant dense<0.000000e+00> : vector<16x32xf32>
    %81 = tpu.matmul %78, %80, %cst_30 {dimension_numbers = #tpu.dot_dimension_numbers<[1], [0], [0], [1], [0, 0, 1, 1], [], []>} : vector<16x16xf32>, vector<16x32xf32>, vector<16x32xf32> -> vector<16x32xf32>
    %82 = arith.addf %76, %81 : vector<16x32xf32>
    %83 = vector.extract_strided_slice %68 {offsets = [4, 0, 0], sizes = [2, 8, 16], strides = [1, 1, 1]} : vector<8x8x16xf32> to vector<2x8x16xf32>
    %84 = vector.shape_cast %83 : vector<2x8x16xf32> to vector<16x16xf32>
    %c0_31 = arith.constant 0 : index
    %c2 = arith.constant 2 : index
    %c0_32 = arith.constant 0 : index
    %c0_33 = arith.constant 0 : index
    %85 = vector.load %arg2[%c0_31, %c2, %c0_32, %c0_33] : memref<2x4x16x32xf32, #tpu.memory_space<vmem>>, vector<1x1x16x32xf32>
    %86 = vector.shape_cast %85 : vector<1x1x16x32xf32> to vector<16x32xf32>
    %cst_34 = arith.constant dense<0.000000e+00> : vector<16x32xf32>
    %87 = tpu.matmul %84, %86, %cst_34 {dimension_numbers = #tpu.dot_dimension_numbers<[1], [0], [0], [1], [0, 0, 1, 1], [], []>} : vector<16x16xf32>, vector<16x32xf32>, vector<16x32xf32> -> vector<16x32xf32>
    %88 = arith.addf %82, %87 : vector<16x32xf32>
    %89 = vector.extract_strided_slice %68 {offsets = [6, 0, 0], sizes = [2, 8, 16], strides = [1, 1, 1]} : vector<8x8x16xf32> to vector<2x8x16xf32>
    %90 = vector.shape_cast %89 : vector<2x8x16xf32> to vector<16x16xf32>
    %c0_35 = arith.constant 0 : index
    %c3 = arith.constant 3 : index
    %c0_36 = arith.constant 0 : index
    %c0_37 = arith.constant 0 : index
    %91 = vector.load %arg2[%c0_35, %c3, %c0_36, %c0_37] : memref<2x4x16x32xf32, #tpu.memory_space<vmem>>, vector<1x1x16x32xf32>
    %92 = vector.shape_cast %91 : vector<1x1x16x32xf32> to vector<16x32xf32>
    %cst_38 = arith.constant dense<0.000000e+00> : vector<16x32xf32>
    %93 = tpu.matmul %90, %92, %cst_38 {dimension_numbers = #tpu.dot_dimension_numbers<[1], [0], [0], [1], [0, 0, 1, 1], [], []>} : vector<16x16xf32>, vector<16x32xf32>, vector<16x32xf32> -> vector<16x32xf32>
    %94 = arith.addf %88, %93 : vector<16x32xf32>
    %95 = arith.addf %5, %94 : vector<16x32xf32>
    %c2_39 = arith.constant 2 : index
    %c0_40 = arith.constant 0 : index
    %96 = vector.load %arg6[%c2_39, %c0_40] : memref<19x192xf32, #tpu.memory_space<vmem>>, vector<1x32xf32>
    %c3_41 = arith.constant 3 : index
    %c0_42 = arith.constant 0 : index
    %97 = vector.load %arg6[%c3_41, %c0_42] : memref<19x192xf32, #tpu.memory_space<vmem>>, vector<1x32xf32>
    %cst_43 = arith.constant dense<0.000000e+00> : vector<16xf32>
    %98 = vector.multi_reduction <add>, %95, %cst_43 [1] : vector<16x32xf32> to vector<16xf32>
    %99 = vector.shape_cast %98 : vector<16xf32> to vector<16x1xf32>
    %cst_44 = arith.constant 3.200000e+01 : f32
    %100 = vector.broadcast %cst_44 : f32 to vector<16x1xf32>
    %101 = arith.divf %99, %100 : vector<16x1xf32>
    %102 = vector.broadcast %101 : vector<16x1xf32> to vector<16x32xf32>
    %103 = arith.subf %95, %102 : vector<16x32xf32>
    %104 = arith.mulf %103, %103 : vector<16x32xf32>
    %cst_45 = arith.constant dense<0.000000e+00> : vector<16xf32>
    %105 = vector.multi_reduction <add>, %104, %cst_45 [1] : vector<16x32xf32> to vector<16xf32>
    %106 = vector.shape_cast %105 : vector<16xf32> to vector<16x1xf32>
    %cst_46 = arith.constant 3.200000e+01 : f32
    %107 = vector.broadcast %cst_46 : f32 to vector<16x1xf32>
    %108 = arith.divf %106, %107 : vector<16x1xf32>
    %109 = vector.broadcast %101 : vector<16x1xf32> to vector<16x32xf32>
    %110 = arith.subf %95, %109 : vector<16x32xf32>
    %cst_47 = arith.constant 9.99999974E-6 : f32
    %111 = vector.broadcast %cst_47 : f32 to vector<16x1xf32>
    %112 = arith.addf %108, %111 : vector<16x1xf32>
    %113 = math.sqrt %112 : vector<16x1xf32>
    %114 = vector.broadcast %113 : vector<16x1xf32> to vector<16x32xf32>
    %115 = arith.divf %110, %114 : vector<16x32xf32>
    %116 = vector.broadcast %96 : vector<1x32xf32> to vector<16x32xf32>
    %117 = arith.mulf %115, %116 : vector<16x32xf32>
    %118 = vector.broadcast %97 : vector<1x32xf32> to vector<16x32xf32>
    %119 = arith.addf %117, %118 : vector<16x32xf32>
    %c0_48 = arith.constant 0 : index
    %c0_49 = arith.constant 0 : index
    %c0_50 = arith.constant 0 : index
    %120 = vector.load %arg3[%c0_48, %c0_49, %c0_50] : memref<2x32x64xf32, #tpu.memory_space<vmem>>, vector<1x32x64xf32>
    %121 = vector.shape_cast %120 : vector<1x32x64xf32> to vector<32x64xf32>
    %cst_51 = arith.constant dense<0.000000e+00> : vector<16x64xf32>
    %122 = tpu.matmul %119, %121, %cst_51 {dimension_numbers = #tpu.dot_dimension_numbers<[1], [0], [0], [1], [0, 0, 1, 1], [], []>} : vector<16x32xf32>, vector<32x64xf32>, vector<16x64xf32> -> vector<16x64xf32>
    %c6 = arith.constant 6 : index
    %c0_52 = arith.constant 0 : index
    %123 = vector.load %arg6[%c6, %c0_52] : memref<19x192xf32, #tpu.memory_space<vmem>>, vector<1x64xf32>
    %124 = vector.broadcast %123 : vector<1x64xf32> to vector<16x64xf32>
    %125 = arith.addf %122, %124 : vector<16x64xf32>
    %cst_53 = arith.constant 0.000000e+00 : f32
    %126 = vector.broadcast %cst_53 : f32 to vector<16x64xf32>
    %127 = arith.maximumf %125, %126 : vector<16x64xf32>
    %c0_54 = arith.constant 0 : index
    %c0_55 = arith.constant 0 : index
    %c0_56 = arith.constant 0 : index
    %128 = vector.load %arg4[%c0_54, %c0_55, %c0_56] : memref<2x64x32xf32, #tpu.memory_space<vmem>>, vector<1x64x32xf32>
    %129 = vector.shape_cast %128 : vector<1x64x32xf32> to vector<64x32xf32>
    %cst_57 = arith.constant dense<0.000000e+00> : vector<16x32xf32>
    %130 = tpu.matmul %127, %129, %cst_57 {dimension_numbers = #tpu.dot_dimension_numbers<[1], [0], [0], [1], [0, 0, 1, 1], [], []>} : vector<16x64xf32>, vector<64x32xf32>, vector<16x32xf32> -> vector<16x32xf32>
    %c7 = arith.constant 7 : index
    %c0_58 = arith.constant 0 : index
    %131 = vector.load %arg6[%c7, %c0_58] : memref<19x192xf32, #tpu.memory_space<vmem>>, vector<1x32xf32>
    %132 = vector.broadcast %131 : vector<1x32xf32> to vector<16x32xf32>
    %133 = arith.addf %130, %132 : vector<16x32xf32>
    %134 = arith.addf %95, %133 : vector<16x32xf32>
    %c8 = arith.constant 8 : index
    %c0_59 = arith.constant 0 : index
    %135 = vector.load %arg6[%c8, %c0_59] : memref<19x192xf32, #tpu.memory_space<vmem>>, vector<1x32xf32>
    %c9 = arith.constant 9 : index
    %c0_60 = arith.constant 0 : index
    %136 = vector.load %arg6[%c9, %c0_60] : memref<19x192xf32, #tpu.memory_space<vmem>>, vector<1x32xf32>
    %cst_61 = arith.constant dense<0.000000e+00> : vector<16xf32>
    %137 = vector.multi_reduction <add>, %134, %cst_61 [1] : vector<16x32xf32> to vector<16xf32>
    %138 = vector.shape_cast %137 : vector<16xf32> to vector<16x1xf32>
    %cst_62 = arith.constant 3.200000e+01 : f32
    %139 = vector.broadcast %cst_62 : f32 to vector<16x1xf32>
    %140 = arith.divf %138, %139 : vector<16x1xf32>
    %141 = vector.broadcast %140 : vector<16x1xf32> to vector<16x32xf32>
    %142 = arith.subf %134, %141 : vector<16x32xf32>
    %143 = arith.mulf %142, %142 : vector<16x32xf32>
    %cst_63 = arith.constant dense<0.000000e+00> : vector<16xf32>
    %144 = vector.multi_reduction <add>, %143, %cst_63 [1] : vector<16x32xf32> to vector<16xf32>
    %145 = vector.shape_cast %144 : vector<16xf32> to vector<16x1xf32>
    %cst_64 = arith.constant 3.200000e+01 : f32
    %146 = vector.broadcast %cst_64 : f32 to vector<16x1xf32>
    %147 = arith.divf %145, %146 : vector<16x1xf32>
    %148 = vector.broadcast %140 : vector<16x1xf32> to vector<16x32xf32>
    %149 = arith.subf %134, %148 : vector<16x32xf32>
    %cst_65 = arith.constant 9.99999974E-6 : f32
    %150 = vector.broadcast %cst_65 : f32 to vector<16x1xf32>
    %151 = arith.addf %147, %150 : vector<16x1xf32>
    %152 = math.sqrt %151 : vector<16x1xf32>
    %153 = vector.broadcast %152 : vector<16x1xf32> to vector<16x32xf32>
    %154 = arith.divf %149, %153 : vector<16x32xf32>
    %155 = vector.broadcast %135 : vector<1x32xf32> to vector<16x32xf32>
    %156 = arith.mulf %154, %155 : vector<16x32xf32>
    %157 = vector.broadcast %136 : vector<1x32xf32> to vector<16x32xf32>
    %158 = arith.addf %156, %157 : vector<16x32xf32>
    %c1_66 = arith.constant 1 : index
    %c0_67 = arith.constant 0 : index
    %c0_68 = arith.constant 0 : index
    %159 = vector.load %arg1[%c1_66, %c0_67, %c0_68] : memref<2x32x192xf32, #tpu.memory_space<vmem>>, vector<1x32x192xf32>
    %160 = vector.shape_cast %159 : vector<1x32x192xf32> to vector<32x192xf32>
    %cst_69 = arith.constant dense<0.000000e+00> : vector<16x192xf32>
    %161 = tpu.matmul %158, %160, %cst_69 {dimension_numbers = #tpu.dot_dimension_numbers<[1], [0], [0], [1], [0, 0, 1, 1], [], []>} : vector<16x32xf32>, vector<32x192xf32>, vector<16x192xf32> -> vector<16x192xf32>
    %c12 = arith.constant 12 : index
    %c0_70 = arith.constant 0 : index
    %162 = vector.load %arg6[%c12, %c0_70] : memref<19x192xf32, #tpu.memory_space<vmem>>, vector<1x192xf32>
    %163 = vector.broadcast %162 : vector<1x192xf32> to vector<16x192xf32>
    %164 = arith.addf %161, %163 : vector<16x192xf32>
    %165 = vector.shape_cast %164 : vector<16x192xf32> to vector<2x8x192xf32>
    %166 = vector.extract_strided_slice %165 {offsets = [0, 0, 0], sizes = [2, 8, 16], strides = [1, 1, 1]} : vector<2x8x192xf32> to vector<2x8x16xf32>
    %167 = vector.extract_strided_slice %165 {offsets = [0, 0, 16], sizes = [2, 8, 16], strides = [1, 1, 1]} : vector<2x8x192xf32> to vector<2x8x16xf32>
    %168 = vector.extract_strided_slice %165 {offsets = [0, 0, 32], sizes = [2, 8, 16], strides = [1, 1, 1]} : vector<2x8x192xf32> to vector<2x8x16xf32>
    %169 = vector.extract_strided_slice %165 {offsets = [0, 0, 48], sizes = [2, 8, 16], strides = [1, 1, 1]} : vector<2x8x192xf32> to vector<2x8x16xf32>
    %170 = tpu.concatenate %166, %167, %168, %169 in 0 : vector<2x8x16xf32>, vector<2x8x16xf32>, vector<2x8x16xf32>, vector<2x8x16xf32> -> vector<8x8x16xf32>
    %171 = vector.extract_strided_slice %165 {offsets = [0, 0, 64], sizes = [2, 8, 16], strides = [1, 1, 1]} : vector<2x8x192xf32> to vector<2x8x16xf32>
    %172 = vector.extract_strided_slice %165 {offsets = [0, 0, 80], sizes = [2, 8, 16], strides = [1, 1, 1]} : vector<2x8x192xf32> to vector<2x8x16xf32>
    %173 = vector.extract_strided_slice %165 {offsets = [0, 0, 96], sizes = [2, 8, 16], strides = [1, 1, 1]} : vector<2x8x192xf32> to vector<2x8x16xf32>
    %174 = vector.extract_strided_slice %165 {offsets = [0, 0, 112], sizes = [2, 8, 16], strides = [1, 1, 1]} : vector<2x8x192xf32> to vector<2x8x16xf32>
    %175 = tpu.concatenate %171, %172, %173, %174 in 0 : vector<2x8x16xf32>, vector<2x8x16xf32>, vector<2x8x16xf32>, vector<2x8x16xf32> -> vector<8x8x16xf32>
    %176 = vector.extract_strided_slice %165 {offsets = [0, 0, 128], sizes = [2, 8, 16], strides = [1, 1, 1]} : vector<2x8x192xf32> to vector<2x8x16xf32>
    %177 = vector.extract_strided_slice %165 {offsets = [0, 0, 144], sizes = [2, 8, 16], strides = [1, 1, 1]} : vector<2x8x192xf32> to vector<2x8x16xf32>
    %178 = vector.extract_strided_slice %165 {offsets = [0, 0, 160], sizes = [2, 8, 16], strides = [1, 1, 1]} : vector<2x8x192xf32> to vector<2x8x16xf32>
    %179 = vector.extract_strided_slice %165 {offsets = [0, 0, 176], sizes = [2, 8, 16], strides = [1, 1, 1]} : vector<2x8x192xf32> to vector<2x8x16xf32>
    %180 = tpu.concatenate %176, %177, %178, %179 in 0 : vector<2x8x16xf32>, vector<2x8x16xf32>, vector<2x8x16xf32>, vector<2x8x16xf32> -> vector<8x8x16xf32>
    "tpu.trace_start"() <{level = 10 : i32, message = "zqd,zkd->zqk"}> : () -> ()
    %cst_71 = arith.constant dense<0.000000e+00> : vector<8x8x8xf32>
    %181 = tpu.matmul %170, %175, %cst_71 {dimension_numbers = #tpu.dot_dimension_numbers<[2], [2], [1], [1], [0, 0, 0, 1, 1, 1], [0], [0]>} : vector<8x8x16xf32>, vector<8x8x16xf32>, vector<8x8x8xf32> -> vector<8x8x8xf32>
    %cst_72 = arith.constant -1.000000e+30 : f32
    "tpu.trace_stop"() : () -> ()
    %182 = vector.shape_cast %3 : vector<1x8x8xi1> to vector<1x8x8xi1>
    %183 = vector.broadcast %182 : vector<1x8x8xi1> to vector<8x8x8xi1>
    %184 = vector.broadcast %cst_72 : f32 to vector<8x8x8xf32>
    %185 = arith.select %183, %181, %184 : vector<8x8x8xi1>, vector<8x8x8xf32>
    %cst_73 = arith.constant dense<0xFF800000> : vector<8x8xf32>
    %186 = vector.multi_reduction <maximumf>, %185, %cst_73 [2] : vector<8x8x8xf32> to vector<8x8xf32>
    %187 = vector.shape_cast %186 : vector<8x8xf32> to vector<8x8x1xf32>
    %188 = vector.broadcast %187 : vector<8x8x1xf32> to vector<8x8x8xf32>
    %189 = arith.subf %185, %188 : vector<8x8x8xf32>
    %190 = math.exp %189 : vector<8x8x8xf32>
    %cst_74 = arith.constant dense<0.000000e+00> : vector<8x8xf32>
    %191 = vector.multi_reduction <add>, %190, %cst_74 [2] : vector<8x8x8xf32> to vector<8x8xf32>
    %192 = vector.shape_cast %191 : vector<8x8xf32> to vector<8x8x1xf32>
    %193 = vector.broadcast %192 : vector<8x8x1xf32> to vector<8x8x8xf32>
    %194 = arith.divf %190, %193 : vector<8x8x8xf32>
    "tpu.trace_start"() <{level = 10 : i32, message = "zqk,zkd->zqd"}> : () -> ()
    %cst_75 = arith.constant dense<0.000000e+00> : vector<8x8x16xf32>
    %195 = tpu.matmul %194, %180, %cst_75 {dimension_numbers = #tpu.dot_dimension_numbers<[2], [1], [1], [2], [0, 0, 0, 1, 1, 2], [0], [0]>} : vector<8x8x8xf32>, vector<8x8x16xf32>, vector<8x8x16xf32> -> vector<8x8x16xf32>
    "tpu.trace_stop"() : () -> ()
    %cst_76 = arith.constant 0.000000e+00 : f32
    %196 = vector.broadcast %cst_76 : f32 to vector<8x8x16xf32>
    %197 = arith.maximumf %195, %196 : vector<8x8x16xf32>
    %c13 = arith.constant 13 : index
    %c0_77 = arith.constant 0 : index
    %198 = vector.load %arg6[%c13, %c0_77] : memref<19x192xf32, #tpu.memory_space<vmem>>, vector<1x32xf32>
    %199 = vector.extract_strided_slice %197 {offsets = [0, 0, 0], sizes = [2, 8, 16], strides = [1, 1, 1]} : vector<8x8x16xf32> to vector<2x8x16xf32>
    %200 = vector.shape_cast %199 : vector<2x8x16xf32> to vector<16x16xf32>
    %c1_78 = arith.constant 1 : index
    %c0_79 = arith.constant 0 : index
    %c0_80 = arith.constant 0 : index
    %c0_81 = arith.constant 0 : index
    %201 = vector.load %arg2[%c1_78, %c0_79, %c0_80, %c0_81] : memref<2x4x16x32xf32, #tpu.memory_space<vmem>>, vector<1x1x16x32xf32>
    %202 = vector.shape_cast %201 : vector<1x1x16x32xf32> to vector<16x32xf32>
    %cst_82 = arith.constant dense<0.000000e+00> : vector<16x32xf32>
    %203 = tpu.matmul %200, %202, %cst_82 {dimension_numbers = #tpu.dot_dimension_numbers<[1], [0], [0], [1], [0, 0, 1, 1], [], []>} : vector<16x16xf32>, vector<16x32xf32>, vector<16x32xf32> -> vector<16x32xf32>
    %204 = vector.broadcast %198 : vector<1x32xf32> to vector<16x32xf32>
    %205 = arith.addf %204, %203 : vector<16x32xf32>
    %206 = vector.extract_strided_slice %197 {offsets = [2, 0, 0], sizes = [2, 8, 16], strides = [1, 1, 1]} : vector<8x8x16xf32> to vector<2x8x16xf32>
    %207 = vector.shape_cast %206 : vector<2x8x16xf32> to vector<16x16xf32>
    %c1_83 = arith.constant 1 : index
    %c1_84 = arith.constant 1 : index
    %c0_85 = arith.constant 0 : index
    %c0_86 = arith.constant 0 : index
    %208 = vector.load %arg2[%c1_83, %c1_84, %c0_85, %c0_86] : memref<2x4x16x32xf32, #tpu.memory_space<vmem>>, vector<1x1x16x32xf32>
    %209 = vector.shape_cast %208 : vector<1x1x16x32xf32> to vector<16x32xf32>
    %cst_87 = arith.constant dense<0.000000e+00> : vector<16x32xf32>
    %210 = tpu.matmul %207, %209, %cst_87 {dimension_numbers = #tpu.dot_dimension_numbers<[1], [0], [0], [1], [0, 0, 1, 1], [], []>} : vector<16x16xf32>, vector<16x32xf32>, vector<16x32xf32> -> vector<16x32xf32>
    %211 = arith.addf %205, %210 : vector<16x32xf32>
    %212 = vector.extract_strided_slice %197 {offsets = [4, 0, 0], sizes = [2, 8, 16], strides = [1, 1, 1]} : vector<8x8x16xf32> to vector<2x8x16xf32>
    %213 = vector.shape_cast %212 : vector<2x8x16xf32> to vector<16x16xf32>
    %c1_88 = arith.constant 1 : index
    %c2_89 = arith.constant 2 : index
    %c0_90 = arith.constant 0 : index
    %c0_91 = arith.constant 0 : index
    %214 = vector.load %arg2[%c1_88, %c2_89, %c0_90, %c0_91] : memref<2x4x16x32xf32, #tpu.memory_space<vmem>>, vector<1x1x16x32xf32>
    %215 = vector.shape_cast %214 : vector<1x1x16x32xf32> to vector<16x32xf32>
    %cst_92 = arith.constant dense<0.000000e+00> : vector<16x32xf32>
    %216 = tpu.matmul %213, %215, %cst_92 {dimension_numbers = #tpu.dot_dimension_numbers<[1], [0], [0], [1], [0, 0, 1, 1], [], []>} : vector<16x16xf32>, vector<16x32xf32>, vector<16x32xf32> -> vector<16x32xf32>
    %217 = arith.addf %211, %216 : vector<16x32xf32>
    %218 = vector.extract_strided_slice %197 {offsets = [6, 0, 0], sizes = [2, 8, 16], strides = [1, 1, 1]} : vector<8x8x16xf32> to vector<2x8x16xf32>
    %219 = vector.shape_cast %218 : vector<2x8x16xf32> to vector<16x16xf32>
    %c1_93 = arith.constant 1 : index
    %c3_94 = arith.constant 3 : index
    %c0_95 = arith.constant 0 : index
    %c0_96 = arith.constant 0 : index
    %220 = vector.load %arg2[%c1_93, %c3_94, %c0_95, %c0_96] : memref<2x4x16x32xf32, #tpu.memory_space<vmem>>, vector<1x1x16x32xf32>
    %221 = vector.shape_cast %220 : vector<1x1x16x32xf32> to vector<16x32xf32>
    %cst_97 = arith.constant dense<0.000000e+00> : vector<16x32xf32>
    %222 = tpu.matmul %219, %221, %cst_97 {dimension_numbers = #tpu.dot_dimension_numbers<[1], [0], [0], [1], [0, 0, 1, 1], [], []>} : vector<16x16xf32>, vector<16x32xf32>, vector<16x32xf32> -> vector<16x32xf32>
    %223 = arith.addf %217, %222 : vector<16x32xf32>
    %224 = arith.addf %134, %223 : vector<16x32xf32>
    %c10 = arith.constant 10 : index
    %c0_98 = arith.constant 0 : index
    %225 = vector.load %arg6[%c10, %c0_98] : memref<19x192xf32, #tpu.memory_space<vmem>>, vector<1x32xf32>
    %c11 = arith.constant 11 : index
    %c0_99 = arith.constant 0 : index
    %226 = vector.load %arg6[%c11, %c0_99] : memref<19x192xf32, #tpu.memory_space<vmem>>, vector<1x32xf32>
    %cst_100 = arith.constant dense<0.000000e+00> : vector<16xf32>
    %227 = vector.multi_reduction <add>, %224, %cst_100 [1] : vector<16x32xf32> to vector<16xf32>
    %228 = vector.shape_cast %227 : vector<16xf32> to vector<16x1xf32>
    %cst_101 = arith.constant 3.200000e+01 : f32
    %229 = vector.broadcast %cst_101 : f32 to vector<16x1xf32>
    %230 = arith.divf %228, %229 : vector<16x1xf32>
    %231 = vector.broadcast %230 : vector<16x1xf32> to vector<16x32xf32>
    %232 = arith.subf %224, %231 : vector<16x32xf32>
    %233 = arith.mulf %232, %232 : vector<16x32xf32>
    %cst_102 = arith.constant dense<0.000000e+00> : vector<16xf32>
    %234 = vector.multi_reduction <add>, %233, %cst_102 [1] : vector<16x32xf32> to vector<16xf32>
    %235 = vector.shape_cast %234 : vector<16xf32> to vector<16x1xf32>
    %cst_103 = arith.constant 3.200000e+01 : f32
    %236 = vector.broadcast %cst_103 : f32 to vector<16x1xf32>
    %237 = arith.divf %235, %236 : vector<16x1xf32>
    %238 = vector.broadcast %230 : vector<16x1xf32> to vector<16x32xf32>
    %239 = arith.subf %224, %238 : vector<16x32xf32>
    %cst_104 = arith.constant 9.99999974E-6 : f32
    %240 = vector.broadcast %cst_104 : f32 to vector<16x1xf32>
    %241 = arith.addf %237, %240 : vector<16x1xf32>
    %242 = math.sqrt %241 : vector<16x1xf32>
    %243 = vector.broadcast %242 : vector<16x1xf32> to vector<16x32xf32>
    %244 = arith.divf %239, %243 : vector<16x32xf32>
    %245 = vector.broadcast %225 : vector<1x32xf32> to vector<16x32xf32>
    %246 = arith.mulf %244, %245 : vector<16x32xf32>
    %247 = vector.broadcast %226 : vector<1x32xf32> to vector<16x32xf32>
    %248 = arith.addf %246, %247 : vector<16x32xf32>
    %c1_105 = arith.constant 1 : index
    %c0_106 = arith.constant 0 : index
    %c0_107 = arith.constant 0 : index
    %249 = vector.load %arg3[%c1_105, %c0_106, %c0_107] : memref<2x32x64xf32, #tpu.memory_space<vmem>>, vector<1x32x64xf32>
    %250 = vector.shape_cast %249 : vector<1x32x64xf32> to vector<32x64xf32>
    %cst_108 = arith.constant dense<0.000000e+00> : vector<16x64xf32>
    %251 = tpu.matmul %248, %250, %cst_108 {dimension_numbers = #tpu.dot_dimension_numbers<[1], [0], [0], [1], [0, 0, 1, 1], [], []>} : vector<16x32xf32>, vector<32x64xf32>, vector<16x64xf32> -> vector<16x64xf32>
    %c14 = arith.constant 14 : index
    %c0_109 = arith.constant 0 : index
    %252 = vector.load %arg6[%c14, %c0_109] : memref<19x192xf32, #tpu.memory_space<vmem>>, vector<1x64xf32>
    %253 = vector.broadcast %252 : vector<1x64xf32> to vector<16x64xf32>
    %254 = arith.addf %251, %253 : vector<16x64xf32>
    %cst_110 = arith.constant 0.000000e+00 : f32
    %255 = vector.broadcast %cst_110 : f32 to vector<16x64xf32>
    %256 = arith.maximumf %254, %255 : vector<16x64xf32>
    %c1_111 = arith.constant 1 : index
    %c0_112 = arith.constant 0 : index
    %c0_113 = arith.constant 0 : index
    %257 = vector.load %arg4[%c1_111, %c0_112, %c0_113] : memref<2x64x32xf32, #tpu.memory_space<vmem>>, vector<1x64x32xf32>
    %258 = vector.shape_cast %257 : vector<1x64x32xf32> to vector<64x32xf32>
    %cst_114 = arith.constant dense<0.000000e+00> : vector<16x32xf32>
    %259 = tpu.matmul %256, %258, %cst_114 {dimension_numbers = #tpu.dot_dimension_numbers<[1], [0], [0], [1], [0, 0, 1, 1], [], []>} : vector<16x64xf32>, vector<64x32xf32>, vector<16x32xf32> -> vector<16x32xf32>
    %c15 = arith.constant 15 : index
    %c0_115 = arith.constant 0 : index
    %260 = vector.load %arg6[%c15, %c0_115] : memref<19x192xf32, #tpu.memory_space<vmem>>, vector<1x32xf32>
    %261 = vector.broadcast %260 : vector<1x32xf32> to vector<16x32xf32>
    %262 = arith.addf %259, %261 : vector<16x32xf32>
    %263 = arith.addf %224, %262 : vector<16x32xf32>
    %264 = vector.shape_cast %263 : vector<16x32xf32> to vector<2x8x32xf32>
    %265 = vector.extract_strided_slice %264 {offsets = [0, 7, 0], sizes = [2, 1, 32], strides = [1, 1, 1]} : vector<2x8x32xf32> to vector<2x1x32xf32>
    %cst_116 = arith.constant 0.000000e+00 : f32
    %266 = vector.broadcast %cst_116 : f32 to vector<2x1x32xf32>
    %267 = arith.maximumf %265, %266 : vector<2x1x32xf32>
    %268 = vector.shape_cast %267 : vector<2x1x32xf32> to vector<2x32xf32>
    %c16 = arith.constant 16 : index
    %c0_117 = arith.constant 0 : index
    %269 = vector.load %arg6[%c16, %c0_117] : memref<19x192xf32, #tpu.memory_space<vmem>>, vector<1x32xf32>
    %c17 = arith.constant 17 : index
    %c0_118 = arith.constant 0 : index
    %270 = vector.load %arg6[%c17, %c0_118] : memref<19x192xf32, #tpu.memory_space<vmem>>, vector<1x32xf32>
    %cst_119 = arith.constant dense<0.000000e+00> : vector<2xf32>
    %271 = vector.multi_reduction <add>, %268, %cst_119 [1] : vector<2x32xf32> to vector<2xf32>
    %272 = vector.shape_cast %271 : vector<2xf32> to vector<2x1xf32>
    %cst_120 = arith.constant 3.200000e+01 : f32
    %273 = vector.broadcast %cst_120 : f32 to vector<2x1xf32>
    %274 = arith.divf %272, %273 : vector<2x1xf32>
    %275 = vector.broadcast %274 : vector<2x1xf32> to vector<2x32xf32>
    %276 = arith.subf %268, %275 : vector<2x32xf32>
    %277 = arith.mulf %276, %276 : vector<2x32xf32>
    %cst_121 = arith.constant dense<0.000000e+00> : vector<2xf32>
    %278 = vector.multi_reduction <add>, %277, %cst_121 [1] : vector<2x32xf32> to vector<2xf32>
    %279 = vector.shape_cast %278 : vector<2xf32> to vector<2x1xf32>
    %cst_122 = arith.constant 3.200000e+01 : f32
    %280 = vector.broadcast %cst_122 : f32 to vector<2x1xf32>
    %281 = arith.divf %279, %280 : vector<2x1xf32>
    %282 = vector.broadcast %274 : vector<2x1xf32> to vector<2x32xf32>
    %283 = arith.subf %268, %282 : vector<2x32xf32>
    %cst_123 = arith.constant 9.99999974E-6 : f32
    %284 = vector.broadcast %cst_123 : f32 to vector<2x1xf32>
    %285 = arith.addf %281, %284 : vector<2x1xf32>
    %286 = math.sqrt %285 : vector<2x1xf32>
    %287 = vector.broadcast %286 : vector<2x1xf32> to vector<2x32xf32>
    %288 = arith.divf %283, %287 : vector<2x32xf32>
    %289 = vector.broadcast %269 : vector<1x32xf32> to vector<2x32xf32>
    %290 = arith.mulf %288, %289 : vector<2x32xf32>
    %291 = vector.broadcast %270 : vector<1x32xf32> to vector<2x32xf32>
    %292 = arith.addf %290, %291 : vector<2x32xf32>
    %c0_124 = arith.constant 0 : index
    %c0_125 = arith.constant 0 : index
    %293 = vector.load %arg5[%c0_124, %c0_125] : memref<32x16xf32, #tpu.memory_space<vmem>>, vector<32x16xf32>
    %cst_126 = arith.constant dense<0.000000e+00> : vector<2x16xf32>
    %294 = tpu.matmul %292, %293, %cst_126 {dimension_numbers = #tpu.dot_dimension_numbers<[1], [0], [0], [1], [0, 0, 1, 1], [], []>} : vector<2x32xf32>, vector<32x16xf32>, vector<2x16xf32> -> vector<2x16xf32>
    %c18 = arith.constant 18 : index
    %c0_127 = arith.constant 0 : index
    %295 = vector.load %arg6[%c18, %c0_127] : memref<19x192xf32, #tpu.memory_space<vmem>>, vector<1x16xf32>
    %296 = vector.broadcast %295 : vector<1x16xf32> to vector<2x16xf32>
    %297 = arith.addf %294, %296 : vector<2x16xf32>
    %298 = vector.shape_cast %297 : vector<2x16xf32> to vector<2x1x16xf32>
    %c0_128 = arith.constant 0 : index
    %c0_129 = arith.constant 0 : index
    %c0_130 = arith.constant 0 : index
    %299 = vector.load %arg7[%c0_128, %c0_129, %c0_130] : memref<2x1x16xf32, #tpu.memory_space<vmem>>, vector<2x1x16xf32>
    tpu.vector_store %arg7[%c0_128, %c0_129, %c0_130], %298 {strides = array<i32>} : memref<2x1x16xf32, #tpu.memory_space<vmem>>, vector<2x1x16xf32>,
    return
  }
}

</mosaic_0001>

<llo_original>
// kernel: tpu_custom_call.1
$region0: #{tpu_custom_call.1}
  #allocation0 [shape = 'u32[]', space=smem, size = 0x4, offset = 0x4, fixed_abs, tag = 'smem constant byte address 0x4 - core index']
  #allocation1 [shape = 'u32[144,128]{1,0:T(1,128)}', space=vmem, size = 0x12000, scoped, tag = 'internal scratch']
  %s0 = inlined_call_operand.hbm [shape: f32[2,8,32], index: 0, kind: input, shape index: {}]
  %s1 = inlined_call_operand.vmem [shape: f32[2,32,192], index: 1, kind: input, shape index: {}]
  %s2 = inlined_call_operand.hbm [shape: f32[2,4,16,32], index: 2, kind: input, shape index: {}]
  %s3 = inlined_call_operand.vmem [shape: f32[2,32,64], index: 3, kind: input, shape index: {}]
  %s4 = inlined_call_operand.vmem [shape: f32[2,64,32], index: 4, kind: input, shape index: {}]
  %s5 = inlined_call_operand.vmem [shape: f32[32,16], index: 5, kind: input, shape index: {}]
  %s6 = inlined_call_operand.vmem [shape: f32[19,192], index: 6, kind: input, shape index: {}]
  %s7 = inlined_call_operand.hbm [shape: f32[2,1,16], index: 7, kind: output, shape index: {}]
  %s8 = sld [smem:[#allocation0]]
  $region46: #{tpu_custom_call.1} parent=0
    _
  %s10 = ssub.s32 1, %s8
  %s11 = scalar_select 0, %s10, %s8
  $region1: #{tpu_custom_call.1} parent=0
    #allocation2 [shape = 'u8[8192]{0}', space=vmem, size = 0x2000, scoped, tag = 'input window, operand 0, single buffered']
    #allocation3 [shape = 's32[1]{0}', space=sflag, size = 0x4, scoped, tag = 'scoped memory for tpu_custom_call.1']
    #allocation4 [shape = 's32[1]{0}', space=sflag, size = 0x4, scoped, tag = 'scoped memory for tpu_custom_call.1']
    #allocation5 [shape = 'u8[65536]{0}', space=vmem, size = 0x10000, scoped, tag = 'input window, operand 2, single buffered']
    #allocation6 [shape = 's32[1]{0}', space=sflag, size = 0x4, scoped, tag = 'scoped memory for tpu_custom_call.1']
    #allocation7 [shape = 'u8[1024]{0}', space=vmem, size = 0x400, scoped, tag = 'output window, operand 0, single buffered']
    %12 = vsyncpa [#allocation3], 0
    %13 = vsyncpa [#allocation6], 0
    %14 = vsyncpa [#allocation4], 0
    // Predicated region
    $region2: #{tpu_custom_call.1} parent=1 // pred_check
      _
    $region3: #{tpu_custom_call.1} parent=1 // pred_check_branch
      %16 = sbr.rel (0) target = $region5
    $region4: #{tpu_custom_call.1} parent=1 // pred_region
      %s18 = ssub.s32 256, 256
      %19 = vsyncadd [#allocation3], %s18
      %s20 = sshll.u32 [#allocation2], 4
      %s21 = int_to_ptr.vmem [resolvable:$true] %s20
      %26 = dma.hbm_to_vmem [thread:$0]  %s0, 256, %s21, [#allocation3], 128, 128, 8
    $region5: #{tpu_custom_call.1} parent=1 // pred_fallthru
      _
    // Predicated region
    $region6: #{tpu_custom_call.1} parent=1 // pred_check
      _
    $region7: #{tpu_custom_call.1} parent=1 // pred_check_branch
      %28 = sbr.rel (0) target = $region9
    $region8: #{tpu_custom_call.1} parent=1 // pred_region
      _
    $region9: #{tpu_custom_call.1} parent=1 // pred_fallthru
      _
    // Predicated region
    $region10: #{tpu_custom_call.1} parent=1 // pred_check
      _
    $region11: #{tpu_custom_call.1} parent=1 // pred_check_branch
      %30 = sbr.rel (0) target = $region13
    $region12: #{tpu_custom_call.1} parent=1 // pred_region
      %s32 = ssub.s32 2048, 2048
      %33 = vsyncadd [#allocation6], %s32
      %s34 = sshll.u32 [#allocation5], 4
      %s35 = int_to_ptr.vmem [resolvable:$true] %s34
      %40 = dma.hbm_to_vmem [thread:$0]  %s2, 2048, %s35, [#allocation6], 128, 128, 8
    $region13: #{tpu_custom_call.1} parent=1 // pred_fallthru
      _
    // Predicated region
    $region14: #{tpu_custom_call.1} parent=1 // pred_check
      _
    $region15: #{tpu_custom_call.1} parent=1 // pred_check_branch
      %42 = sbr.rel (0) target = $region17
    $region16: #{tpu_custom_call.1} parent=1 // pred_region
      _
    $region17: #{tpu_custom_call.1} parent=1 // pred_fallthru
      _
    // Predicated region
    $region18: #{tpu_custom_call.1} parent=1 // pred_check
      _
    $region19: #{tpu_custom_call.1} parent=1 // pred_check_branch
      %44 = sbr.rel (0) target = $region21
    $region20: #{tpu_custom_call.1} parent=1 // pred_region
      _
    $region21: #{tpu_custom_call.1} parent=1 // pred_fallthru
      _
    // Predicated region
    $region22: #{tpu_custom_call.1} parent=1 // pred_check
      _
    $region23: #{tpu_custom_call.1} parent=1 // pred_check_branch
      %46 = sbr.rel (0) target = $region25
    $region24: #{tpu_custom_call.1} parent=1 // pred_region
      _
    $region25: #{tpu_custom_call.1} parent=1 // pred_fallthru
      _
    // Predicated region
    $region26: #{tpu_custom_call.1} parent=1 // pred_check
      _
    $region27: #{tpu_custom_call.1} parent=1 // pred_check_branch
      %48 = sbr.rel (0) target = $region29
    $region28: #{tpu_custom_call.1} parent=1 // pred_region
      _
    $region29: #{tpu_custom_call.1} parent=1 // pred_fallthru
      _
    // Predicated region
    $region30: #{tpu_custom_call.1} parent=1 // pred_check
      _
    $region31: #{tpu_custom_call.1} parent=1 // pred_check_branch
      %50 = sbr.rel (0) target = $region33
    $region32: #{tpu_custom_call.1} parent=1 // pred_region
      %51 = dma.done [#allocation3], 256
    $region33: #{tpu_custom_call.1} parent=1 // pred_fallthru
      _
    // Predicated region
    $region34: #{tpu_custom_call.1} parent=1 // pred_check
      _
    $region35: #{tpu_custom_call.1} parent=1 // pred_check_branch
      %53 = sbr.rel (0) target = $region37
    $region36: #{tpu_custom_call.1} parent=1 // pred_region
      %54 = dma.done [#allocation6], 2048
    $region37: #{tpu_custom_call.1} parent=1 // pred_fallthru
      _
    %v55 = vlaneseq
    %v56 = vshrl.u32 %v55, 7
    %v57 = vlaneseq
    %v58 = vand.u32 %v57, 127
    %vm59 = vcmp.le.s32.totalorder %v58, %v56
    %v60 = vld [vmem:[#allocation2] sm:$0xff]
    %v61 = vld [vmem:[#allocation2 + $0x8] sm:$0xff]
    %v62 = vld [vmem:[%s6] ss:$0 sm:$0xff]
    %v63 = vld [vmem:[%s6 + $0x1] ss:$0 sm:$0xff]
    %vm64 = vcmask 261120
    %v65 = vsel %vm64, %v60, 0.0
    %66 = vadd.xlane.f32.xlu0 %v65
    %v67 = vpop.xlane.xlu0 %66
    %v68 = vsel %vm64, %v61, 0.0
    %69 = vadd.xlane.f32.xlu0 %v68
    %v70 = vpop.xlane.xlu0 %69
    %v71 = vrcp.pop 32.0
    %v72 = vmul.f32 %v67, %v71
    %v73 = vmul.f32 %v70, %v71
    %v74 = vsub.f32 %v60, %v72
    %v75 = vsub.f32 %v61, %v73
    %v76 = vmul.f32 %v74, %v74
    %v77 = vmul.f32 %v75, %v75
    %v78 = vsel %vm64, %v76, 0.0
    %79 = vadd.xlane.f32.xlu0 %v78
    %v80 = vpop.xlane.xlu0 %79
    %v81 = vsel %vm64, %v77, 0.0
    %82 = vadd.xlane.f32.xlu0 %v81
    %v83 = vpop.xlane.xlu0 %82
    %v84 = vmul.f32 %v80, %v71
    %v85 = vmul.f32 %v83, %v71
    %v86 = vadd.f32 %v84, 1e-05
    %v87 = vadd.f32 %v85, 1e-05
    %v88 = vrsqrt.pop %v86
    %v89 = vmul.f32 %v86, %v88
    %vm90 = vcmp.eq.f32.partialorder %v86, inf
    %v91 = vsel %vm90, %v86, %v89
    %vm92 = vcmp.eq.f32.partialorder %v86, 0.0
    %v93 = vand.u32 %v86, 2147483648
    %v94 = vsel %vm92, %v93, %v91
    %v95 = vrsqrt.pop %v87
    %v96 = vmul.f32 %v87, %v95
    %vm97 = vcmp.eq.f32.partialorder %v87, inf
    %v98 = vsel %vm97, %v87, %v96
    %vm99 = vcmp.eq.f32.partialorder %v87, 0.0
    %v100 = vand.u32 %v87, 2147483648
    %v101 = vsel %vm99, %v100, %v98
    %v102 = vrcp.pop %v94
    %v103 = vmul.f32 %v74, %v102
    %v104 = vrcp.pop %v101
    %v105 = vmul.f32 %v75, %v104
    %v106 = vmul.f32 %v103, %v62
    %v107 = vmul.f32 %v105, %v62
    %v108 = vadd.f32 %v106, %v63
    %v109 = vadd.f32 %v107, %v63
    %v110 = vld [vmem:[%s1] sm:$0xff]
    %v111 = vld [vmem:[%s1 + $0x8] sm:$0xff]
    %v112 = vld [vmem:[%s1 + $0x10] sm:$0xff]
    %v113 = vld [vmem:[%s1 + $0x18] sm:$0xff]
    %v114 = vld [vmem:[%s1 + $0x20] sm:$0xff]
    %v115 = vld [vmem:[%s1 + $0x28] sm:$0xff]
    %v116 = vld [vmem:[%s1 + $0x30] sm:$0xff]
    %v117 = vld [vmem:[%s1 + $0x38] sm:$0xff]
    %s118 = scalar_lea.vmem %s6, 4
    %v119 = vld [vmem:[%s118] ss:$8 sm:$0x3]
    %v121 = vlaneseq
    %v122 = vshrl.u32 %v121, 7
    %v123 = vsub.s32 0, %v122
    %v124 = vrot.slane %v119, %v123
    %v125 = vlaneseq
    %v126 = vshrl.u32 %v125, 7
    %v127 = vsub.s32 1, %v126
    %v128 = vrot.slane %v119, %v127
    %v132 = vsel %vm64, %v108, 0
    %v135 = vsel %vm64, %v109, 0
    %137 = vmatprep.subr.mxu0 %v111
    %138 = vmatpush1.msra.mxu0 %v110
    %139 = vmatprep.subr.mxu0 %v113
    %140 = vmatpush1.msra.mxu0 %v112
    %141 = vmatprep.subr.mxu0 %v115
    %142 = vmatpush1.msra.mxu0 %v114
    %143 = vmatprep.subr.mxu0 %v117
    %144 = vmatpush1.msra.mxu0 %v116
    %145 = vmatprep.subr.mxu0 0.0
    %146 = vmatpush1.msra.mxu0 0.0
    %147 = vmatprep.subr.mxu0 0.0
    %148 = vmatpush1.msra.mxu0 0.0
    %149 = vmatprep.subr.mxu0 0.0
    %150 = vmatpush1.msra.mxu0 0.0
    %151 = vmatprep.subr.mxu0 0.0
    %152 = vmatpush1.msra.mxu0 0.0
    %153 = vmatprep.subr.mxu0 0.0
    %154 = vmatpush1.msra.mxu0 0.0
    %155 = vmatprep.subr.mxu0 0.0
    %156 = vmatpush1.msra.mxu0 0.0
    %157 = vmatprep.subr.mxu0 0.0
    %158 = vmatpush1.msra.mxu0 0.0
    %159 = vmatprep.subr.mxu0 0.0
    %160 = vmatpush1.msra.mxu0 0.0
    %161 = vmatprep.subr.mxu0 0.0
    %162 = vmatpush1.msra.mxu0 0.0
    %163 = vmatprep.subr.mxu0 0.0
    %164 = vmatpush1.msra.mxu0 0.0
    %165 = vmatprep.subr.mxu0 0.0
    %166 = vmatpush1.msra.mxu0 0.0
    %167 = vmatprep.subr.mxu0 0.0
    %168 = vmatpush1.msra.mxu0 0.0
    %169 = vmatprep.subr.mxu0 0.0
    %170 = vmatpush1.msra.mxu0 0.0
    %171 = vmatprep.subr.mxu0 0.0
    %172 = vmatpush1.msra.mxu0 0.0
    %173 = vmatprep.subr.mxu0 0.0
    %174 = vmatpush1.msra.mxu0 0.0
    %175 = vmatprep.subr.mxu0 0.0
    %176 = vmatpush1.msra.mxu0 0.0
    %177 = vmatprep.subr.mxu0 0.0
    %178 = vmatpush1.msra.mxu0 0.0
    %179 = vmatprep.subr.mxu0 0.0
    %180 = vmatpush1.msra.mxu0 0.0
    %181 = vmatprep.subr.mxu0 0.0
    %182 = vmatpush1.msra.mxu0 0.0
    %183 = vmatprep.subr.mxu0 0.0
    %184 = vmatpush1.msra.mxu0 0.0
    %185 = vmatprep.subr.mxu0 0.0
    %186 = vmatpush1.msra.mxu0 0.0
    %187 = vmatprep.subr.mxu0 0.0
    %188 = vmatpush1.msra.mxu0 0.0
    %189 = vmatprep.subr.mxu0 0.0
    %190 = vmatpush1.msra.mxu0 0.0
    %191 = vmatprep.subr.mxu0 0.0
    %192 = vmatpush1.msra.mxu0 0.0
    %193 = vmatprep.subr.mxu0 0.0
    %194 = vmatpush1.msra.mxu0 0.0
    %195 = vmatprep.subr.mxu0 0.0
    %196 = vmatpush1.msra.mxu0 0.0
    %197 = vmatprep.subr.mxu0 0.0
    %198 = vmatpush1.msra.mxu0 0.0
    %199 = vmatprep.subr.mxu0 0.0
    %200 = vmatpush1.msra.mxu0 0.0
    %201 = vmatprep.mubr.f32.mxu0 0.0
    %202 = vmatmul.mubr.f32.gmra.mrb[0].mxu0 %v132
    %v203 = vpop.f32.mrb[0].mxu0
    %v204 = vadd.f32 %v124, %v203
    %v205 = vpop.f32.mrb[0].mxu0
    %v206 = vadd.f32 %v128, %v205
    %207 = vmatprep.mubr.f32.mxu0 0.0
    %208 = vmatmul.mubr.f32.gmra.mrb[0].mxu0 %v135
    %v209 = vpop.f32.mrb[0].mxu0
    %v210 = vadd.f32 %v124, %v209
    %v211 = vpop.f32.mrb[0].mxu0
    %v212 = vadd.f32 %v128, %v211
    %213 = vdwg.mxu0
    %216 = vrot.lane.b32.xlu0 %v204, 112
    %v217 = vpop.permute.xlu0 %216
    %218 = vrot.lane.b32.xlu0 %v210, 112
    %v219 = vpop.permute.xlu0 %218
    %220 = vrot.lane.b32.xlu0 %v204, 96
    %v221 = vpop.permute.xlu0 %220
    %222 = vrot.lane.b32.xlu0 %v210, 96
    %v223 = vpop.permute.xlu0 %222
    %224 = vrot.lane.b32.xlu0 %v204, 80
    %v225 = vpop.permute.xlu0 %224
    %226 = vrot.lane.b32.xlu0 %v210, 80
    %v227 = vpop.permute.xlu0 %226
    %230 = vrot.lane.b32.xlu0 %v206, 112
    %v231 = vpop.permute.xlu0 %230
    %232 = vrot.lane.b32.xlu0 %v212, 112
    %v233 = vpop.permute.xlu0 %232
    %236 = vrot.lane.b32.xlu0 %v206, 96
    %v237 = vpop.permute.xlu0 %236
    %238 = vrot.lane.b32.xlu0 %v212, 96
    %v239 = vpop.permute.xlu0 %238
    %242 = vrot.lane.b32.xlu0 %v206, 80
    %v243 = vpop.permute.xlu0 %242
    %244 = vrot.lane.b32.xlu0 %v212, 80
    %v245 = vpop.permute.xlu0 %244
    %248 = vrot.lane.b32.xlu0 %v204, 64
    %v249 = vpop.permute.xlu0 %248
    %vm250 = vcmask 130048
    %v251 = vsel %vm250, %v204, 0
    %v253 = vsel %vm250, %v249, 0
    %255 = vmatprep.subr.mxu0 0.0
    %256 = vmatpush1.xpose.msra.mxu0 %v253
    %257 = vmatprep.subr.mxu0 0.0
    %258 = vmatpush1.xpose.msra.mxu0 0.0
    %259 = vmatprep.subr.mxu0 0.0
    %260 = vmatpush1.xpose.msra.mxu0 0.0
    %261 = vmatprep.subr.mxu0 0.0
    %262 = vmatpush1.xpose.msra.mxu0 0.0
    %263 = vmatprep.subr.mxu0 0.0
    %264 = vmatpush1.xpose.msra.mxu0 0.0
    %265 = vmatprep.subr.mxu0 0.0
    %266 = vmatpush1.xpose.msra.mxu0 0.0
    %267 = vmatprep.subr.mxu0 0.0
    %268 = vmatpush1.xpose.msra.mxu0 0.0
    %269 = vmatprep.subr.mxu0 0.0
    %270 = vmatpush1.xpose.msra.mxu0 0.0
    %271 = vmatprep.subr.mxu0 0.0
    %272 = vmatpush1.xpose.msra.mxu0 0.0
    %273 = vmatprep.subr.mxu0 0.0
    %274 = vmatpush1.xpose.msra.mxu0 0.0
    %275 = vmatprep.subr.mxu0 0.0
    %276 = vmatpush1.xpose.msra.mxu0 0.0
    %277 = vmatprep.subr.mxu0 0.0
    %278 = vmatpush1.xpose.msra.mxu0 0.0
    %279 = vmatprep.subr.mxu0 0.0
    %280 = vmatpush1.xpose.msra.mxu0 0.0
    %281 = vmatprep.subr.mxu0 0.0
    %282 = vmatpush1.xpose.msra.mxu0 0.0
    %283 = vmatprep.subr.mxu0 0.0
    %284 = vmatpush1.xpose.msra.mxu0 0.0
    %285 = vmatprep.subr.mxu0 0.0
    %286 = vmatpush1.xpose.msra.mxu0 0.0
    %287 = vmatprep.subr.mxu0 0.0
    %288 = vmatpush1.xpose.msra.mxu0 0.0
    %289 = vmatprep.subr.mxu0 0.0
    %290 = vmatpush1.xpose.msra.mxu0 0.0
    %291 = vmatprep.subr.mxu0 0.0
    %292 = vmatpush1.xpose.msra.mxu0 0.0
    %293 = vmatprep.subr.mxu0 0.0
    %294 = vmatpush1.xpose.msra.mxu0 0.0
    %295 = vmatprep.subr.mxu0 0.0
    %296 = vmatpush1.xpose.msra.mxu0 0.0
    %297 = vmatprep.subr.mxu0 0.0
    %298 = vmatpush1.xpose.msra.mxu0 0.0
    %299 = vmatprep.subr.mxu0 0.0
    %300 = vmatpush1.xpose.msra.mxu0 0.0
    %301 = vmatprep.subr.mxu0 0.0
    %302 = vmatpush1.xpose.msra.mxu0 0.0
    %303 = vmatprep.subr.mxu0 0.0
    %304 = vmatpush1.xpose.msra.mxu0 0.0
    %305 = vmatprep.subr.mxu0 0.0
    %306 = vmatpush1.xpose.msra.mxu0 0.0
    %307 = vmatprep.subr.mxu0 0.0
    %308 = vmatpush1.xpose.msra.mxu0 0.0
    %309 = vmatprep.subr.mxu0 0.0
    %310 = vmatpush1.xpose.msra.mxu0 0.0
    %311 = vmatprep.subr.mxu0 0.0
    %312 = vmatpush1.xpose.msra.mxu0 0.0
    %313 = vmatprep.subr.mxu0 0.0
    %314 = vmatpush1.xpose.msra.mxu0 0.0
    %315 = vmatprep.subr.mxu0 0.0
    %316 = vmatpush1.xpose.msra.mxu0 0.0
    %317 = vmatprep.subr.mxu0 0.0
    %318 = vmatpush1.xpose.msra.mxu0 0.0
    %319 = vmatprep.mubr.f32.mxu0 0.0
    %320 = vmatmul.mubr.f32.gmra.mrb[0].mxu0 %v251
    %v321 = vpop.f32.mrb[0].mxu0
    %v322 = vadd.f32 0.0, %v321
    %v323 = vpop.f32.mrb[0].mxu0
    %324 = vdwg.mxu0
    %325 = vrot.lane.b32.xlu0 %v210, 64
    %v326 = vpop.permute.xlu0 %325
    %v327 = vsel %vm250, %v210, 0
    %v329 = vsel %vm250, %v326, 0
    %331 = vmatprep.subr.mxu0 0.0
    %332 = vmatpush1.xpose.msra.mxu0 %v329
    %333 = vmatprep.subr.mxu0 0.0
    %334 = vmatpush1.xpose.msra.mxu0 0.0
    %335 = vmatprep.subr.mxu0 0.0
    %336 = vmatpush1.xpose.msra.mxu0 0.0
    %337 = vmatprep.subr.mxu0 0.0
    %338 = vmatpush1.xpose.msra.mxu0 0.0
    %339 = vmatprep.subr.mxu0 0.0
    %340 = vmatpush1.xpose.msra.mxu0 0.0
    %341 = vmatprep.subr.mxu0 0.0
    %342 = vmatpush1.xpose.msra.mxu0 0.0
    %343 = vmatprep.subr.mxu0 0.0
    %344 = vmatpush1.xpose.msra.mxu0 0.0
    %345 = vmatprep.subr.mxu0 0.0
    %346 = vmatpush1.xpose.msra.mxu0 0.0
    %347 = vmatprep.subr.mxu0 0.0
    %348 = vmatpush1.xpose.msra.mxu0 0.0
    %349 = vmatprep.subr.mxu0 0.0
    %350 = vmatpush1.xpose.msra.mxu0 0.0
    %351 = vmatprep.subr.mxu0 0.0
    %352 = vmatpush1.xpose.msra.mxu0 0.0
    %353 = vmatprep.subr.mxu0 0.0
    %354 = vmatpush1.xpose.msra.mxu0 0.0
    %355 = vmatprep.subr.mxu0 0.0
    %356 = vmatpush1.xpose.msra.mxu0 0.0
    %357 = vmatprep.subr.mxu0 0.0
    %358 = vmatpush1.xpose.msra.mxu0 0.0
    %359 = vmatprep.subr.mxu0 0.0
    %360 = vmatpush1.xpose.msra.mxu0 0.0
    %361 = vmatprep.subr.mxu0 0.0
    %362 = vmatpush1.xpose.msra.mxu0 0.0
    %363 = vmatprep.subr.mxu0 0.0
    %364 = vmatpush1.xpose.msra.mxu0 0.0
    %365 = vmatprep.subr.mxu0 0.0
    %366 = vmatpush1.xpose.msra.mxu0 0.0
    %367 = vmatprep.subr.mxu0 0.0
    %368 = vmatpush1.xpose.msra.mxu0 0.0
    %369 = vmatprep.subr.mxu0 0.0
    %370 = vmatpush1.xpose.msra.mxu0 0.0
    %371 = vmatprep.subr.mxu0 0.0
    %372 = vmatpush1.xpose.msra.mxu0 0.0
    %373 = vmatprep.subr.mxu0 0.0
    %374 = vmatpush1.xpose.msra.mxu0 0.0
    %375 = vmatprep.subr.mxu0 0.0
    %376 = vmatpush1.xpose.msra.mxu0 0.0
    %377 = vmatprep.subr.mxu0 0.0
    %378 = vmatpush1.xpose.msra.mxu0 0.0
    %379 = vmatprep.subr.mxu0 0.0
    %380 = vmatpush1.xpose.msra.mxu0 0.0
    %381 = vmatprep.subr.mxu0 0.0
    %382 = vmatpush1.xpose.msra.mxu0 0.0
    %383 = vmatprep.subr.mxu0 0.0
    %384 = vmatpush1.xpose.msra.mxu0 0.0
    %385 = vmatprep.subr.mxu0 0.0
    %386 = vmatpush1.xpose.msra.mxu0 0.0
    %387 = vmatprep.subr.mxu0 0.0
    %388 = vmatpush1.xpose.msra.mxu0 0.0
    %389 = vmatprep.subr.mxu0 0.0
    %390 = vmatpush1.xpose.msra.mxu0 0.0
    %391 = vmatprep.subr.mxu0 0.0
    %392 = vmatpush1.xpose.msra.mxu0 0.0
    %393 = vmatprep.subr.mxu0 0.0
    %394 = vmatpush1.xpose.msra.mxu0 0.0
    %395 = vmatprep.mubr.f32.mxu0 0.0
    %396 = vmatmul.mubr.f32.gmra.mrb[0].mxu0 %v327
    %v397 = vpop.f32.mrb[0].mxu0
    %v398 = vadd.f32 0.0, %v397
    %v399 = vpop.f32.mrb[0].mxu0
    %400 = vdwg.mxu0
    %401 = vrot.lane.b32.xlu0 %v217, 64
    %v402 = vpop.permute.xlu0 %401
    %v403 = vsel %vm250, %v217, 0
    %v405 = vsel %vm250, %v402, 0
    %407 = vmatprep.subr.mxu0 0.0
    %408 = vmatpush1.xpose.msra.mxu0 %v405
    %409 = vmatprep.subr.mxu0 0.0
    %410 = vmatpush1.xpose.msra.mxu0 0.0
    %411 = vmatprep.subr.mxu0 0.0
    %412 = vmatpush1.xpose.msra.mxu0 0.0
    %413 = vmatprep.subr.mxu0 0.0
    %414 = vmatpush1.xpose.msra.mxu0 0.0
    %415 = vmatprep.subr.mxu0 0.0
    %416 = vmatpush1.xpose.msra.mxu0 0.0
    %417 = vmatprep.subr.mxu0 0.0
    %418 = vmatpush1.xpose.msra.mxu0 0.0
    %419 = vmatprep.subr.mxu0 0.0
    %420 = vmatpush1.xpose.msra.mxu0 0.0
    %421 = vmatprep.subr.mxu0 0.0
    %422 = vmatpush1.xpose.msra.mxu0 0.0
    %423 = vmatprep.subr.mxu0 0.0
    %424 = vmatpush1.xpose.msra.mxu0 0.0
    %425 = vmatprep.subr.mxu0 0.0
    %426 = vmatpush1.xpose.msra.mxu0 0.0
    %427 = vmatprep.subr.mxu0 0.0
    %428 = vmatpush1.xpose.msra.mxu0 0.0
    %429 = vmatprep.subr.mxu0 0.0
    %430 = vmatpush1.xpose.msra.mxu0 0.0
    %431 = vmatprep.subr.mxu0 0.0
    %432 = vmatpush1.xpose.msra.mxu0 0.0
    %433 = vmatprep.subr.mxu0 0.0
    %434 = vmatpush1.xpose.msra.mxu0 0.0
    %435 = vmatprep.subr.mxu0 0.0
    %436 = vmatpush1.xpose.msra.mxu0 0.0
    %437 = vmatprep.subr.mxu0 0.0
    %438 = vmatpush1.xpose.msra.mxu0 0.0
    %439 = vmatprep.subr.mxu0 0.0
    %440 = vmatpush1.xpose.msra.mxu0 0.0
    %441 = vmatprep.subr.mxu0 0.0
    %442 = vmatpush1.xpose.msra.mxu0 0.0
    %443 = vmatprep.subr.mxu0 0.0
    %444 = vmatpush1.xpose.msra.mxu0 0.0
    %445 = vmatprep.subr.mxu0 0.0
    %446 = vmatpush1.xpose.msra.mxu0 0.0
    %447 = vmatprep.subr.mxu0 0.0
    %448 = vmatpush1.xpose.msra.mxu0 0.0
    %449 = vmatprep.subr.mxu0 0.0
    %450 = vmatpush1.xpose.msra.mxu0 0.0
    %451 = vmatprep.subr.mxu0 0.0
    %452 = vmatpush1.xpose.msra.mxu0 0.0
    %453 = vmatprep.subr.mxu0 0.0
    %454 = vmatpush1.xpose.msra.mxu0 0.0
    %455 = vmatprep.subr.mxu0 0.0
    %456 = vmatpush1.xpose.msra.mxu0 0.0
    %457 = vmatprep.subr.mxu0 0.0
    %458 = vmatpush1.xpose.msra.mxu0 0.0
    %459 = vmatprep.subr.mxu0 0.0
    %460 = vmatpush1.xpose.msra.mxu0 0.0
    %461 = vmatprep.subr.mxu0 0.0
    %462 = vmatpush1.xpose.msra.mxu0 0.0
    %463 = vmatprep.subr.mxu0 0.0
    %464 = vmatpush1.xpose.msra.mxu0 0.0
    %465 = vmatprep.subr.mxu0 0.0
    %466 = vmatpush1.xpose.msra.mxu0 0.0
    %467 = vmatprep.subr.mxu0 0.0
    %468 = vmatpush1.xpose.msra.mxu0 0.0
    %469 = vmatprep.subr.mxu0 0.0
    %470 = vmatpush1.xpose.msra.mxu0 0.0
    %471 = vmatprep.mubr.f32.mxu0 0.0
    %472 = vmatmul.mubr.f32.gmra.mrb[0].mxu0 %v403
    %v473 = vpop.f32.mrb[0].mxu0
    %v474 = vadd.f32 0.0, %v473
    %v475 = vpop.f32.mrb[0].mxu0
    %476 = vdwg.mxu0
    %477 = vrot.lane.b32.xlu0 %v219, 64
    %v478 = vpop.permute.xlu0 %477
    %v479 = vsel %vm250, %v219, 0
    %v481 = vsel %vm250, %v478, 0
    %483 = vmatprep.subr.mxu0 0.0
    %484 = vmatpush1.xpose.msra.mxu0 %v481
    %485 = vmatprep.subr.mxu0 0.0
    %486 = vmatpush1.xpose.msra.mxu0 0.0
    %487 = vmatprep.subr.mxu0 0.0
    %488 = vmatpush1.xpose.msra.mxu0 0.0
    %489 = vmatprep.subr.mxu0 0.0
    %490 = vmatpush1.xpose.msra.mxu0 0.0
    %491 = vmatprep.subr.mxu0 0.0
    %492 = vmatpush1.xpose.msra.mxu0 0.0
    %493 = vmatprep.subr.mxu0 0.0
    %494 = vmatpush1.xpose.msra.mxu0 0.0
    %495 = vmatprep.subr.mxu0 0.0
    %496 = vmatpush1.xpose.msra.mxu0 0.0
    %497 = vmatprep.subr.mxu0 0.0
    %498 = vmatpush1.xpose.msra.mxu0 0.0
    %499 = vmatprep.subr.mxu0 0.0
    %500 = vmatpush1.xpose.msra.mxu0 0.0
    %501 = vmatprep.subr.mxu0 0.0
    %502 = vmatpush1.xpose.msra.mxu0 0.0
    %503 = vmatprep.subr.mxu0 0.0
    %504 = vmatpush1.xpose.msra.mxu0 0.0
    %505 = vmatprep.subr.mxu0 0.0
    %506 = vmatpush1.xpose.msra.mxu0 0.0
    %507 = vmatprep.subr.mxu0 0.0
    %508 = vmatpush1.xpose.msra.mxu0 0.0
    %509 = vmatprep.subr.mxu0 0.0
    %510 = vmatpush1.xpose.msra.mxu0 0.0
    %511 = vmatprep.subr.mxu0 0.0
    %512 = vmatpush1.xpose.msra.mxu0 0.0
    %513 = vmatprep.subr.mxu0 0.0
    %514 = vmatpush1.xpose.msra.mxu0 0.0
    %515 = vmatprep.subr.mxu0 0.0
    %516 = vmatpush1.xpose.msra.mxu0 0.0
    %517 = vmatprep.subr.mxu0 0.0
    %518 = vmatpush1.xpose.msra.mxu0 0.0
    %519 = vmatprep.subr.mxu0 0.0
    %520 = vmatpush1.xpose.msra.mxu0 0.0
    %521 = vmatprep.subr.mxu0 0.0
    %522 = vmatpush1.xpose.msra.mxu0 0.0
    %523 = vmatprep.subr.mxu0 0.0
    %524 = vmatpush1.xpose.msra.mxu0 0.0
    %525 = vmatprep.subr.mxu0 0.0
    %526 = vmatpush1.xpose.msra.mxu0 0.0
    %527 = vmatprep.subr.mxu0 0.0
    %528 = vmatpush1.xpose.msra.mxu0 0.0
    %529 = vmatprep.subr.mxu0 0.0
    %530 = vmatpush1.xpose.msra.mxu0 0.0
    %531 = vmatprep.subr.mxu0 0.0
    %532 = vmatpush1.xpose.msra.mxu0 0.0
    %533 = vmatprep.subr.mxu0 0.0
    %534 = vmatpush1.xpose.msra.mxu0 0.0
    %535 = vmatprep.subr.mxu0 0.0
    %536 = vmatpush1.xpose.msra.mxu0 0.0
    %537 = vmatprep.subr.mxu0 0.0
    %538 = vmatpush1.xpose.msra.mxu0 0.0
    %539 = vmatprep.subr.mxu0 0.0
    %540 = vmatpush1.xpose.msra.mxu0 0.0
    %541 = vmatprep.subr.mxu0 0.0
    %542 = vmatpush1.xpose.msra.mxu0 0.0
    %543 = vmatprep.subr.mxu0 0.0
    %544 = vmatpush1.xpose.msra.mxu0 0.0
    %545 = vmatprep.subr.mxu0 0.0
    %546 = vmatpush1.xpose.msra.mxu0 0.0
    %547 = vmatprep.mubr.f32.mxu0 0.0
    %548 = vmatmul.mubr.f32.gmra.mrb[0].mxu0 %v479
    %v549 = vpop.f32.mrb[0].mxu0
    %v550 = vadd.f32 0.0, %v549
    %v551 = vpop.f32.mrb[0].mxu0
    %552 = vdwg.mxu0
    %553 = vrot.lane.b32.xlu0 %v221, 64
    %v554 = vpop.permute.xlu0 %553
    %v555 = vsel %vm250, %v221, 0
    %v557 = vsel %vm250, %v554, 0
    %559 = vmatprep.subr.mxu0 0.0
    %560 = vmatpush1.xpose.msra.mxu0 %v557
    %561 = vmatprep.subr.mxu0 0.0
    %562 = vmatpush1.xpose.msra.mxu0 0.0
    %563 = vmatprep.subr.mxu0 0.0
    %564 = vmatpush1.xpose.msra.mxu0 0.0
    %565 = vmatprep.subr.mxu0 0.0
    %566 = vmatpush1.xpose.msra.mxu0 0.0
    %567 = vmatprep.subr.mxu0 0.0
    %568 = vmatpush1.xpose.msra.mxu0 0.0
    %569 = vmatprep.subr.mxu0 0.0
    %570 = vmatpush1.xpose.msra.mxu0 0.0
    %571 = vmatprep.subr.mxu0 0.0
    %572 = vmatpush1.xpose.msra.mxu0 0.0
    %573 = vmatprep.subr.mxu0 0.0
    %574 = vmatpush1.xpose.msra.mxu0 0.0
    %575 = vmatprep.subr.mxu0 0.0
    %576 = vmatpush1.xpose.msra.mxu0 0.0
    %577 = vmatprep.subr.mxu0 0.0
    %578 = vmatpush1.xpose.msra.mxu0 0.0
    %579 = vmatprep.subr.mxu0 0.0
    %580 = vmatpush1.xpose.msra.mxu0 0.0
    %581 = vmatprep.subr.mxu0 0.0
    %582 = vmatpush1.xpose.msra.mxu0 0.0
    %583 = vmatprep.subr.mxu0 0.0
    %584 = vmatpush1.xpose.msra.mxu0 0.0
    %585 = vmatprep.subr.mxu0 0.0
    %586 = vmatpush1.xpose.msra.mxu0 0.0
    %587 = vmatprep.subr.mxu0 0.0
    %588 = vmatpush1.xpose.msra.mxu0 0.0
    %589 = vmatprep.subr.mxu0 0.0
    %590 = vmatpush1.xpose.msra.mxu0 0.0
    %591 = vmatprep.subr.mxu0 0.0
    %592 = vmatpush1.xpose.msra.mxu0 0.0
    %593 = vmatprep.subr.mxu0 0.0
    %594 = vmatpush1.xpose.msra.mxu0 0.0
    %595 = vmatprep.subr.mxu0 0.0
    %596 = vmatpush1.xpose.msra.mxu0 0.0
    %597 = vmatprep.subr.mxu0 0.0
    %598 = vmatpush1.xpose.msra.mxu0 0.0
    %599 = vmatprep.subr.mxu0 0.0
    %600 = vmatpush1.xpose.msra.mxu0 0.0
    %601 = vmatprep.subr.mxu0 0.0
    %602 = vmatpush1.xpose.msra.mxu0 0.0
    %603 = vmatprep.subr.mxu0 0.0
    %604 = vmatpush1.xpose.msra.mxu0 0.0
    %605 = vmatprep.subr.mxu0 0.0
    %606 = vmatpush1.xpose.msra.mxu0 0.0
    %607 = vmatprep.subr.mxu0 0.0
    %608 = vmatpush1.xpose.msra.mxu0 0.0
    %609 = vmatprep.subr.mxu0 0.0
    %610 = vmatpush1.xpose.msra.mxu0 0.0
    %611 = vmatprep.subr.mxu0 0.0
    %612 = vmatpush1.xpose.msra.mxu0 0.0
    %613 = vmatprep.subr.mxu0 0.0
    %614 = vmatpush1.xpose.msra.mxu0 0.0
    %615 = vmatprep.subr.mxu0 0.0
    %616 = vmatpush1.xpose.msra.mxu0 0.0
    %617 = vmatprep.subr.mxu0 0.0
    %618 = vmatpush1.xpose.msra.mxu0 0.0
    %619 = vmatprep.subr.mxu0 0.0
    %620 = vmatpush1.xpose.msra.mxu0 0.0
    %621 = vmatprep.subr.mxu0 0.0
    %622 = vmatpush1.xpose.msra.mxu0 0.0
    %623 = vmatprep.mubr.f32.mxu0 0.0
    %624 = vmatmul.mubr.f32.gmra.mrb[0].mxu0 %v555
    %v625 = vpop.f32.mrb[0].mxu0
    %v626 = vadd.f32 0.0, %v625
    %v627 = vpop.f32.mrb[0].mxu0
    %628 = vdwg.mxu0
    %629 = vrot.lane.b32.xlu0 %v223, 64
    %v630 = vpop.permute.xlu0 %629
    %v631 = vsel %vm250, %v223, 0
    %v633 = vsel %vm250, %v630, 0
    %635 = vmatprep.subr.mxu0 0.0
    %636 = vmatpush1.xpose.msra.mxu0 %v633
    %637 = vmatprep.subr.mxu0 0.0
    %638 = vmatpush1.xpose.msra.mxu0 0.0
    %639 = vmatprep.subr.mxu0 0.0
    %640 = vmatpush1.xpose.msra.mxu0 0.0
    %641 = vmatprep.subr.mxu0 0.0
    %642 = vmatpush1.xpose.msra.mxu0 0.0
    %643 = vmatprep.subr.mxu0 0.0
    %644 = vmatpush1.xpose.msra.mxu0 0.0
    %645 = vmatprep.subr.mxu0 0.0
    %646 = vmatpush1.xpose.msra.mxu0 0.0
    %647 = vmatprep.subr.mxu0 0.0
    %648 = vmatpush1.xpose.msra.mxu0 0.0
    %649 = vmatprep.subr.mxu0 0.0
    %650 = vmatpush1.xpose.msra.mxu0 0.0
    %651 = vmatprep.subr.mxu0 0.0
    %652 = vmatpush1.xpose.msra.mxu0 0.0
    %653 = vmatprep.subr.mxu0 0.0
    %654 = vmatpush1.xpose.msra.mxu0 0.0
    %655 = vmatprep.subr.mxu0 0.0
    %656 = vmatpush1.xpose.msra.mxu0 0.0
    %657 = vmatprep.subr.mxu0 0.0
    %658 = vmatpush1.xpose.msra.mxu0 0.0
    %659 = vmatprep.subr.mxu0 0.0
    %660 = vmatpush1.xpose.msra.mxu0 0.0
    %661 = vmatprep.subr.mxu0 0.0
    %662 = vmatpush1.xpose.msra.mxu0 0.0
    %663 = vmatprep.subr.mxu0 0.0
    %664 = vmatpush1.xpose.msra.mxu0 0.0
    %665 = vmatprep.subr.mxu0 0.0
    %666 = vmatpush1.xpose.msra.mxu0 0.0
    %667 = vmatprep.subr.mxu0 0.0
    %668 = vmatpush1.xpose.msra.mxu0 0.0
    %669 = vmatprep.subr.mxu0 0.0
    %670 = vmatpush1.xpose.msra.mxu0 0.0
    %671 = vmatprep.subr.mxu0 0.0
    %672 = vmatpush1.xpose.msra.mxu0 0.0
    %673 = vmatprep.subr.mxu0 0.0
    %674 = vmatpush1.xpose.msra.mxu0 0.0
    %675 = vmatprep.subr.mxu0 0.0
    %676 = vmatpush1.xpose.msra.mxu0 0.0
    %677 = vmatprep.subr.mxu0 0.0
    %678 = vmatpush1.xpose.msra.mxu0 0.0
    %679 = vmatprep.subr.mxu0 0.0
    %680 = vmatpush1.xpose.msra.mxu0 0.0
    %681 = vmatprep.subr.mxu0 0.0
    %682 = vmatpush1.xpose.msra.mxu0 0.0
    %683 = vmatprep.subr.mxu0 0.0
    %684 = vmatpush1.xpose.msra.mxu0 0.0
    %685 = vmatprep.subr.mxu0 0.0
    %686 = vmatpush1.xpose.msra.mxu0 0.0
    %687 = vmatprep.subr.mxu0 0.0
    %688 = vmatpush1.xpose.msra.mxu0 0.0
    %689 = vmatprep.subr.mxu0 0.0
    %690 = vmatpush1.xpose.msra.mxu0 0.0
    %691 = vmatprep.subr.mxu0 0.0
    %692 = vmatpush1.xpose.msra.mxu0 0.0
    %693 = vmatprep.subr.mxu0 0.0
    %694 = vmatpush1.xpose.msra.mxu0 0.0
    %695 = vmatprep.subr.mxu0 0.0
    %696 = vmatpush1.xpose.msra.mxu0 0.0
    %697 = vmatprep.subr.mxu0 0.0
    %698 = vmatpush1.xpose.msra.mxu0 0.0
    %699 = vmatprep.mubr.f32.mxu0 0.0
    %700 = vmatmul.mubr.f32.gmra.mrb[0].mxu0 %v631
    %v701 = vpop.f32.mrb[0].mxu0
    %v702 = vadd.f32 0.0, %v701
    %v703 = vpop.f32.mrb[0].mxu0
    %704 = vdwg.mxu0
    %705 = vrot.lane.b32.xlu0 %v225, 64
    %v706 = vpop.permute.xlu0 %705
    %v707 = vsel %vm250, %v225, 0
    %v709 = vsel %vm250, %v706, 0
    %711 = vmatprep.subr.mxu0 0.0
    %712 = vmatpush1.xpose.msra.mxu0 %v709
    %713 = vmatprep.subr.mxu0 0.0
    %714 = vmatpush1.xpose.msra.mxu0 0.0
    %715 = vmatprep.subr.mxu0 0.0
    %716 = vmatpush1.xpose.msra.mxu0 0.0
    %717 = vmatprep.subr.mxu0 0.0
    %718 = vmatpush1.xpose.msra.mxu0 0.0
    %719 = vmatprep.subr.mxu0 0.0
    %720 = vmatpush1.xpose.msra.mxu0 0.0
    %721 = vmatprep.subr.mxu0 0.0
    %722 = vmatpush1.xpose.msra.mxu0 0.0
    %723 = vmatprep.subr.mxu0 0.0
    %724 = vmatpush1.xpose.msra.mxu0 0.0
    %725 = vmatprep.subr.mxu0 0.0
    %726 = vmatpush1.xpose.msra.mxu0 0.0
    %727 = vmatprep.subr.mxu0 0.0
    %728 = vmatpush1.xpose.msra.mxu0 0.0
    %729 = vmatprep.subr.mxu0 0.0
    %730 = vmatpush1.xpose.msra.mxu0 0.0
    %731 = vmatprep.subr.mxu0 0.0
    %732 = vmatpush1.xpose.msra.mxu0 0.0
    %733 = vmatprep.subr.mxu0 0.0
    %734 = vmatpush1.xpose.msra.mxu0 0.0
    %735 = vmatprep.subr.mxu0 0.0
    %736 = vmatpush1.xpose.msra.mxu0 0.0
    %737 = vmatprep.subr.mxu0 0.0
    %738 = vmatpush1.xpose.msra.mxu0 0.0
    %739 = vmatprep.subr.mxu0 0.0
    %740 = vmatpush1.xpose.msra.mxu0 0.0
    %741 = vmatprep.subr.mxu0 0.0
    %742 = vmatpush1.xpose.msra.mxu0 0.0
    %743 = vmatprep.subr.mxu0 0.0
    %744 = vmatpush1.xpose.msra.mxu0 0.0
    %745 = vmatprep.subr.mxu0 0.0
    %746 = vmatpush1.xpose.msra.mxu0 0.0
    %747 = vmatprep.subr.mxu0 0.0
    %748 = vmatpush1.xpose.msra.mxu0 0.0
    %749 = vmatprep.subr.mxu0 0.0
    %750 = vmatpush1.xpose.msra.mxu0 0.0
    %751 = vmatprep.subr.mxu0 0.0
    %752 = vmatpush1.xpose.msra.mxu0 0.0
    %753 = vmatprep.subr.mxu0 0.0
    %754 = vmatpush1.xpose.msra.mxu0 0.0
    %755 = vmatprep.subr.mxu0 0.0
    %756 = vmatpush1.xpose.msra.mxu0 0.0
    %757 = vmatprep.subr.mxu0 0.0
    %758 = vmatpush1.xpose.msra.mxu0 0.0
    %759 = vmatprep.subr.mxu0 0.0
    %760 = vmatpush1.xpose.msra.mxu0 0.0
    %761 = vmatprep.subr.mxu0 0.0
    %762 = vmatpush1.xpose.msra.mxu0 0.0
    %763 = vmatprep.subr.mxu0 0.0
    %764 = vmatpush1.xpose.msra.mxu0 0.0
    %765 = vmatprep.subr.mxu0 0.0
    %766 = vmatpush1.xpose.msra.mxu0 0.0
    %767 = vmatprep.subr.mxu0 0.0
    %768 = vmatpush1.xpose.msra.mxu0 0.0
    %769 = vmatprep.subr.mxu0 0.0
    %770 = vmatpush1.xpose.msra.mxu0 0.0
    %771 = vmatprep.subr.mxu0 0.0
    %772 = vmatpush1.xpose.msra.mxu0 0.0
    %773 = vmatprep.subr.mxu0 0.0
    %774 = vmatpush1.xpose.msra.mxu0 0.0
    %775 = vmatprep.mubr.f32.mxu0 0.0
    %776 = vmatmul.mubr.f32.gmra.mrb[0].mxu0 %v707
    %v777 = vpop.f32.mrb[0].mxu0
    %v778 = vadd.f32 0.0, %v777
    %v779 = vpop.f32.mrb[0].mxu0
    %780 = vdwg.mxu0
    %781 = vrot.lane.b32.xlu0 %v227, 64
    %v782 = vpop.permute.xlu0 %781
    %v783 = vsel %vm250, %v227, 0
    %v785 = vsel %vm250, %v782, 0
    %787 = vmatprep.subr.mxu0 0.0
    %788 = vmatpush1.xpose.msra.mxu0 %v785
    %789 = vmatprep.subr.mxu0 0.0
    %790 = vmatpush1.xpose.msra.mxu0 0.0
    %791 = vmatprep.subr.mxu0 0.0
    %792 = vmatpush1.xpose.msra.mxu0 0.0
    %793 = vmatprep.subr.mxu0 0.0
    %794 = vmatpush1.xpose.msra.mxu0 0.0
    %795 = vmatprep.subr.mxu0 0.0
    %796 = vmatpush1.xpose.msra.mxu0 0.0
    %797 = vmatprep.subr.mxu0 0.0
    %798 = vmatpush1.xpose.msra.mxu0 0.0
    %799 = vmatprep.subr.mxu0 0.0
    %800 = vmatpush1.xpose.msra.mxu0 0.0
    %801 = vmatprep.subr.mxu0 0.0
    %802 = vmatpush1.xpose.msra.mxu0 0.0
    %803 = vmatprep.subr.mxu0 0.0
    %804 = vmatpush1.xpose.msra.mxu0 0.0
    %805 = vmatprep.subr.mxu0 0.0
    %806 = vmatpush1.xpose.msra.mxu0 0.0
    %807 = vmatprep.subr.mxu0 0.0
    %808 = vmatpush1.xpose.msra.mxu0 0.0
    %809 = vmatprep.subr.mxu0 0.0
    %810 = vmatpush1.xpose.msra.mxu0 0.0
    %811 = vmatprep.subr.mxu0 0.0
    %812 = vmatpush1.xpose.msra.mxu0 0.0
    %813 = vmatprep.subr.mxu0 0.0
    %814 = vmatpush1.xpose.msra.mxu0 0.0
    %815 = vmatprep.subr.mxu0 0.0
    %816 = vmatpush1.xpose.msra.mxu0 0.0
    %817 = vmatprep.subr.mxu0 0.0
    %818 = vmatpush1.xpose.msra.mxu0 0.0
    %819 = vmatprep.subr.mxu0 0.0
    %820 = vmatpush1.xpose.msra.mxu0 0.0
    %821 = vmatprep.subr.mxu0 0.0
    %822 = vmatpush1.xpose.msra.mxu0 0.0
    %823 = vmatprep.subr.mxu0 0.0
    %824 = vmatpush1.xpose.msra.mxu0 0.0
    %825 = vmatprep.subr.mxu0 0.0
    %826 = vmatpush1.xpose.msra.mxu0 0.0
    %827 = vmatprep.subr.mxu0 0.0
    %828 = vmatpush1.xpose.msra.mxu0 0.0
    %829 = vmatprep.subr.mxu0 0.0
    %830 = vmatpush1.xpose.msra.mxu0 0.0
    %831 = vmatprep.subr.mxu0 0.0
    %832 = vmatpush1.xpose.msra.mxu0 0.0
    %833 = vmatprep.subr.mxu0 0.0
    %834 = vmatpush1.xpose.msra.mxu0 0.0
    %835 = vmatprep.subr.mxu0 0.0
    %836 = vmatpush1.xpose.msra.mxu0 0.0
    %837 = vmatprep.subr.mxu0 0.0
    %838 = vmatpush1.xpose.msra.mxu0 0.0
    %839 = vmatprep.subr.mxu0 0.0
    %840 = vmatpush1.xpose.msra.mxu0 0.0
    %841 = vmatprep.subr.mxu0 0.0
    %842 = vmatpush1.xpose.msra.mxu0 0.0
    %843 = vmatprep.subr.mxu0 0.0
    %844 = vmatpush1.xpose.msra.mxu0 0.0
    %845 = vmatprep.subr.mxu0 0.0
    %846 = vmatpush1.xpose.msra.mxu0 0.0
    %847 = vmatprep.subr.mxu0 0.0
    %848 = vmatpush1.xpose.msra.mxu0 0.0
    %849 = vmatprep.subr.mxu0 0.0
    %850 = vmatpush1.xpose.msra.mxu0 0.0
    %851 = vmatprep.mubr.f32.mxu0 0.0
    %852 = vmatmul.mubr.f32.gmra.mrb[0].mxu0 %v783
    %v853 = vpop.f32.mrb[0].mxu0
    %v854 = vadd.f32 0.0, %v853
    %v855 = vpop.f32.mrb[0].mxu0
    %856 = vdwg.mxu0
    %v857 = vsel %vm59, 1, 0
    %vm858 = vcmp.eq.s32.totalorder %v857, 1
    %v859 = vsel %vm858, %v322, -1e+30
    %v860 = vsel %vm858, %v398, -1e+30
    %v861 = vsel %vm858, %v474, -1e+30
    %v862 = vsel %vm858, %v550, -1e+30
    %v863 = vsel %vm858, %v626, -1e+30
    %v864 = vsel %vm858, %v702, -1e+30
    %v865 = vsel %vm858, %v778, -1e+30
    %v866 = vsel %vm858, %v854, -1e+30
    %vm867 = vcmask 64512
    %v868 = vsel %vm867, %v859, -inf
    %869 = vmax.xlane.f32.xlu0 %v868
    %v870 = vpop.xlane.xlu0 %869
    %v871 = vsel %vm867, %v860, -inf
    %872 = vmax.xlane.f32.xlu0 %v871
    %v873 = vpop.xlane.xlu0 %872
    %v874 = vsel %vm867, %v861, -inf
    %875 = vmax.xlane.f32.xlu0 %v874
    %v876 = vpop.xlane.xlu0 %875
    %v877 = vsel %vm867, %v862, -inf
    %878 = vmax.xlane.f32.xlu0 %v877
    %v879 = vpop.xlane.xlu0 %878
    %v880 = vsel %vm867, %v863, -inf
    %881 = vmax.xlane.f32.xlu0 %v880
    %v882 = vpop.xlane.xlu0 %881
    %v883 = vsel %vm867, %v864, -inf
    %884 = vmax.xlane.f32.xlu0 %v883
    %v885 = vpop.xlane.xlu0 %884
    %v886 = vsel %vm867, %v865, -inf
    %887 = vmax.xlane.f32.xlu0 %v886
    %v888 = vpop.xlane.xlu0 %887
    %v889 = vsel %vm867, %v866, -inf
    %890 = vmax.xlane.f32.xlu0 %v889
    %v891 = vpop.xlane.xlu0 %890
    %v892 = vsub.f32 %v859, %v870
    %v893 = vsub.f32 %v860, %v873
    %v894 = vsub.f32 %v861, %v876
    %v895 = vsub.f32 %v862, %v879
    %v896 = vsub.f32 %v863, %v882
    %v897 = vsub.f32 %v864, %v885
    %v898 = vsub.f32 %v865, %v888
    %v899 = vsub.f32 %v866, %v891
    %v900 = vmul.f32 %v892, 1.442695
    %v901 = vpow.pop %v900
    %v902 = vmul.f32 %v893, 1.442695
    %v903 = vpow.pop %v902
    %v904 = vmul.f32 %v894, 1.442695
    %v905 = vpow.pop %v904
    %v906 = vmul.f32 %v895, 1.442695
    %v907 = vpow.pop %v906
    %v908 = vmul.f32 %v896, 1.442695
    %v909 = vpow.pop %v908
    %v910 = vmul.f32 %v897, 1.442695
    %v911 = vpow.pop %v910
    %v912 = vmul.f32 %v898, 1.442695
    %v913 = vpow.pop %v912
    %v914 = vmul.f32 %v899, 1.442695
    %v915 = vpow.pop %v914
    %v916 = vsel %vm867, %v901, 0.0
    %917 = vadd.xlane.f32.xlu0 %v916
    %v918 = vpop.xlane.xlu0 %917
    %v919 = vsel %vm867, %v903, 0.0
    %920 = vadd.xlane.f32.xlu0 %v919
    %v921 = vpop.xlane.xlu0 %920
    %v922 = vsel %vm867, %v905, 0.0
    %923 = vadd.xlane.f32.xlu0 %v922
    %v924 = vpop.xlane.xlu0 %923
    %v925 = vsel %vm867, %v907, 0.0
    %926 = vadd.xlane.f32.xlu0 %v925
    %v927 = vpop.xlane.xlu0 %926
    %v928 = vsel %vm867, %v909, 0.0
    %929 = vadd.xlane.f32.xlu0 %v928
    %v930 = vpop.xlane.xlu0 %929
    %v931 = vsel %vm867, %v911, 0.0
    %932 = vadd.xlane.f32.xlu0 %v931
    %v933 = vpop.xlane.xlu0 %932
    %v934 = vsel %vm867, %v913, 0.0
    %935 = vadd.xlane.f32.xlu0 %v934
    %v936 = vpop.xlane.xlu0 %935
    %v937 = vsel %vm867, %v915, 0.0
    %938 = vadd.xlane.f32.xlu0 %v937
    %v939 = vpop.xlane.xlu0 %938
    %v940 = vrcp.pop %v918
    %v941 = vmul.f32 %v901, %v940
    %v942 = vrcp.pop %v921
    %v943 = vmul.f32 %v903, %v942
    %v944 = vrcp.pop %v924
    %v945 = vmul.f32 %v905, %v944
    %v946 = vrcp.pop %v927
    %v947 = vmul.f32 %v907, %v946
    %v948 = vrcp.pop %v930
    %v949 = vmul.f32 %v909, %v948
    %v950 = vrcp.pop %v933
    %v951 = vmul.f32 %v911, %v950
    %v952 = vrcp.pop %v936
    %v953 = vmul.f32 %v913, %v952
    %v954 = vrcp.pop %v939
    %v955 = vmul.f32 %v915, %v954
    %v957 = vsel %vm867, %v941, 0
    %959 = vmatprep.subr.mxu0 0.0
    %960 = vmatpush1.msra.mxu0 %v206
    %961 = vmatprep.subr.mxu0 0.0
    %962 = vmatpush1.msra.mxu0 0.0
    %963 = vmatprep.subr.mxu0 0.0
    %964 = vmatpush1.msra.mxu0 0.0
    %965 = vmatprep.subr.mxu0 0.0
    %966 = vmatpush1.msra.mxu0 0.0
    %967 = vmatprep.subr.mxu0 0.0
    %968 = vmatpush1.msra.mxu0 0.0
    %969 = vmatprep.subr.mxu0 0.0
    %970 = vmatpush1.msra.mxu0 0.0
    %971 = vmatprep.subr.mxu0 0.0
    %972 = vmatpush1.msra.mxu0 0.0
    %973 = vmatprep.subr.mxu0 0.0
    %974 = vmatpush1.msra.mxu0 0.0
    %975 = vmatprep.subr.mxu0 0.0
    %976 = vmatpush1.msra.mxu0 0.0
    %977 = vmatprep.subr.mxu0 0.0
    %978 = vmatpush1.msra.mxu0 0.0
    %979 = vmatprep.subr.mxu0 0.0
    %980 = vmatpush1.msra.mxu0 0.0
    %981 = vmatprep.subr.mxu0 0.0
    %982 = vmatpush1.msra.mxu0 0.0
    %983 = vmatprep.subr.mxu0 0.0
    %984 = vmatpush1.msra.mxu0 0.0
    %985 = vmatprep.subr.mxu0 0.0
    %986 = vmatpush1.msra.mxu0 0.0
    %987 = vmatprep.subr.mxu0 0.0
    %988 = vmatpush1.msra.mxu0 0.0
    %989 = vmatprep.subr.mxu0 0.0
    %990 = vmatpush1.msra.mxu0 0.0
    %991 = vmatprep.subr.mxu0 0.0
    %992 = vmatpush1.msra.mxu0 0.0
    %993 = vmatprep.subr.mxu0 0.0
    %994 = vmatpush1.msra.mxu0 0.0
    %995 = vmatprep.subr.mxu0 0.0
    %996 = vmatpush1.msra.mxu0 0.0
    %997 = vmatprep.subr.mxu0 0.0
    %998 = vmatpush1.msra.mxu0 0.0
    %999 = vmatprep.subr.mxu0 0.0
    %1000 = vmatpush1.msra.mxu0 0.0
    %1001 = vmatprep.subr.mxu0 0.0
    %1002 = vmatpush1.msra.mxu0 0.0
    %1003 = vmatprep.subr.mxu0 0.0
    %1004 = vmatpush1.msra.mxu0 0.0
    %1005 = vmatprep.subr.mxu0 0.0
    %1006 = vmatpush1.msra.mxu0 0.0
    %1007 = vmatprep.subr.mxu0 0.0
    %1008 = vmatpush1.msra.mxu0 0.0
    %1009 = vmatprep.subr.mxu0 0.0
    %1010 = vmatpush1.msra.mxu0 0.0
    %1011 = vmatprep.subr.mxu0 0.0
    %1012 = vmatpush1.msra.mxu0 0.0
    %1013 = vmatprep.subr.mxu0 0.0
    %1014 = vmatpush1.msra.mxu0 0.0
    %1015 = vmatprep.subr.mxu0 0.0
    %1016 = vmatpush1.msra.mxu0 0.0
    %1017 = vmatprep.subr.mxu0 0.0
    %1018 = vmatpush1.msra.mxu0 0.0
    %1019 = vmatprep.subr.mxu0 0.0
    %1020 = vmatpush1.msra.mxu0 0.0
    %1021 = vmatprep.subr.mxu0 0.0
    %1022 = vmatpush1.msra.mxu0 0.0
    %1023 = vmatprep.mubr.f32.mxu0 0.0
    %1024 = vmatmul.mubr.f32.gmra.mrb[0].mxu0 %v957
    %v1025 = vpop.f32.mrb[0].mxu0
    %v1026 = vadd.f32 0.0, %v1025
    %v1027 = vpop.f32.mrb[0].mxu0
    %1028 = vdwg.mxu0
    %v1030 = vsel %vm867, %v943, 0
    %1032 = vmatprep.subr.mxu0 0.0
    %1033 = vmatpush1.msra.mxu0 %v212
    %1034 = vmatprep.subr.mxu0 0.0
    %1035 = vmatpush1.msra.mxu0 0.0
    %1036 = vmatprep.subr.mxu0 0.0
    %1037 = vmatpush1.msra.mxu0 0.0
    %1038 = vmatprep.subr.mxu0 0.0
    %1039 = vmatpush1.msra.mxu0 0.0
    %1040 = vmatprep.subr.mxu0 0.0
    %1041 = vmatpush1.msra.mxu0 0.0
    %1042 = vmatprep.subr.mxu0 0.0
    %1043 = vmatpush1.msra.mxu0 0.0
    %1044 = vmatprep.subr.mxu0 0.0
    %1045 = vmatpush1.msra.mxu0 0.0
    %1046 = vmatprep.subr.mxu0 0.0
    %1047 = vmatpush1.msra.mxu0 0.0
    %1048 = vmatprep.subr.mxu0 0.0
    %1049 = vmatpush1.msra.mxu0 0.0
    %1050 = vmatprep.subr.mxu0 0.0
    %1051 = vmatpush1.msra.mxu0 0.0
    %1052 = vmatprep.subr.mxu0 0.0
    %1053 = vmatpush1.msra.mxu0 0.0
    %1054 = vmatprep.subr.mxu0 0.0
    %1055 = vmatpush1.msra.mxu0 0.0
    %1056 = vmatprep.subr.mxu0 0.0
    %1057 = vmatpush1.msra.mxu0 0.0
    %1058 = vmatprep.subr.mxu0 0.0
    %1059 = vmatpush1.msra.mxu0 0.0
    %1060 = vmatprep.subr.mxu0 0.0
    %1061 = vmatpush1.msra.mxu0 0.0
    %1062 = vmatprep.subr.mxu0 0.0
    %1063 = vmatpush1.msra.mxu0 0.0
    %1064 = vmatprep.subr.mxu0 0.0
    %1065 = vmatpush1.msra.mxu0 0.0
    %1066 = vmatprep.subr.mxu0 0.0
    %1067 = vmatpush1.msra.mxu0 0.0
    %1068 = vmatprep.subr.mxu0 0.0
    %1069 = vmatpush1.msra.mxu0 0.0
    %1070 = vmatprep.subr.mxu0 0.0
    %1071 = vmatpush1.msra.mxu0 0.0
    %1072 = vmatprep.subr.mxu0 0.0
    %1073 = vmatpush1.msra.mxu0 0.0
    %1074 = vmatprep.subr.mxu0 0.0
    %1075 = vmatpush1.msra.mxu0 0.0
    %1076 = vmatprep.subr.mxu0 0.0
    %1077 = vmatpush1.msra.mxu0 0.0
    %1078 = vmatprep.subr.mxu0 0.0
    %1079 = vmatpush1.msra.mxu0 0.0
    %1080 = vmatprep.subr.mxu0 0.0
    %1081 = vmatpush1.msra.mxu0 0.0
    %1082 = vmatprep.subr.mxu0 0.0
    %1083 = vmatpush1.msra.mxu0 0.0
    %1084 = vmatprep.subr.mxu0 0.0
    %1085 = vmatpush1.msra.mxu0 0.0
    %1086 = vmatprep.subr.mxu0 0.0
    %1087 = vmatpush1.msra.mxu0 0.0
    %1088 = vmatprep.subr.mxu0 0.0
    %1089 = vmatpush1.msra.mxu0 0.0
    %1090 = vmatprep.subr.mxu0 0.0
    %1091 = vmatpush1.msra.mxu0 0.0
    %1092 = vmatprep.subr.mxu0 0.0
    %1093 = vmatpush1.msra.mxu0 0.0
    %1094 = vmatprep.subr.mxu0 0.0
    %1095 = vmatpush1.msra.mxu0 0.0
    %1096 = vmatprep.mubr.f32.mxu0 0.0
    %1097 = vmatmul.mubr.f32.gmra.mrb[0].mxu0 %v1030
    %v1098 = vpop.f32.mrb[0].mxu0
    %v1099 = vadd.f32 0.0, %v1098
    %v1100 = vpop.f32.mrb[0].mxu0
    %1101 = vdwg.mxu0
    %v1103 = vsel %vm867, %v945, 0
    %1105 = vmatprep.subr.mxu0 0.0
    %1106 = vmatpush1.msra.mxu0 %v231
    %1107 = vmatprep.subr.mxu0 0.0
    %1108 = vmatpush1.msra.mxu0 0.0
    %1109 = vmatprep.subr.mxu0 0.0
    %1110 = vmatpush1.msra.mxu0 0.0
    %1111 = vmatprep.subr.mxu0 0.0
    %1112 = vmatpush1.msra.mxu0 0.0
    %1113 = vmatprep.subr.mxu0 0.0
    %1114 = vmatpush1.msra.mxu0 0.0
    %1115 = vmatprep.subr.mxu0 0.0
    %1116 = vmatpush1.msra.mxu0 0.0
    %1117 = vmatprep.subr.mxu0 0.0
    %1118 = vmatpush1.msra.mxu0 0.0
    %1119 = vmatprep.subr.mxu0 0.0
    %1120 = vmatpush1.msra.mxu0 0.0
    %1121 = vmatprep.subr.mxu0 0.0
    %1122 = vmatpush1.msra.mxu0 0.0
    %1123 = vmatprep.subr.mxu0 0.0
    %1124 = vmatpush1.msra.mxu0 0.0
    %1125 = vmatprep.subr.mxu0 0.0
    %1126 = vmatpush1.msra.mxu0 0.0
    %1127 = vmatprep.subr.mxu0 0.0
    %1128 = vmatpush1.msra.mxu0 0.0
    %1129 = vmatprep.subr.mxu0 0.0
    %1130 = vmatpush1.msra.mxu0 0.0
    %1131 = vmatprep.subr.mxu0 0.0
    %1132 = vmatpush1.msra.mxu0 0.0
    %1133 = vmatprep.subr.mxu0 0.0
    %1134 = vmatpush1.msra.mxu0 0.0
    %1135 = vmatprep.subr.mxu0 0.0
    %1136 = vmatpush1.msra.mxu0 0.0
    %1137 = vmatprep.subr.mxu0 0.0
    %1138 = vmatpush1.msra.mxu0 0.0
    %1139 = vmatprep.subr.mxu0 0.0
    %1140 = vmatpush1.msra.mxu0 0.0
    %1141 = vmatprep.subr.mxu0 0.0
    %1142 = vmatpush1.msra.mxu0 0.0
    %1143 = vmatprep.subr.mxu0 0.0
    %1144 = vmatpush1.msra.mxu0 0.0
    %1145 = vmatprep.subr.mxu0 0.0
    %1146 = vmatpush1.msra.mxu0 0.0
    %1147 = vmatprep.subr.mxu0 0.0
    %1148 = vmatpush1.msra.mxu0 0.0
    %1149 = vmatprep.subr.mxu0 0.0
    %1150 = vmatpush1.msra.mxu0 0.0
    %1151 = vmatprep.subr.mxu0 0.0
    %1152 = vmatpush1.msra.mxu0 0.0
    %1153 = vmatprep.subr.mxu0 0.0
    %1154 = vmatpush1.msra.mxu0 0.0
    %1155 = vmatprep.subr.mxu0 0.0
    %1156 = vmatpush1.msra.mxu0 0.0
    %1157 = vmatprep.subr.mxu0 0.0
    %1158 = vmatpush1.msra.mxu0 0.0
    %1159 = vmatprep.subr.mxu0 0.0
    %1160 = vmatpush1.msra.mxu0 0.0
    %1161 = vmatprep.subr.mxu0 0.0
    %1162 = vmatpush1.msra.mxu0 0.0
    %1163 = vmatprep.subr.mxu0 0.0
    %1164 = vmatpush1.msra.mxu0 0.0
    %1165 = vmatprep.subr.mxu0 0.0
    %1166 = vmatpush1.msra.mxu0 0.0
    %1167 = vmatprep.subr.mxu0 0.0
    %1168 = vmatpush1.msra.mxu0 0.0
    %1169 = vmatprep.mubr.f32.mxu0 0.0
    %1170 = vmatmul.mubr.f32.gmra.mrb[0].mxu0 %v1103
    %v1171 = vpop.f32.mrb[0].mxu0
    %v1172 = vadd.f32 0.0, %v1171
    %v1173 = vpop.f32.mrb[0].mxu0
    %1174 = vdwg.mxu0
    %v1176 = vsel %vm867, %v947, 0
    %1178 = vmatprep.subr.mxu0 0.0
    %1179 = vmatpush1.msra.mxu0 %v233
    %1180 = vmatprep.subr.mxu0 0.0
    %1181 = vmatpush1.msra.mxu0 0.0
    %1182 = vmatprep.subr.mxu0 0.0
    %1183 = vmatpush1.msra.mxu0 0.0
    %1184 = vmatprep.subr.mxu0 0.0
    %1185 = vmatpush1.msra.mxu0 0.0
    %1186 = vmatprep.subr.mxu0 0.0
    %1187 = vmatpush1.msra.mxu0 0.0
    %1188 = vmatprep.subr.mxu0 0.0
    %1189 = vmatpush1.msra.mxu0 0.0
    %1190 = vmatprep.subr.mxu0 0.0
    %1191 = vmatpush1.msra.mxu0 0.0
    %1192 = vmatprep.subr.mxu0 0.0
    %1193 = vmatpush1.msra.mxu0 0.0
    %1194 = vmatprep.subr.mxu0 0.0
    %1195 = vmatpush1.msra.mxu0 0.0
    %1196 = vmatprep.subr.mxu0 0.0
    %1197 = vmatpush1.msra.mxu0 0.0
    %1198 = vmatprep.subr.mxu0 0.0
    %1199 = vmatpush1.msra.mxu0 0.0
    %1200 = vmatprep.subr.mxu0 0.0
    %1201 = vmatpush1.msra.mxu0 0.0
    %1202 = vmatprep.subr.mxu0 0.0
    %1203 = vmatpush1.msra.mxu0 0.0
    %1204 = vmatprep.subr.mxu0 0.0
    %1205 = vmatpush1.msra.mxu0 0.0
    %1206 = vmatprep.subr.mxu0 0.0
    %1207 = vmatpush1.msra.mxu0 0.0
    %1208 = vmatprep.subr.mxu0 0.0
    %1209 = vmatpush1.msra.mxu0 0.0
    %1210 = vmatprep.subr.mxu0 0.0
    %1211 = vmatpush1.msra.mxu0 0.0
    %1212 = vmatprep.subr.mxu0 0.0
    %1213 = vmatpush1.msra.mxu0 0.0
    %1214 = vmatprep.subr.mxu0 0.0
    %1215 = vmatpush1.msra.mxu0 0.0
    %1216 = vmatprep.subr.mxu0 0.0
    %1217 = vmatpush1.msra.mxu0 0.0
    %1218 = vmatprep.subr.mxu0 0.0
    %1219 = vmatpush1.msra.mxu0 0.0
    %1220 = vmatprep.subr.mxu0 0.0
    %1221 = vmatpush1.msra.mxu0 0.0
    %1222 = vmatprep.subr.mxu0 0.0
    %1223 = vmatpush1.msra.mxu0 0.0
    %1224 = vmatprep.subr.mxu0 0.0
    %1225 = vmatpush1.msra.mxu0 0.0
    %1226 = vmatprep.subr.mxu0 0.0
    %1227 = vmatpush1.msra.mxu0 0.0
    %1228 = vmatprep.subr.mxu0 0.0
    %1229 = vmatpush1.msra.mxu0 0.0
    %1230 = vmatprep.subr.mxu0 0.0
    %1231 = vmatpush1.msra.mxu0 0.0
    %1232 = vmatprep.subr.mxu0 0.0
    %1233 = vmatpush1.msra.mxu0 0.0
    %1234 = vmatprep.subr.mxu0 0.0
    %1235 = vmatpush1.msra.mxu0 0.0
    %1236 = vmatprep.subr.mxu0 0.0
    %1237 = vmatpush1.msra.mxu0 0.0
    %1238 = vmatprep.subr.mxu0 0.0
    %1239 = vmatpush1.msra.mxu0 0.0
    %1240 = vmatprep.subr.mxu0 0.0
    %1241 = vmatpush1.msra.mxu0 0.0
    %1242 = vmatprep.mubr.f32.mxu0 0.0
    %1243 = vmatmul.mubr.f32.gmra.mrb[0].mxu0 %v1176
    %v1244 = vpop.f32.mrb[0].mxu0
    %v1245 = vadd.f32 0.0, %v1244
    %v1246 = vpop.f32.mrb[0].mxu0
    %1247 = vdwg.mxu0
    %v1249 = vsel %vm867, %v949, 0
    %1251 = vmatprep.subr.mxu0 0.0
    %1252 = vmatpush1.msra.mxu0 %v237
    %1253 = vmatprep.subr.mxu0 0.0
    %1254 = vmatpush1.msra.mxu0 0.0
    %1255 = vmatprep.subr.mxu0 0.0
    %1256 = vmatpush1.msra.mxu0 0.0
    %1257 = vmatprep.subr.mxu0 0.0
    %1258 = vmatpush1.msra.mxu0 0.0
    %1259 = vmatprep.subr.mxu0 0.0
    %1260 = vmatpush1.msra.mxu0 0.0
    %1261 = vmatprep.subr.mxu0 0.0
    %1262 = vmatpush1.msra.mxu0 0.0
    %1263 = vmatprep.subr.mxu0 0.0
    %1264 = vmatpush1.msra.mxu0 0.0
    %1265 = vmatprep.subr.mxu0 0.0
    %1266 = vmatpush1.msra.mxu0 0.0
    %1267 = vmatprep.subr.mxu0 0.0
    %1268 = vmatpush1.msra.mxu0 0.0
    %1269 = vmatprep.subr.mxu0 0.0
    %1270 = vmatpush1.msra.mxu0 0.0
    %1271 = vmatprep.subr.mxu0 0.0
    %1272 = vmatpush1.msra.mxu0 0.0
    %1273 = vmatprep.subr.mxu0 0.0
    %1274 = vmatpush1.msra.mxu0 0.0
    %1275 = vmatprep.subr.mxu0 0.0
    %1276 = vmatpush1.msra.mxu0 0.0
    %1277 = vmatprep.subr.mxu0 0.0
    %1278 = vmatpush1.msra.mxu0 0.0
    %1279 = vmatprep.subr.mxu0 0.0
    %1280 = vmatpush1.msra.mxu0 0.0
    %1281 = vmatprep.subr.mxu0 0.0
    %1282 = vmatpush1.msra.mxu0 0.0
    %1283 = vmatprep.subr.mxu0 0.0
    %1284 = vmatpush1.msra.mxu0 0.0
    %1285 = vmatprep.subr.mxu0 0.0
    %1286 = vmatpush1.msra.mxu0 0.0
    %1287 = vmatprep.subr.mxu0 0.0
    %1288 = vmatpush1.msra.mxu0 0.0
    %1289 = vmatprep.subr.mxu0 0.0
    %1290 = vmatpush1.msra.mxu0 0.0
    %1291 = vmatprep.subr.mxu0 0.0
    %1292 = vmatpush1.msra.mxu0 0.0
    %1293 = vmatprep.subr.mxu0 0.0
    %1294 = vmatpush1.msra.mxu0 0.0
    %1295 = vmatprep.subr.mxu0 0.0
    %1296 = vmatpush1.msra.mxu0 0.0
    %1297 = vmatprep.subr.mxu0 0.0
    %1298 = vmatpush1.msra.mxu0 0.0
    %1299 = vmatprep.subr.mxu0 0.0
    %1300 = vmatpush1.msra.mxu0 0.0
    %1301 = vmatprep.subr.mxu0 0.0
    %1302 = vmatpush1.msra.mxu0 0.0
    %1303 = vmatprep.subr.mxu0 0.0
    %1304 = vmatpush1.msra.mxu0 0.0
    %1305 = vmatprep.subr.mxu0 0.0
    %1306 = vmatpush1.msra.mxu0 0.0
    %1307 = vmatprep.subr.mxu0 0.0
    %1308 = vmatpush1.msra.mxu0 0.0
    %1309 = vmatprep.subr.mxu0 0.0
    %1310 = vmatpush1.msra.mxu0 0.0
    %1311 = vmatprep.subr.mxu0 0.0
    %1312 = vmatpush1.msra.mxu0 0.0
    %1313 = vmatprep.subr.mxu0 0.0
    %1314 = vmatpush1.msra.mxu0 0.0
    %1315 = vmatprep.mubr.f32.mxu0 0.0
    %1316 = vmatmul.mubr.f32.gmra.mrb[0].mxu0 %v1249
    %v1317 = vpop.f32.mrb[0].mxu0
    %v1318 = vadd.f32 0.0, %v1317
    %v1319 = vpop.f32.mrb[0].mxu0
    %1320 = vdwg.mxu0
    %v1322 = vsel %vm867, %v951, 0
    %1324 = vmatprep.subr.mxu0 0.0
    %1325 = vmatpush1.msra.mxu0 %v239
    %1326 = vmatprep.subr.mxu0 0.0
    %1327 = vmatpush1.msra.mxu0 0.0
    %1328 = vmatprep.subr.mxu0 0.0
    %1329 = vmatpush1.msra.mxu0 0.0
    %1330 = vmatprep.subr.mxu0 0.0
    %1331 = vmatpush1.msra.mxu0 0.0
    %1332 = vmatprep.subr.mxu0 0.0
    %1333 = vmatpush1.msra.mxu0 0.0
    %1334 = vmatprep.subr.mxu0 0.0
    %1335 = vmatpush1.msra.mxu0 0.0
    %1336 = vmatprep.subr.mxu0 0.0
    %1337 = vmatpush1.msra.mxu0 0.0
    %1338 = vmatprep.subr.mxu0 0.0
    %1339 = vmatpush1.msra.mxu0 0.0
    %1340 = vmatprep.subr.mxu0 0.0
    %1341 = vmatpush1.msra.mxu0 0.0
    %1342 = vmatprep.subr.mxu0 0.0
    %1343 = vmatpush1.msra.mxu0 0.0
    %1344 = vmatprep.subr.mxu0 0.0
    %1345 = vmatpush1.msra.mxu0 0.0
    %1346 = vmatprep.subr.mxu0 0.0
    %1347 = vmatpush1.msra.mxu0 0.0
    %1348 = vmatprep.subr.mxu0 0.0
    %1349 = vmatpush1.msra.mxu0 0.0
    %1350 = vmatprep.subr.mxu0 0.0
    %1351 = vmatpush1.msra.mxu0 0.0
    %1352 = vmatprep.subr.mxu0 0.0
    %1353 = vmatpush1.msra.mxu0 0.0
    %1354 = vmatprep.subr.mxu0 0.0
    %1355 = vmatpush1.msra.mxu0 0.0
    %1356 = vmatprep.subr.mxu0 0.0
    %1357 = vmatpush1.msra.mxu0 0.0
    %1358 = vmatprep.subr.mxu0 0.0
    %1359 = vmatpush1.msra.mxu0 0.0
    %1360 = vmatprep.subr.mxu0 0.0
    %1361 = vmatpush1.msra.mxu0 0.0
    %1362 = vmatprep.subr.mxu0 0.0
    %1363 = vmatpush1.msra.mxu0 0.0
    %1364 = vmatprep.subr.mxu0 0.0
    %1365 = vmatpush1.msra.mxu0 0.0
    %1366 = vmatprep.subr.mxu0 0.0
    %1367 = vmatpush1.msra.mxu0 0.0
    %1368 = vmatprep.subr.mxu0 0.0
    %1369 = vmatpush1.msra.mxu0 0.0
    %1370 = vmatprep.subr.mxu0 0.0
    %1371 = vmatpush1.msra.mxu0 0.0
    %1372 = vmatprep.subr.mxu0 0.0
    %1373 = vmatpush1.msra.mxu0 0.0
    %1374 = vmatprep.subr.mxu0 0.0
    %1375 = vmatpush1.msra.mxu0 0.0
    %1376 = vmatprep.subr.mxu0 0.0
    %1377 = vmatpush1.msra.mxu0 0.0
    %1378 = vmatprep.subr.mxu0 0.0
    %1379 = vmatpush1.msra.mxu0 0.0
    %1380 = vmatprep.subr.mxu0 0.0
    %1381 = vmatpush1.msra.mxu0 0.0
    %1382 = vmatprep.subr.mxu0 0.0
    %1383 = vmatpush1.msra.mxu0 0.0
    %1384 = vmatprep.subr.mxu0 0.0
    %1385 = vmatpush1.msra.mxu0 0.0
    %1386 = vmatprep.subr.mxu0 0.0
    %1387 = vmatpush1.msra.mxu0 0.0
    %1388 = vmatprep.mubr.f32.mxu0 0.0
    %1389 = vmatmul.mubr.f32.gmra.mrb[0].mxu0 %v1322
    %v1390 = vpop.f32.mrb[0].mxu0
    %v1391 = vadd.f32 0.0, %v1390
    %v1392 = vpop.f32.mrb[0].mxu0
    %1393 = vdwg.mxu0
    %v1395 = vsel %vm867, %v953, 0
    %1397 = vmatprep.subr.mxu0 0.0
    %1398 = vmatpush1.msra.mxu0 %v243
    %1399 = vmatprep.subr.mxu0 0.0
    %1400 = vmatpush1.msra.mxu0 0.0
    %1401 = vmatprep.subr.mxu0 0.0
    %1402 = vmatpush1.msra.mxu0 0.0
    %1403 = vmatprep.subr.mxu0 0.0
    %1404 = vmatpush1.msra.mxu0 0.0
    %1405 = vmatprep.subr.mxu0 0.0
    %1406 = vmatpush1.msra.mxu0 0.0
    %1407 = vmatprep.subr.mxu0 0.0
    %1408 = vmatpush1.msra.mxu0 0.0
    %1409 = vmatprep.subr.mxu0 0.0
    %1410 = vmatpush1.msra.mxu0 0.0
    %1411 = vmatprep.subr.mxu0 0.0
    %1412 = vmatpush1.msra.mxu0 0.0
    %1413 = vmatprep.subr.mxu0 0.0
    %1414 = vmatpush1.msra.mxu0 0.0
    %1415 = vmatprep.subr.mxu0 0.0
    %1416 = vmatpush1.msra.mxu0 0.0
    %1417 = vmatprep.subr.mxu0 0.0
    %1418 = vmatpush1.msra.mxu0 0.0
    %1419 = vmatprep.subr.mxu0 0.0
    %1420 = vmatpush1.msra.mxu0 0.0
    %1421 = vmatprep.subr.mxu0 0.0
    %1422 = vmatpush1.msra.mxu0 0.0
    %1423 = vmatprep.subr.mxu0 0.0
    %1424 = vmatpush1.msra.mxu0 0.0
    %1425 = vmatprep.subr.mxu0 0.0
    %1426 = vmatpush1.msra.mxu0 0.0
    %1427 = vmatprep.subr.mxu0 0.0
    %1428 = vmatpush1.msra.mxu0 0.0
    %1429 = vmatprep.subr.mxu0 0.0
    %1430 = vmatpush1.msra.mxu0 0.0
    %1431 = vmatprep.subr.mxu0 0.0
    %1432 = vmatpush1.msra.mxu0 0.0
    %1433 = vmatprep.subr.mxu0 0.0
    %1434 = vmatpush1.msra.mxu0 0.0
    %1435 = vmatprep.subr.mxu0 0.0
    %1436 = vmatpush1.msra.mxu0 0.0
    %1437 = vmatprep.subr.mxu0 0.0
    %1438 = vmatpush1.msra.mxu0 0.0
    %1439 = vmatprep.subr.mxu0 0.0
    %1440 = vmatpush1.msra.mxu0 0.0
    %1441 = vmatprep.subr.mxu0 0.0
    %1442 = vmatpush1.msra.mxu0 0.0
    %1443 = vmatprep.subr.mxu0 0.0
    %1444 = vmatpush1.msra.mxu0 0.0
    %1445 = vmatprep.subr.mxu0 0.0
    %1446 = vmatpush1.msra.mxu0 0.0
    %1447 = vmatprep.subr.mxu0 0.0
    %1448 = vmatpush1.msra.mxu0 0.0
    %1449 = vmatprep.subr.mxu0 0.0
    %1450 = vmatpush1.msra.mxu0 0.0
    %1451 = vmatprep.subr.mxu0 0.0
    %1452 = vmatpush1.msra.mxu0 0.0
    %1453 = vmatprep.subr.mxu0 0.0
    %1454 = vmatpush1.msra.mxu0 0.0
    %1455 = vmatprep.subr.mxu0 0.0
    %1456 = vmatpush1.msra.mxu0 0.0
    %1457 = vmatprep.subr.mxu0 0.0
    %1458 = vmatpush1.msra.mxu0 0.0
    %1459 = vmatprep.subr.mxu0 0.0
    %1460 = vmatpush1.msra.mxu0 0.0
    %1461 = vmatprep.mubr.f32.mxu0 0.0
    %1462 = vmatmul.mubr.f32.gmra.mrb[0].mxu0 %v1395
    %v1463 = vpop.f32.mrb[0].mxu0
    %v1464 = vadd.f32 0.0, %v1463
    %v1465 = vpop.f32.mrb[0].mxu0
    %1466 = vdwg.mxu0
    %v1468 = vsel %vm867, %v955, 0
    %1470 = vmatprep.subr.mxu0 0.0
    %1471 = vmatpush1.msra.mxu0 %v245
    %1472 = vmatprep.subr.mxu0 0.0
    %1473 = vmatpush1.msra.mxu0 0.0
    %1474 = vmatprep.subr.mxu0 0.0
    %1475 = vmatpush1.msra.mxu0 0.0
    %1476 = vmatprep.subr.mxu0 0.0
    %1477 = vmatpush1.msra.mxu0 0.0
    %1478 = vmatprep.subr.mxu0 0.0
    %1479 = vmatpush1.msra.mxu0 0.0
    %1480 = vmatprep.subr.mxu0 0.0
    %1481 = vmatpush1.msra.mxu0 0.0
    %1482 = vmatprep.subr.mxu0 0.0
    %1483 = vmatpush1.msra.mxu0 0.0
    %1484 = vmatprep.subr.mxu0 0.0
    %1485 = vmatpush1.msra.mxu0 0.0
    %1486 = vmatprep.subr.mxu0 0.0
    %1487 = vmatpush1.msra.mxu0 0.0
    %1488 = vmatprep.subr.mxu0 0.0
    %1489 = vmatpush1.msra.mxu0 0.0
    %1490 = vmatprep.subr.mxu0 0.0
    %1491 = vmatpush1.msra.mxu0 0.0
    %1492 = vmatprep.subr.mxu0 0.0
    %1493 = vmatpush1.msra.mxu0 0.0
    %1494 = vmatprep.subr.mxu0 0.0
    %1495 = vmatpush1.msra.mxu0 0.0
    %1496 = vmatprep.subr.mxu0 0.0
    %1497 = vmatpush1.msra.mxu0 0.0
    %1498 = vmatprep.subr.mxu0 0.0
    %1499 = vmatpush1.msra.mxu0 0.0
    %1500 = vmatprep.subr.mxu0 0.0
    %1501 = vmatpush1.msra.mxu0 0.0
    %1502 = vmatprep.subr.mxu0 0.0
    %1503 = vmatpush1.msra.mxu0 0.0
    %1504 = vmatprep.subr.mxu0 0.0
    %1505 = vmatpush1.msra.mxu0 0.0
    %1506 = vmatprep.subr.mxu0 0.0
    %1507 = vmatpush1.msra.mxu0 0.0
    %1508 = vmatprep.subr.mxu0 0.0
    %1509 = vmatpush1.msra.mxu0 0.0
    %1510 = vmatprep.subr.mxu0 0.0
    %1511 = vmatpush1.msra.mxu0 0.0
    %1512 = vmatprep.subr.mxu0 0.0
    %1513 = vmatpush1.msra.mxu0 0.0
    %1514 = vmatprep.subr.mxu0 0.0
    %1515 = vmatpush1.msra.mxu0 0.0
    %1516 = vmatprep.subr.mxu0 0.0
    %1517 = vmatpush1.msra.mxu0 0.0
    %1518 = vmatprep.subr.mxu0 0.0
    %1519 = vmatpush1.msra.mxu0 0.0
    %1520 = vmatprep.subr.mxu0 0.0
    %1521 = vmatpush1.msra.mxu0 0.0
    %1522 = vmatprep.subr.mxu0 0.0
    %1523 = vmatpush1.msra.mxu0 0.0
    %1524 = vmatprep.subr.mxu0 0.0
    %1525 = vmatpush1.msra.mxu0 0.0
    %1526 = vmatprep.subr.mxu0 0.0
    %1527 = vmatpush1.msra.mxu0 0.0
    %1528 = vmatprep.subr.mxu0 0.0
    %1529 = vmatpush1.msra.mxu0 0.0
    %1530 = vmatprep.subr.mxu0 0.0
    %1531 = vmatpush1.msra.mxu0 0.0
    %1532 = vmatprep.subr.mxu0 0.0
    %1533 = vmatpush1.msra.mxu0 0.0
    %1534 = vmatprep.mubr.f32.mxu0 0.0
    %1535 = vmatmul.mubr.f32.gmra.mrb[0].mxu0 %v1468
    %v1536 = vpop.f32.mrb[0].mxu0
    %v1537 = vadd.f32 0.0, %v1536
    %v1538 = vpop.f32.mrb[0].mxu0
    %1539 = vdwg.mxu0
    %v1540 = vmax.f32 %v1026, 0.0
    %v1541 = vmax.f32 %v1099, 0.0
    %v1542 = vmax.f32 %v1172, 0.0
    %v1543 = vmax.f32 %v1245, 0.0
    %v1544 = vmax.f32 %v1318, 0.0
    %v1545 = vmax.f32 %v1391, 0.0
    %v1546 = vmax.f32 %v1464, 0.0
    %v1547 = vmax.f32 %v1537, 0.0
    %v1548 = vld [vmem:[%s6 + $0x5] ss:$0 sm:$0xff]
    %v1549 = vld [vmem:[#allocation5] sm:$0xff]
    %v1550 = vld [vmem:[#allocation5 + $0x8] sm:$0xff]
    %v1552 = vsel %vm250, %v1540, 0
    %v1555 = vsel %vm250, %v1541, 0
    %1557 = vmatprep.subr.mxu0 0.0
    %1558 = vmatpush1.msra.mxu0 %v1549
    %1559 = vmatprep.subr.mxu0 0.0
    %1560 = vmatpush1.msra.mxu0 %v1550
    %1561 = vmatprep.subr.mxu0 0.0
    %1562 = vmatpush1.msra.mxu0 0.0
    %1563 = vmatprep.subr.mxu0 0.0
    %1564 = vmatpush1.msra.mxu0 0.0
    %1565 = vmatprep.subr.mxu0 0.0
    %1566 = vmatpush1.msra.mxu0 0.0
    %1567 = vmatprep.subr.mxu0 0.0
    %1568 = vmatpush1.msra.mxu0 0.0
    %1569 = vmatprep.subr.mxu0 0.0
    %1570 = vmatpush1.msra.mxu0 0.0
    %1571 = vmatprep.subr.mxu0 0.0
    %1572 = vmatpush1.msra.mxu0 0.0
    %1573 = vmatprep.subr.mxu0 0.0
    %1574 = vmatpush1.msra.mxu0 0.0
    %1575 = vmatprep.subr.mxu0 0.0
    %1576 = vmatpush1.msra.mxu0 0.0
    %1577 = vmatprep.subr.mxu0 0.0
    %1578 = vmatpush1.msra.mxu0 0.0
    %1579 = vmatprep.subr.mxu0 0.0
    %1580 = vmatpush1.msra.mxu0 0.0
    %1581 = vmatprep.subr.mxu0 0.0
    %1582 = vmatpush1.msra.mxu0 0.0
    %1583 = vmatprep.subr.mxu0 0.0
    %1584 = vmatpush1.msra.mxu0 0.0
    %1585 = vmatprep.subr.mxu0 0.0
    %1586 = vmatpush1.msra.mxu0 0.0
    %1587 = vmatprep.subr.mxu0 0.0
    %1588 = vmatpush1.msra.mxu0 0.0
    %1589 = vmatprep.subr.mxu0 0.0
    %1590 = vmatpush1.msra.mxu0 0.0
    %1591 = vmatprep.subr.mxu0 0.0
    %1592 = vmatpush1.msra.mxu0 0.0
    %1593 = vmatprep.subr.mxu0 0.0
    %1594 = vmatpush1.msra.mxu0 0.0
    %1595 = vmatprep.subr.mxu0 0.0
    %1596 = vmatpush1.msra.mxu0 0.0
    %1597 = vmatprep.subr.mxu0 0.0
    %1598 = vmatpush1.msra.mxu0 0.0
    %1599 = vmatprep.subr.mxu0 0.0
    %1600 = vmatpush1.msra.mxu0 0.0
    %1601 = vmatprep.subr.mxu0 0.0
    %1602 = vmatpush1.msra.mxu0 0.0
    %1603 = vmatprep.subr.mxu0 0.0
    %1604 = vmatpush1.msra.mxu0 0.0
    %1605 = vmatprep.subr.mxu0 0.0
    %1606 = vmatpush1.msra.mxu0 0.0
    %1607 = vmatprep.subr.mxu0 0.0
    %1608 = vmatpush1.msra.mxu0 0.0
    %1609 = vmatprep.subr.mxu0 0.0
    %1610 = vmatpush1.msra.mxu0 0.0
    %1611 = vmatprep.subr.mxu0 0.0
    %1612 = vmatpush1.msra.mxu0 0.0
    %1613 = vmatprep.subr.mxu0 0.0
    %1614 = vmatpush1.msra.mxu0 0.0
    %1615 = vmatprep.subr.mxu0 0.0
    %1616 = vmatpush1.msra.mxu0 0.0
    %1617 = vmatprep.subr.mxu0 0.0
    %1618 = vmatpush1.msra.mxu0 0.0
    %1619 = vmatprep.subr.mxu0 0.0
    %1620 = vmatpush1.msra.mxu0 0.0
    %1621 = vmatprep.mubr.f32.mxu0 0.0
    %1622 = vmatmul.mubr.f32.gmra.mrb[0].mxu0 %v1552
    %v1623 = vpop.f32.mrb[0].mxu0
    %v1624 = vadd.f32 0.0, %v1623
    %v1625 = vpop.f32.mrb[0].mxu0
    %1626 = vmatprep.mubr.f32.mxu0 0.0
    %1627 = vmatmul.mubr.f32.gmra.mrb[0].mxu0 %v1555
    %v1628 = vpop.f32.mrb[0].mxu0
    %v1629 = vadd.f32 0.0, %v1628
    %v1630 = vpop.f32.mrb[0].mxu0
    %1631 = vdwg.mxu0
    %v1632 = vadd.f32 %v1548, %v1624
    %v1633 = vadd.f32 %v1548, %v1629
    %s1634 = scalar_lea.vmem [#allocation5], 16
    %v1635 = vld [vmem:[%s1634] sm:$0xff]
    %v1636 = vld [vmem:[%s1634 + $0x8] sm:$0xff]
    %v1638 = vsel %vm250, %v1542, 0
    %v1641 = vsel %vm250, %v1543, 0
    %1643 = vmatprep.subr.mxu0 0.0
    %1644 = vmatpush1.msra.mxu0 %v1635
    %1645 = vmatprep.subr.mxu0 0.0
    %1646 = vmatpush1.msra.mxu0 %v1636
    %1647 = vmatprep.subr.mxu0 0.0
    %1648 = vmatpush1.msra.mxu0 0.0
    %1649 = vmatprep.subr.mxu0 0.0
    %1650 = vmatpush1.msra.mxu0 0.0
    %1651 = vmatprep.subr.mxu0 0.0
    %1652 = vmatpush1.msra.mxu0 0.0
    %1653 = vmatprep.subr.mxu0 0.0
    %1654 = vmatpush1.msra.mxu0 0.0
    %1655 = vmatprep.subr.mxu0 0.0
    %1656 = vmatpush1.msra.mxu0 0.0
    %1657 = vmatprep.subr.mxu0 0.0
    %1658 = vmatpush1.msra.mxu0 0.0
    %1659 = vmatprep.subr.mxu0 0.0
    %1660 = vmatpush1.msra.mxu0 0.0
    %1661 = vmatprep.subr.mxu0 0.0
    %1662 = vmatpush1.msra.mxu0 0.0
    %1663 = vmatprep.subr.mxu0 0.0
    %1664 = vmatpush1.msra.mxu0 0.0
    %1665 = vmatprep.subr.mxu0 0.0
    %1666 = vmatpush1.msra.mxu0 0.0
    %1667 = vmatprep.subr.mxu0 0.0
    %1668 = vmatpush1.msra.mxu0 0.0
    %1669 = vmatprep.subr.mxu0 0.0
    %1670 = vmatpush1.msra.mxu0 0.0
    %1671 = vmatprep.subr.mxu0 0.0
    %1672 = vmatpush1.msra.mxu0 0.0
    %1673 = vmatprep.subr.mxu0 0.0
    %1674 = vmatpush1.msra.mxu0 0.0
    %1675 = vmatprep.subr.mxu0 0.0
    %1676 = vmatpush1.msra.mxu0 0.0
    %1677 = vmatprep.subr.mxu0 0.0
    %1678 = vmatpush1.msra.mxu0 0.0
    %1679 = vmatprep.subr.mxu0 0.0
    %1680 = vmatpush1.msra.mxu0 0.0
    %1681 = vmatprep.subr.mxu0 0.0
    %1682 = vmatpush1.msra.mxu0 0.0
    %1683 = vmatprep.subr.mxu0 0.0
    %1684 = vmatpush1.msra.mxu0 0.0
    %1685 = vmatprep.subr.mxu0 0.0
    %1686 = vmatpush1.msra.mxu0 0.0
    %1687 = vmatprep.subr.mxu0 0.0
    %1688 = vmatpush1.msra.mxu0 0.0
    %1689 = vmatprep.subr.mxu0 0.0
    %1690 = vmatpush1.msra.mxu0 0.0
    %1691 = vmatprep.subr.mxu0 0.0
    %1692 = vmatpush1.msra.mxu0 0.0
    %1693 = vmatprep.subr.mxu0 0.0
    %1694 = vmatpush1.msra.mxu0 0.0
    %1695 = vmatprep.subr.mxu0 0.0
    %1696 = vmatpush1.msra.mxu0 0.0
    %1697 = vmatprep.subr.mxu0 0.0
    %1698 = vmatpush1.msra.mxu0 0.0
    %1699 = vmatprep.subr.mxu0 0.0
    %1700 = vmatpush1.msra.mxu0 0.0
    %1701 = vmatprep.subr.mxu0 0.0
    %1702 = vmatpush1.msra.mxu0 0.0
    %1703 = vmatprep.subr.mxu0 0.0
    %1704 = vmatpush1.msra.mxu0 0.0
    %1705 = vmatprep.subr.mxu0 0.0
    %1706 = vmatpush1.msra.mxu0 0.0
    %1707 = vmatprep.mubr.f32.mxu0 0.0
    %1708 = vmatmul.mubr.f32.gmra.mrb[0].mxu0 %v1638
    %v1709 = vpop.f32.mrb[0].mxu0
    %v1710 = vadd.f32 0.0, %v1709
    %v1711 = vpop.f32.mrb[0].mxu0
    %1712 = vmatprep.mubr.f32.mxu0 0.0
    %1713 = vmatmul.mubr.f32.gmra.mrb[0].mxu0 %v1641
    %v1714 = vpop.f32.mrb[0].mxu0
    %v1715 = vadd.f32 0.0, %v1714
    %v1716 = vpop.f32.mrb[0].mxu0
    %1717 = vdwg.mxu0
    %v1718 = vadd.f32 %v1632, %v1710
    %v1719 = vadd.f32 %v1633, %v1715
    %s1720 = scalar_lea.vmem [#allocation5], 32
    %v1721 = vld [vmem:[%s1720] sm:$0xff]
    %v1722 = vld [vmem:[%s1720 + $0x8] sm:$0xff]
    %v1724 = vsel %vm250, %v1544, 0
    %v1727 = vsel %vm250, %v1545, 0
    %1729 = vmatprep.subr.mxu0 0.0
    %1730 = vmatpush1.msra.mxu0 %v1721
    %1731 = vmatprep.subr.mxu0 0.0
    %1732 = vmatpush1.msra.mxu0 %v1722
    %1733 = vmatprep.subr.mxu0 0.0
    %1734 = vmatpush1.msra.mxu0 0.0
    %1735 = vmatprep.subr.mxu0 0.0
    %1736 = vmatpush1.msra.mxu0 0.0
    %1737 = vmatprep.subr.mxu0 0.0
    %1738 = vmatpush1.msra.mxu0 0.0
    %1739 = vmatprep.subr.mxu0 0.0
    %1740 = vmatpush1.msra.mxu0 0.0
    %1741 = vmatprep.subr.mxu0 0.0
    %1742 = vmatpush1.msra.mxu0 0.0
    %1743 = vmatprep.subr.mxu0 0.0
    %1744 = vmatpush1.msra.mxu0 0.0
    %1745 = vmatprep.subr.mxu0 0.0
    %1746 = vmatpush1.msra.mxu0 0.0
    %1747 = vmatprep.subr.mxu0 0.0
    %1748 = vmatpush1.msra.mxu0 0.0
    %1749 = vmatprep.subr.mxu0 0.0
    %1750 = vmatpush1.msra.mxu0 0.0
    %1751 = vmatprep.subr.mxu0 0.0
    %1752 = vmatpush1.msra.mxu0 0.0
    %1753 = vmatprep.subr.mxu0 0.0
    %1754 = vmatpush1.msra.mxu0 0.0
    %1755 = vmatprep.subr.mxu0 0.0
    %1756 = vmatpush1.msra.mxu0 0.0
    %1757 = vmatprep.subr.mxu0 0.0
    %1758 = vmatpush1.msra.mxu0 0.0
    %1759 = vmatprep.subr.mxu0 0.0
    %1760 = vmatpush1.msra.mxu0 0.0
    %1761 = vmatprep.subr.mxu0 0.0
    %1762 = vmatpush1.msra.mxu0 0.0
    %1763 = vmatprep.subr.mxu0 0.0
    %1764 = vmatpush1.msra.mxu0 0.0
    %1765 = vmatprep.subr.mxu0 0.0
    %1766 = vmatpush1.msra.mxu0 0.0
    %1767 = vmatprep.subr.mxu0 0.0
    %1768 = vmatpush1.msra.mxu0 0.0
    %1769 = vmatprep.subr.mxu0 0.0
    %1770 = vmatpush1.msra.mxu0 0.0
    %1771 = vmatprep.subr.mxu0 0.0
    %1772 = vmatpush1.msra.mxu0 0.0
    %1773 = vmatprep.subr.mxu0 0.0
    %1774 = vmatpush1.msra.mxu0 0.0
    %1775 = vmatprep.subr.mxu0 0.0
    %1776 = vmatpush1.msra.mxu0 0.0
    %1777 = vmatprep.subr.mxu0 0.0
    %1778 = vmatpush1.msra.mxu0 0.0
    %1779 = vmatprep.subr.mxu0 0.0
    %1780 = vmatpush1.msra.mxu0 0.0
    %1781 = vmatprep.subr.mxu0 0.0
    %1782 = vmatpush1.msra.mxu0 0.0
    %1783 = vmatprep.subr.mxu0 0.0
    %1784 = vmatpush1.msra.mxu0 0.0
    %1785 = vmatprep.subr.mxu0 0.0
    %1786 = vmatpush1.msra.mxu0 0.0
    %1787 = vmatprep.subr.mxu0 0.0
    %1788 = vmatpush1.msra.mxu0 0.0
    %1789 = vmatprep.subr.mxu0 0.0
    %1790 = vmatpush1.msra.mxu0 0.0
    %1791 = vmatprep.subr.mxu0 0.0
    %1792 = vmatpush1.msra.mxu0 0.0
    %1793 = vmatprep.mubr.f32.mxu0 0.0
    %1794 = vmatmul.mubr.f32.gmra.mrb[0].mxu0 %v1724
    %v1795 = vpop.f32.mrb[0].mxu0
    %v1796 = vadd.f32 0.0, %v1795
    %v1797 = vpop.f32.mrb[0].mxu0
    %1798 = vmatprep.mubr.f32.mxu0 0.0
    %1799 = vmatmul.mubr.f32.gmra.mrb[0].mxu0 %v1727
    %v1800 = vpop.f32.mrb[0].mxu0
    %v1801 = vadd.f32 0.0, %v1800
    %v1802 = vpop.f32.mrb[0].mxu0
    %1803 = vdwg.mxu0
    %v1804 = vadd.f32 %v1718, %v1796
    %v1805 = vadd.f32 %v1719, %v1801
    %s1806 = scalar_lea.vmem [#allocation5], 48
    %v1807 = vld [vmem:[%s1806] sm:$0xff]
    %v1808 = vld [vmem:[%s1806 + $0x8] sm:$0xff]
    %v1810 = vsel %vm250, %v1546, 0
    %v1813 = vsel %vm250, %v1547, 0
    %1815 = vmatprep.subr.mxu0 0.0
    %1816 = vmatpush1.msra.mxu0 %v1807
    %1817 = vmatprep.subr.mxu0 0.0
    %1818 = vmatpush1.msra.mxu0 %v1808
    %1819 = vmatprep.subr.mxu0 0.0
    %1820 = vmatpush1.msra.mxu0 0.0
    %1821 = vmatprep.subr.mxu0 0.0
    %1822 = vmatpush1.msra.mxu0 0.0
    %1823 = vmatprep.subr.mxu0 0.0
    %1824 = vmatpush1.msra.mxu0 0.0
    %1825 = vmatprep.subr.mxu0 0.0
    %1826 = vmatpush1.msra.mxu0 0.0
    %1827 = vmatprep.subr.mxu0 0.0
    %1828 = vmatpush1.msra.mxu0 0.0
    %1829 = vmatprep.subr.mxu0 0.0
    %1830 = vmatpush1.msra.mxu0 0.0
    %1831 = vmatprep.subr.mxu0 0.0
    %1832 = vmatpush1.msra.mxu0 0.0
    %1833 = vmatprep.subr.mxu0 0.0
    %1834 = vmatpush1.msra.mxu0 0.0
    %1835 = vmatprep.subr.mxu0 0.0
    %1836 = vmatpush1.msra.mxu0 0.0
    %1837 = vmatprep.subr.mxu0 0.0
    %1838 = vmatpush1.msra.mxu0 0.0
    %1839 = vmatprep.subr.mxu0 0.0
    %1840 = vmatpush1.msra.mxu0 0.0
    %1841 = vmatprep.subr.mxu0 0.0
    %1842 = vmatpush1.msra.mxu0 0.0
    %1843 = vmatprep.subr.mxu0 0.0
    %1844 = vmatpush1.msra.mxu0 0.0
    %1845 = vmatprep.subr.mxu0 0.0
    %1846 = vmatpush1.msra.mxu0 0.0
    %1847 = vmatprep.subr.mxu0 0.0
    %1848 = vmatpush1.msra.mxu0 0.0
    %1849 = vmatprep.subr.mxu0 0.0
    %1850 = vmatpush1.msra.mxu0 0.0
    %1851 = vmatprep.subr.mxu0 0.0
    %1852 = vmatpush1.msra.mxu0 0.0
    %1853 = vmatprep.subr.mxu0 0.0
    %1854 = vmatpush1.msra.mxu0 0.0
    %1855 = vmatprep.subr.mxu0 0.0
    %1856 = vmatpush1.msra.mxu0 0.0
    %1857 = vmatprep.subr.mxu0 0.0
    %1858 = vmatpush1.msra.mxu0 0.0
    %1859 = vmatprep.subr.mxu0 0.0
    %1860 = vmatpush1.msra.mxu0 0.0
    %1861 = vmatprep.subr.mxu0 0.0
    %1862 = vmatpush1.msra.mxu0 0.0
    %1863 = vmatprep.subr.mxu0 0.0
    %1864 = vmatpush1.msra.mxu0 0.0
    %1865 = vmatprep.subr.mxu0 0.0
    %1866 = vmatpush1.msra.mxu0 0.0
    %1867 = vmatprep.subr.mxu0 0.0
    %1868 = vmatpush1.msra.mxu0 0.0
    %1869 = vmatprep.subr.mxu0 0.0
    %1870 = vmatpush1.msra.mxu0 0.0
    %1871 = vmatprep.subr.mxu0 0.0
    %1872 = vmatpush1.msra.mxu0 0.0
    %1873 = vmatprep.subr.mxu0 0.0
    %1874 = vmatpush1.msra.mxu0 0.0
    %1875 = vmatprep.subr.mxu0 0.0
    %1876 = vmatpush1.msra.mxu0 0.0
    %1877 = vmatprep.subr.mxu0 0.0
    %1878 = vmatpush1.msra.mxu0 0.0
    %1879 = vmatprep.mubr.f32.mxu0 0.0
    %1880 = vmatmul.mubr.f32.gmra.mrb[0].mxu0 %v1810
    %v1881 = vpop.f32.mrb[0].mxu0
    %v1882 = vadd.f32 0.0, %v1881
    %v1883 = vpop.f32.mrb[0].mxu0
    %1884 = vmatprep.mubr.f32.mxu0 0.0
    %1885 = vmatmul.mubr.f32.gmra.mrb[0].mxu0 %v1813
    %v1886 = vpop.f32.mrb[0].mxu0
    %v1887 = vadd.f32 0.0, %v1886
    %v1888 = vpop.f32.mrb[0].mxu0
    %1889 = vdwg.mxu0
    %v1890 = vadd.f32 %v1804, %v1882
    %v1891 = vadd.f32 %v1805, %v1887
    %v1892 = vadd.f32 %v60, %v1890
    %v1893 = vadd.f32 %v61, %v1891
    %v1894 = vld [vmem:[%s6 + $0x2] ss:$0 sm:$0xff]
    %v1895 = vld [vmem:[%s6 + $0x3] ss:$0 sm:$0xff]
    %v1896 = vsel %vm64, %v1892, 0.0
    %1897 = vadd.xlane.f32.xlu0 %v1896
    %v1898 = vpop.xlane.xlu0 %1897
    %v1899 = vsel %vm64, %v1893, 0.0
    %1900 = vadd.xlane.f32.xlu0 %v1899
    %v1901 = vpop.xlane.xlu0 %1900
    %v1902 = vmul.f32 %v1898, %v71
    %v1903 = vmul.f32 %v1901, %v71
    %v1904 = vsub.f32 %v1892, %v1902
    %v1905 = vsub.f32 %v1893, %v1903
    %v1906 = vmul.f32 %v1904, %v1904
    %v1907 = vmul.f32 %v1905, %v1905
    %v1908 = vsel %vm64, %v1906, 0.0
    %1909 = vadd.xlane.f32.xlu0 %v1908
    %v1910 = vpop.xlane.xlu0 %1909
    %v1911 = vsel %vm64, %v1907, 0.0
    %1912 = vadd.xlane.f32.xlu0 %v1911
    %v1913 = vpop.xlane.xlu0 %1912
    %v1914 = vmul.f32 %v1910, %v71
    %v1915 = vmul.f32 %v1913, %v71
    %v1916 = vadd.f32 %v1914, 1e-05
    %v1917 = vadd.f32 %v1915, 1e-05
    %v1918 = vrsqrt.pop %v1916
    %v1919 = vmul.f32 %v1916, %v1918
    %vm1920 = vcmp.eq.f32.partialorder %v1916, inf
    %v1921 = vsel %vm1920, %v1916, %v1919
    %vm1922 = vcmp.eq.f32.partialorder %v1916, 0.0
    %v1923 = vand.u32 %v1916, 2147483648
    %v1924 = vsel %vm1922, %v1923, %v1921
    %v1925 = vrsqrt.pop %v1917
    %v1926 = vmul.f32 %v1917, %v1925
    %vm1927 = vcmp.eq.f32.partialorder %v1917, inf
    %v1928 = vsel %vm1927, %v1917, %v1926
    %vm1929 = vcmp.eq.f32.partialorder %v1917, 0.0
    %v1930 = vand.u32 %v1917, 2147483648
    %v1931 = vsel %vm1929, %v1930, %v1928
    %v1932 = vrcp.pop %v1924
    %v1933 = vmul.f32 %v1904, %v1932
    %v1934 = vrcp.pop %v1931
    %v1935 = vmul.f32 %v1905, %v1934
    %v1936 = vmul.f32 %v1933, %v1894
    %v1937 = vmul.f32 %v1935, %v1894
    %v1938 = vadd.f32 %v1936, %v1895
    %v1939 = vadd.f32 %v1937, %v1895
    %v1940 = vld [vmem:[%s3] sm:$0xff]
    %v1941 = vld [vmem:[%s3 + $0x8] sm:$0xff]
    %v1942 = vld [vmem:[%s3 + $0x10] sm:$0xff]
    %v1943 = vld [vmem:[%s3 + $0x18] sm:$0xff]
    %v1944 = vld [vmem:[%s6 + $0x6] ss:$0 sm:$0xff]
    %v1946 = vsel %vm64, %v1938, 0
    %v1949 = vsel %vm64, %v1939, 0
    %1951 = vmatprep.subr.mxu0 0.0
    %1952 = vmatpush1.msra.mxu0 %v1940
    %1953 = vmatprep.subr.mxu0 0.0
    %1954 = vmatpush1.msra.mxu0 %v1941
    %1955 = vmatprep.subr.mxu0 0.0
    %1956 = vmatpush1.msra.mxu0 %v1942
    %1957 = vmatprep.subr.mxu0 0.0
    %1958 = vmatpush1.msra.mxu0 %v1943
    %1959 = vmatprep.subr.mxu0 0.0
    %1960 = vmatpush1.msra.mxu0 0.0
    %1961 = vmatprep.subr.mxu0 0.0
    %1962 = vmatpush1.msra.mxu0 0.0
    %1963 = vmatprep.subr.mxu0 0.0
    %1964 = vmatpush1.msra.mxu0 0.0
    %1965 = vmatprep.subr.mxu0 0.0
    %1966 = vmatpush1.msra.mxu0 0.0
    %1967 = vmatprep.subr.mxu0 0.0
    %1968 = vmatpush1.msra.mxu0 0.0
    %1969 = vmatprep.subr.mxu0 0.0
    %1970 = vmatpush1.msra.mxu0 0.0
    %1971 = vmatprep.subr.mxu0 0.0
    %1972 = vmatpush1.msra.mxu0 0.0
    %1973 = vmatprep.subr.mxu0 0.0
    %1974 = vmatpush1.msra.mxu0 0.0
    %1975 = vmatprep.subr.mxu0 0.0
    %1976 = vmatpush1.msra.mxu0 0.0
    %1977 = vmatprep.subr.mxu0 0.0
    %1978 = vmatpush1.msra.mxu0 0.0
    %1979 = vmatprep.subr.mxu0 0.0
    %1980 = vmatpush1.msra.mxu0 0.0
    %1981 = vmatprep.subr.mxu0 0.0
    %1982 = vmatpush1.msra.mxu0 0.0
    %1983 = vmatprep.subr.mxu0 0.0
    %1984 = vmatpush1.msra.mxu0 0.0
    %1985 = vmatprep.subr.mxu0 0.0
    %1986 = vmatpush1.msra.mxu0 0.0
    %1987 = vmatprep.subr.mxu0 0.0
    %1988 = vmatpush1.msra.mxu0 0.0
    %1989 = vmatprep.subr.mxu0 0.0
    %1990 = vmatpush1.msra.mxu0 0.0
    %1991 = vmatprep.subr.mxu0 0.0
    %1992 = vmatpush1.msra.mxu0 0.0
    %1993 = vmatprep.subr.mxu0 0.0
    %1994 = vmatpush1.msra.mxu0 0.0
    %1995 = vmatprep.subr.mxu0 0.0
    %1996 = vmatpush1.msra.mxu0 0.0
    %1997 = vmatprep.subr.mxu0 0.0
    %1998 = vmatpush1.msra.mxu0 0.0
    %1999 = vmatprep.subr.mxu0 0.0
    %2000 = vmatpush1.msra.mxu0 0.0
    %2001 = vmatprep.subr.mxu0 0.0
    %2002 = vmatpush1.msra.mxu0 0.0
    %2003 = vmatprep.subr.mxu0 0.0
    %2004 = vmatpush1.msra.mxu0 0.0
    %2005 = vmatprep.subr.mxu0 0.0
    %2006 = vmatpush1.msra.mxu0 0.0
    %2007 = vmatprep.subr.mxu0 0.0
    %2008 = vmatpush1.msra.mxu0 0.0
    %2009 = vmatprep.subr.mxu0 0.0
    %2010 = vmatpush1.msra.mxu0 0.0
    %2011 = vmatprep.subr.mxu0 0.0
    %2012 = vmatpush1.msra.mxu0 0.0
    %2013 = vmatprep.subr.mxu0 0.0
    %2014 = vmatpush1.msra.mxu0 0.0
    %2015 = vmatprep.mubr.f32.mxu0 0.0
    %2016 = vmatmul.mubr.f32.gmra.mrb[0].mxu0 %v1946
    %v2017 = vpop.f32.mrb[0].mxu0
    %v2018 = vadd.f32 %v1944, %v2017
    %v2019 = vpop.f32.mrb[0].mxu0
    %2020 = vmatprep.mubr.f32.mxu0 0.0
    %2021 = vmatmul.mubr.f32.gmra.mrb[0].mxu0 %v1949
    %v2022 = vpop.f32.mrb[0].mxu0
    %v2023 = vadd.f32 %v1944, %v2022
    %v2024 = vpop.f32.mrb[0].mxu0
    %2025 = vdwg.mxu0
    %v2026 = vmax.f32 %v2018, 0.0
    %v2027 = vmax.f32 %v2023, 0.0
    %v2028 = vld [vmem:[%s4] sm:$0xff]
    %v2029 = vld [vmem:[%s4 + $0x8] sm:$0xff]
    %v2030 = vld [vmem:[%s4 + $0x10] sm:$0xff]
    %v2031 = vld [vmem:[%s4 + $0x18] sm:$0xff]
    %v2032 = vld [vmem:[%s4 + $0x20] sm:$0xff]
    %v2033 = vld [vmem:[%s4 + $0x28] sm:$0xff]
    %v2034 = vld [vmem:[%s4 + $0x30] sm:$0xff]
    %v2035 = vld [vmem:[%s4 + $0x38] sm:$0xff]
    %v2036 = vld [vmem:[%s6 + $0x7] ss:$0 sm:$0xff]
    %vm2037 = vcmask 523264
    %v2039 = vsel %vm2037, %v2026, 0
    %v2042 = vsel %vm2037, %v2027, 0
    %2044 = vmatprep.subr.mxu0 0.0
    %2045 = vmatpush1.msra.mxu0 %v2028
    %2046 = vmatprep.subr.mxu0 0.0
    %2047 = vmatpush1.msra.mxu0 %v2029
    %2048 = vmatprep.subr.mxu0 0.0
    %2049 = vmatpush1.msra.mxu0 %v2030
    %2050 = vmatprep.subr.mxu0 0.0
    %2051 = vmatpush1.msra.mxu0 %v2031
    %2052 = vmatprep.subr.mxu0 0.0
    %2053 = vmatpush1.msra.mxu0 %v2032
    %2054 = vmatprep.subr.mxu0 0.0
    %2055 = vmatpush1.msra.mxu0 %v2033
    %2056 = vmatprep.subr.mxu0 0.0
    %2057 = vmatpush1.msra.mxu0 %v2034
    %2058 = vmatprep.subr.mxu0 0.0
    %2059 = vmatpush1.msra.mxu0 %v2035
    %2060 = vmatprep.subr.mxu0 0.0
    %2061 = vmatpush1.msra.mxu0 0.0
    %2062 = vmatprep.subr.mxu0 0.0
    %2063 = vmatpush1.msra.mxu0 0.0
    %2064 = vmatprep.subr.mxu0 0.0
    %2065 = vmatpush1.msra.mxu0 0.0
    %2066 = vmatprep.subr.mxu0 0.0
    %2067 = vmatpush1.msra.mxu0 0.0
    %2068 = vmatprep.subr.mxu0 0.0
    %2069 = vmatpush1.msra.mxu0 0.0
    %2070 = vmatprep.subr.mxu0 0.0
    %2071 = vmatpush1.msra.mxu0 0.0
    %2072 = vmatprep.subr.mxu0 0.0
    %2073 = vmatpush1.msra.mxu0 0.0
    %2074 = vmatprep.subr.mxu0 0.0
    %2075 = vmatpush1.msra.mxu0 0.0
    %2076 = vmatprep.subr.mxu0 0.0
    %2077 = vmatpush1.msra.mxu0 0.0
    %2078 = vmatprep.subr.mxu0 0.0
    %2079 = vmatpush1.msra.mxu0 0.0
    %2080 = vmatprep.subr.mxu0 0.0
    %2081 = vmatpush1.msra.mxu0 0.0
    %2082 = vmatprep.subr.mxu0 0.0
    %2083 = vmatpush1.msra.mxu0 0.0
    %2084 = vmatprep.subr.mxu0 0.0
    %2085 = vmatpush1.msra.mxu0 0.0
    %2086 = vmatprep.subr.mxu0 0.0
    %2087 = vmatpush1.msra.mxu0 0.0
    %2088 = vmatprep.subr.mxu0 0.0
    %2089 = vmatpush1.msra.mxu0 0.0
    %2090 = vmatprep.subr.mxu0 0.0
    %2091 = vmatpush1.msra.mxu0 0.0
    %2092 = vmatprep.subr.mxu0 0.0
    %2093 = vmatpush1.msra.mxu0 0.0
    %2094 = vmatprep.subr.mxu0 0.0
    %2095 = vmatpush1.msra.mxu0 0.0
    %2096 = vmatprep.subr.mxu0 0.0
    %2097 = vmatpush1.msra.mxu0 0.0
    %2098 = vmatprep.subr.mxu0 0.0
    %2099 = vmatpush1.msra.mxu0 0.0
    %2100 = vmatprep.subr.mxu0 0.0
    %2101 = vmatpush1.msra.mxu0 0.0
    %2102 = vmatprep.subr.mxu0 0.0
    %2103 = vmatpush1.msra.mxu0 0.0
    %2104 = vmatprep.subr.mxu0 0.0
    %2105 = vmatpush1.msra.mxu0 0.0
    %2106 = vmatprep.subr.mxu0 0.0
    %2107 = vmatpush1.msra.mxu0 0.0
    %2108 = vmatprep.mubr.f32.mxu0 0.0
    %2109 = vmatmul.mubr.f32.gmra.mrb[0].mxu0 %v2039
    %v2110 = vpop.f32.mrb[0].mxu0
    %v2111 = vadd.f32 %v2036, %v2110
    %v2112 = vpop.f32.mrb[0].mxu0
    %2113 = vmatprep.mubr.f32.mxu0 0.0
    %2114 = vmatmul.mubr.f32.gmra.mrb[0].mxu0 %v2042
    %v2115 = vpop.f32.mrb[0].mxu0
    %v2116 = vadd.f32 %v2036, %v2115
    %v2117 = vpop.f32.mrb[0].mxu0
    %2118 = vdwg.mxu0
    %v2119 = vadd.f32 %v1892, %v2111
    %v2120 = vadd.f32 %v1893, %v2116
    %v2121 = vld [vmem:[%s6 + $0x10] ss:$0 sm:$0xff]
    %v2122 = vld [vmem:[%s6 + $0x11] ss:$0 sm:$0xff]
    %v2123 = vsel %vm64, %v2119, 0.0
    %2124 = vadd.xlane.f32.xlu0 %v2123
    %v2125 = vpop.xlane.xlu0 %2124
    %v2126 = vsel %vm64, %v2120, 0.0
    %2127 = vadd.xlane.f32.xlu0 %v2126
    %v2128 = vpop.xlane.xlu0 %2127
    %v2129 = vmul.f32 %v2125, %v71
    %v2130 = vmul.f32 %v2128, %v71
    %v2131 = vsub.f32 %v2119, %v2129
    %v2132 = vsub.f32 %v2120, %v2130
    %v2133 = vmul.f32 %v2131, %v2131
    %v2134 = vmul.f32 %v2132, %v2132
    %v2135 = vsel %vm64, %v2133, 0.0
    %2136 = vadd.xlane.f32.xlu0 %v2135
    %v2137 = vpop.xlane.xlu0 %2136
    %v2138 = vsel %vm64, %v2134, 0.0
    %2139 = vadd.xlane.f32.xlu0 %v2138
    %v2140 = vpop.xlane.xlu0 %2139
    %v2141 = vmul.f32 %v2137, %v71
    %v2142 = vmul.f32 %v2140, %v71
    %v2143 = vadd.f32 %v2141, 1e-05
    %v2144 = vadd.f32 %v2142, 1e-05
    %v2145 = vrsqrt.pop %v2143
    %v2146 = vmul.f32 %v2143, %v2145
    %vm2147 = vcmp.eq.f32.partialorder %v2143, inf
    %v2148 = vsel %vm2147, %v2143, %v2146
    %vm2149 = vcmp.eq.f32.partialorder %v2143, 0.0
    %v2150 = vand.u32 %v2143, 2147483648
    %v2151 = vsel %vm2149, %v2150, %v2148
    %v2152 = vrsqrt.pop %v2144
    %v2153 = vmul.f32 %v2144, %v2152
    %vm2154 = vcmp.eq.f32.partialorder %v2144, inf
    %v2155 = vsel %vm2154, %v2144, %v2153
    %vm2156 = vcmp.eq.f32.partialorder %v2144, 0.0
    %v2157 = vand.u32 %v2144, 2147483648
    %v2158 = vsel %vm2156, %v2157, %v2155
    %v2159 = vrcp.pop %v2151
    %v2160 = vmul.f32 %v2131, %v2159
    %v2161 = vrcp.pop %v2158
    %v2162 = vmul.f32 %v2132, %v2161
    %v2163 = vmul.f32 %v2160, %v2121
    %v2164 = vmul.f32 %v2162, %v2121
    %v2165 = vadd.f32 %v2163, %v2122
    %v2166 = vadd.f32 %v2164, %v2122
    %s2167 = scalar_lea.vmem %s1, 64
    %v2168 = vld [vmem:[%s2167] sm:$0xff]
    %v2169 = vld [vmem:[%s2167 + $0x8] sm:$0xff]
    %v2170 = vld [vmem:[%s2167 + $0x10] sm:$0xff]
    %v2171 = vld [vmem:[%s2167 + $0x18] sm:$0xff]
    %v2172 = vld [vmem:[%s2167 + $0x20] sm:$0xff]
    %v2173 = vld [vmem:[%s2167 + $0x28] sm:$0xff]
    %v2174 = vld [vmem:[%s2167 + $0x30] sm:$0xff]
    %v2175 = vld [vmem:[%s2167 + $0x38] sm:$0xff]
    %s2176 = scalar_lea.vmem %s6, 20
    %v2177 = vld [vmem:[%s2176] ss:$8 sm:$0x3]
    %v2179 = vlaneseq
    %v2180 = vshrl.u32 %v2179, 7
    %v2181 = vsub.s32 0, %v2180
    %v2182 = vrot.slane %v2177, %v2181
    %v2183 = vlaneseq
    %v2184 = vshrl.u32 %v2183, 7
    %v2185 = vsub.s32 1, %v2184
    %v2186 = vrot.slane %v2177, %v2185
    %v2190 = vsel %vm64, %v2165, 0
    %v2193 = vsel %vm64, %v2166, 0
    %2195 = vmatprep.subr.mxu0 %v2169
    %2196 = vmatpush1.msra.mxu0 %v2168
    %2197 = vmatprep.subr.mxu0 %v2171
    %2198 = vmatpush1.msra.mxu0 %v2170
    %2199 = vmatprep.subr.mxu0 %v2173
    %2200 = vmatpush1.msra.mxu0 %v2172
    %2201 = vmatprep.subr.mxu0 %v2175
    %2202 = vmatpush1.msra.mxu0 %v2174
    %2203 = vmatprep.subr.mxu0 0.0
    %2204 = vmatpush1.msra.mxu0 0.0
    %2205 = vmatprep.subr.mxu0 0.0
    %2206 = vmatpush1.msra.mxu0 0.0
    %2207 = vmatprep.subr.mxu0 0.0
    %2208 = vmatpush1.msra.mxu0 0.0
    %2209 = vmatprep.subr.mxu0 0.0
    %2210 = vmatpush1.msra.mxu0 0.0
    %2211 = vmatprep.subr.mxu0 0.0
    %2212 = vmatpush1.msra.mxu0 0.0
    %2213 = vmatprep.subr.mxu0 0.0
    %2214 = vmatpush1.msra.mxu0 0.0
    %2215 = vmatprep.subr.mxu0 0.0
    %2216 = vmatpush1.msra.mxu0 0.0
    %2217 = vmatprep.subr.mxu0 0.0
    %2218 = vmatpush1.msra.mxu0 0.0
    %2219 = vmatprep.subr.mxu0 0.0
    %2220 = vmatpush1.msra.mxu0 0.0
    %2221 = vmatprep.subr.mxu0 0.0
    %2222 = vmatpush1.msra.mxu0 0.0
    %2223 = vmatprep.subr.mxu0 0.0
    %2224 = vmatpush1.msra.mxu0 0.0
    %2225 = vmatprep.subr.mxu0 0.0
    %2226 = vmatpush1.msra.mxu0 0.0
    %2227 = vmatprep.subr.mxu0 0.0
    %2228 = vmatpush1.msra.mxu0 0.0
    %2229 = vmatprep.subr.mxu0 0.0
    %2230 = vmatpush1.msra.mxu0 0.0
    %2231 = vmatprep.subr.mxu0 0.0
    %2232 = vmatpush1.msra.mxu0 0.0
    %2233 = vmatprep.subr.mxu0 0.0
    %2234 = vmatpush1.msra.mxu0 0.0
    %2235 = vmatprep.subr.mxu0 0.0
    %2236 = vmatpush1.msra.mxu0 0.0
    %2237 = vmatprep.subr.mxu0 0.0
    %2238 = vmatpush1.msra.mxu0 0.0
    %2239 = vmatprep.subr.mxu0 0.0
    %2240 = vmatpush1.msra.mxu0 0.0
    %2241 = vmatprep.subr.mxu0 0.0
    %2242 = vmatpush1.msra.mxu0 0.0
    %2243 = vmatprep.subr.mxu0 0.0
    %2244 = vmatpush1.msra.mxu0 0.0
    %2245 = vmatprep.subr.mxu0 0.0
    %2246 = vmatpush1.msra.mxu0 0.0
    %2247 = vmatprep.subr.mxu0 0.0
    %2248 = vmatpush1.msra.mxu0 0.0
    %2249 = vmatprep.subr.mxu0 0.0
    %2250 = vmatpush1.msra.mxu0 0.0
    %2251 = vmatprep.subr.mxu0 0.0
    %2252 = vmatpush1.msra.mxu0 0.0
    %2253 = vmatprep.subr.mxu0 0.0
    %2254 = vmatpush1.msra.mxu0 0.0
    %2255 = vmatprep.subr.mxu0 0.0
    %2256 = vmatpush1.msra.mxu0 0.0
    %2257 = vmatprep.subr.mxu0 0.0
    %2258 = vmatpush1.msra.mxu0 0.0
    %2259 = vmatprep.mubr.f32.mxu0 0.0
    %2260 = vmatmul.mubr.f32.gmra.mrb[0].mxu0 %v2190
    %v2261 = vpop.f32.mrb[0].mxu0
    %v2262 = vadd.f32 %v2182, %v2261
    %v2263 = vpop.f32.mrb[0].mxu0
    %v2264 = vadd.f32 %v2186, %v2263
    %2265 = vmatprep.mubr.f32.mxu0 0.0
    %2266 = vmatmul.mubr.f32.gmra.mrb[0].mxu0 %v2193
    %v2267 = vpop.f32.mrb[0].mxu0
    %v2268 = vadd.f32 %v2182, %v2267
    %v2269 = vpop.f32.mrb[0].mxu0
    %v2270 = vadd.f32 %v2186, %v2269
    %2271 = vdwg.mxu0
    %2274 = vrot.lane.b32.xlu0 %v2262, 112
    %v2275 = vpop.permute.xlu0 %2274
    %2276 = vrot.lane.b32.xlu0 %v2268, 112
    %v2277 = vpop.permute.xlu0 %2276
    %2278 = vrot.lane.b32.xlu0 %v2262, 96
    %v2279 = vpop.permute.xlu0 %2278
    %2280 = vrot.lane.b32.xlu0 %v2268, 96
    %v2281 = vpop.permute.xlu0 %2280
    %2282 = vrot.lane.b32.xlu0 %v2262, 80
    %v2283 = vpop.permute.xlu0 %2282
    %2284 = vrot.lane.b32.xlu0 %v2268, 80
    %v2285 = vpop.permute.xlu0 %2284
    %2288 = vrot.lane.b32.xlu0 %v2264, 112
    %v2289 = vpop.permute.xlu0 %2288
    %2290 = vrot.lane.b32.xlu0 %v2270, 112
    %v2291 = vpop.permute.xlu0 %2290
    %2294 = vrot.lane.b32.xlu0 %v2264, 96
    %v2295 = vpop.permute.xlu0 %2294
    %2296 = vrot.lane.b32.xlu0 %v2270, 96
    %v2297 = vpop.permute.xlu0 %2296
    %2300 = vrot.lane.b32.xlu0 %v2264, 80
    %v2301 = vpop.permute.xlu0 %2300
    %2302 = vrot.lane.b32.xlu0 %v2270, 80
    %v2303 = vpop.permute.xlu0 %2302
    %2306 = vrot.lane.b32.xlu0 %v2262, 64
    %v2307 = vpop.permute.xlu0 %2306
    %v2308 = vsel %vm250, %v2262, 0
    %v2310 = vsel %vm250, %v2307, 0
    %2312 = vmatprep.subr.mxu0 0.0
    %2313 = vmatpush1.xpose.msra.mxu0 %v2310
    %2314 = vmatprep.subr.mxu0 0.0
    %2315 = vmatpush1.xpose.msra.mxu0 0.0
    %2316 = vmatprep.subr.mxu0 0.0
    %2317 = vmatpush1.xpose.msra.mxu0 0.0
    %2318 = vmatprep.subr.mxu0 0.0
    %2319 = vmatpush1.xpose.msra.mxu0 0.0
    %2320 = vmatprep.subr.mxu0 0.0
    %2321 = vmatpush1.xpose.msra.mxu0 0.0
    %2322 = vmatprep.subr.mxu0 0.0
    %2323 = vmatpush1.xpose.msra.mxu0 0.0
    %2324 = vmatprep.subr.mxu0 0.0
    %2325 = vmatpush1.xpose.msra.mxu0 0.0
    %2326 = vmatprep.subr.mxu0 0.0
    %2327 = vmatpush1.xpose.msra.mxu0 0.0
    %2328 = vmatprep.subr.mxu0 0.0
    %2329 = vmatpush1.xpose.msra.mxu0 0.0
    %2330 = vmatprep.subr.mxu0 0.0
    %2331 = vmatpush1.xpose.msra.mxu0 0.0
    %2332 = vmatprep.subr.mxu0 0.0
    %2333 = vmatpush1.xpose.msra.mxu0 0.0
    %2334 = vmatprep.subr.mxu0 0.0
    %2335 = vmatpush1.xpose.msra.mxu0 0.0
    %2336 = vmatprep.subr.mxu0 0.0
    %2337 = vmatpush1.xpose.msra.mxu0 0.0
    %2338 = vmatprep.subr.mxu0 0.0
    %2339 = vmatpush1.xpose.msra.mxu0 0.0
    %2340 = vmatprep.subr.mxu0 0.0
    %2341 = vmatpush1.xpose.msra.mxu0 0.0
    %2342 = vmatprep.subr.mxu0 0.0
    %2343 = vmatpush1.xpose.msra.mxu0 0.0
    %2344 = vmatprep.subr.mxu0 0.0
    %2345 = vmatpush1.xpose.msra.mxu0 0.0
    %2346 = vmatprep.subr.mxu0 0.0
    %2347 = vmatpush1.xpose.msra.mxu0 0.0
    %2348 = vmatprep.subr.mxu0 0.0
    %2349 = vmatpush1.xpose.msra.mxu0 0.0
    %2350 = vmatprep.subr.mxu0 0.0
    %2351 = vmatpush1.xpose.msra.mxu0 0.0
    %2352 = vmatprep.subr.mxu0 0.0
    %2353 = vmatpush1.xpose.msra.mxu0 0.0
    %2354 = vmatprep.subr.mxu0 0.0
    %2355 = vmatpush1.xpose.msra.mxu0 0.0
    %2356 = vmatprep.subr.mxu0 0.0
    %2357 = vmatpush1.xpose.msra.mxu0 0.0
    %2358 = vmatprep.subr.mxu0 0.0
    %2359 = vmatpush1.xpose.msra.mxu0 0.0
    %2360 = vmatprep.subr.mxu0 0.0
    %2361 = vmatpush1.xpose.msra.mxu0 0.0
    %2362 = vmatprep.subr.mxu0 0.0
    %2363 = vmatpush1.xpose.msra.mxu0 0.0
    %2364 = vmatprep.subr.mxu0 0.0
    %2365 = vmatpush1.xpose.msra.mxu0 0.0
    %2366 = vmatprep.subr.mxu0 0.0
    %2367 = vmatpush1.xpose.msra.mxu0 0.0
    %2368 = vmatprep.subr.mxu0 0.0
    %2369 = vmatpush1.xpose.msra.mxu0 0.0
    %2370 = vmatprep.subr.mxu0 0.0
    %2371 = vmatpush1.xpose.msra.mxu0 0.0
    %2372 = vmatprep.subr.mxu0 0.0
    %2373 = vmatpush1.xpose.msra.mxu0 0.0
    %2374 = vmatprep.subr.mxu0 0.0
    %2375 = vmatpush1.xpose.msra.mxu0 0.0
    %2376 = vmatprep.mubr.f32.mxu0 0.0
    %2377 = vmatmul.mubr.f32.gmra.mrb[0].mxu0 %v2308
    %v2378 = vpop.f32.mrb[0].mxu0
    %v2379 = vadd.f32 0.0, %v2378
    %v2380 = vpop.f32.mrb[0].mxu0
    %2381 = vdwg.mxu0
    %2382 = vrot.lane.b32.xlu0 %v2268, 64
    %v2383 = vpop.permute.xlu0 %2382
    %v2384 = vsel %vm250, %v2268, 0
    %v2386 = vsel %vm250, %v2383, 0
    %2388 = vmatprep.subr.mxu0 0.0
    %2389 = vmatpush1.xpose.msra.mxu0 %v2386
    %2390 = vmatprep.subr.mxu0 0.0
    %2391 = vmatpush1.xpose.msra.mxu0 0.0
    %2392 = vmatprep.subr.mxu0 0.0
    %2393 = vmatpush1.xpose.msra.mxu0 0.0
    %2394 = vmatprep.subr.mxu0 0.0
    %2395 = vmatpush1.xpose.msra.mxu0 0.0
    %2396 = vmatprep.subr.mxu0 0.0
    %2397 = vmatpush1.xpose.msra.mxu0 0.0
    %2398 = vmatprep.subr.mxu0 0.0
    %2399 = vmatpush1.xpose.msra.mxu0 0.0
    %2400 = vmatprep.subr.mxu0 0.0
    %2401 = vmatpush1.xpose.msra.mxu0 0.0
    %2402 = vmatprep.subr.mxu0 0.0
    %2403 = vmatpush1.xpose.msra.mxu0 0.0
    %2404 = vmatprep.subr.mxu0 0.0
    %2405 = vmatpush1.xpose.msra.mxu0 0.0
    %2406 = vmatprep.subr.mxu0 0.0
    %2407 = vmatpush1.xpose.msra.mxu0 0.0
    %2408 = vmatprep.subr.mxu0 0.0
    %2409 = vmatpush1.xpose.msra.mxu0 0.0
    %2410 = vmatprep.subr.mxu0 0.0
    %2411 = vmatpush1.xpose.msra.mxu0 0.0
    %2412 = vmatprep.subr.mxu0 0.0
    %2413 = vmatpush1.xpose.msra.mxu0 0.0
    %2414 = vmatprep.subr.mxu0 0.0
    %2415 = vmatpush1.xpose.msra.mxu0 0.0
    %2416 = vmatprep.subr.mxu0 0.0
    %2417 = vmatpush1.xpose.msra.mxu0 0.0
    %2418 = vmatprep.subr.mxu0 0.0
    %2419 = vmatpush1.xpose.msra.mxu0 0.0
    %2420 = vmatprep.subr.mxu0 0.0
    %2421 = vmatpush1.xpose.msra.mxu0 0.0
    %2422 = vmatprep.subr.mxu0 0.0
    %2423 = vmatpush1.xpose.msra.mxu0 0.0
    %2424 = vmatprep.subr.mxu0 0.0
    %2425 = vmatpush1.xpose.msra.mxu0 0.0
    %2426 = vmatprep.subr.mxu0 0.0
    %2427 = vmatpush1.xpose.msra.mxu0 0.0
    %2428 = vmatprep.subr.mxu0 0.0
    %2429 = vmatpush1.xpose.msra.mxu0 0.0
    %2430 = vmatprep.subr.mxu0 0.0
    %2431 = vmatpush1.xpose.msra.mxu0 0.0
    %2432 = vmatprep.subr.mxu0 0.0
    %2433 = vmatpush1.xpose.msra.mxu0 0.0
    %2434 = vmatprep.subr.mxu0 0.0
    %2435 = vmatpush1.xpose.msra.mxu0 0.0
    %2436 = vmatprep.subr.mxu0 0.0
    %2437 = vmatpush1.xpose.msra.mxu0 0.0
    %2438 = vmatprep.subr.mxu0 0.0
    %2439 = vmatpush1.xpose.msra.mxu0 0.0
    %2440 = vmatprep.subr.mxu0 0.0
    %2441 = vmatpush1.xpose.msra.mxu0 0.0
    %2442 = vmatprep.subr.mxu0 0.0
    %2443 = vmatpush1.xpose.msra.mxu0 0.0
    %2444 = vmatprep.subr.mxu0 0.0
    %2445 = vmatpush1.xpose.msra.mxu0 0.0
    %2446 = vmatprep.subr.mxu0 0.0
    %2447 = vmatpush1.xpose.msra.mxu0 0.0
    %2448 = vmatprep.subr.mxu0 0.0
    %2449 = vmatpush1.xpose.msra.mxu0 0.0
    %2450 = vmatprep.subr.mxu0 0.0
    %2451 = vmatpush1.xpose.msra.mxu0 0.0
    %2452 = vmatprep.mubr.f32.mxu0 0.0
    %2453 = vmatmul.mubr.f32.gmra.mrb[0].mxu0 %v2384
    %v2454 = vpop.f32.mrb[0].mxu0
    %v2455 = vadd.f32 0.0, %v2454
    %v2456 = vpop.f32.mrb[0].mxu0
    %2457 = vdwg.mxu0
    %2458 = vrot.lane.b32.xlu0 %v2275, 64
    %v2459 = vpop.permute.xlu0 %2458
    %v2460 = vsel %vm250, %v2275, 0
    %v2462 = vsel %vm250, %v2459, 0
    %2464 = vmatprep.subr.mxu0 0.0
    %2465 = vmatpush1.xpose.msra.mxu0 %v2462
    %2466 = vmatprep.subr.mxu0 0.0
    %2467 = vmatpush1.xpose.msra.mxu0 0.0
    %2468 = vmatprep.subr.mxu0 0.0
    %2469 = vmatpush1.xpose.msra.mxu0 0.0
    %2470 = vmatprep.subr.mxu0 0.0
    %2471 = vmatpush1.xpose.msra.mxu0 0.0
    %2472 = vmatprep.subr.mxu0 0.0
    %2473 = vmatpush1.xpose.msra.mxu0 0.0
    %2474 = vmatprep.subr.mxu0 0.0
    %2475 = vmatpush1.xpose.msra.mxu0 0.0
    %2476 = vmatprep.subr.mxu0 0.0
    %2477 = vmatpush1.xpose.msra.mxu0 0.0
    %2478 = vmatprep.subr.mxu0 0.0
    %2479 = vmatpush1.xpose.msra.mxu0 0.0
    %2480 = vmatprep.subr.mxu0 0.0
    %2481 = vmatpush1.xpose.msra.mxu0 0.0
    %2482 = vmatprep.subr.mxu0 0.0
    %2483 = vmatpush1.xpose.msra.mxu0 0.0
    %2484 = vmatprep.subr.mxu0 0.0
    %2485 = vmatpush1.xpose.msra.mxu0 0.0
    %2486 = vmatprep.subr.mxu0 0.0
    %2487 = vmatpush1.xpose.msra.mxu0 0.0
    %2488 = vmatprep.subr.mxu0 0.0
    %2489 = vmatpush1.xpose.msra.mxu0 0.0
    %2490 = vmatprep.subr.mxu0 0.0
    %2491 = vmatpush1.xpose.msra.mxu0 0.0
    %2492 = vmatprep.subr.mxu0 0.0
    %2493 = vmatpush1.xpose.msra.mxu0 0.0
    %2494 = vmatprep.subr.mxu0 0.0
    %2495 = vmatpush1.xpose.msra.mxu0 0.0
    %2496 = vmatprep.subr.mxu0 0.0
    %2497 = vmatpush1.xpose.msra.mxu0 0.0
    %2498 = vmatprep.subr.mxu0 0.0
    %2499 = vmatpush1.xpose.msra.mxu0 0.0
    %2500 = vmatprep.subr.mxu0 0.0
    %2501 = vmatpush1.xpose.msra.mxu0 0.0
    %2502 = vmatprep.subr.mxu0 0.0
    %2503 = vmatpush1.xpose.msra.mxu0 0.0
    %2504 = vmatprep.subr.mxu0 0.0
    %2505 = vmatpush1.xpose.msra.mxu0 0.0
    %2506 = vmatprep.subr.mxu0 0.0
    %2507 = vmatpush1.xpose.msra.mxu0 0.0
    %2508 = vmatprep.subr.mxu0 0.0
    %2509 = vmatpush1.xpose.msra.mxu0 0.0
    %2510 = vmatprep.subr.mxu0 0.0
    %2511 = vmatpush1.xpose.msra.mxu0 0.0
    %2512 = vmatprep.subr.mxu0 0.0
    %2513 = vmatpush1.xpose.msra.mxu0 0.0
    %2514 = vmatprep.subr.mxu0 0.0
    %2515 = vmatpush1.xpose.msra.mxu0 0.0
    %2516 = vmatprep.subr.mxu0 0.0
    %2517 = vmatpush1.xpose.msra.mxu0 0.0
    %2518 = vmatprep.subr.mxu0 0.0
    %2519 = vmatpush1.xpose.msra.mxu0 0.0
    %2520 = vmatprep.subr.mxu0 0.0
    %2521 = vmatpush1.xpose.msra.mxu0 0.0
    %2522 = vmatprep.subr.mxu0 0.0
    %2523 = vmatpush1.xpose.msra.mxu0 0.0
    %2524 = vmatprep.subr.mxu0 0.0
    %2525 = vmatpush1.xpose.msra.mxu0 0.0
    %2526 = vmatprep.subr.mxu0 0.0
    %2527 = vmatpush1.xpose.msra.mxu0 0.0
    %2528 = vmatprep.mubr.f32.mxu0 0.0
    %2529 = vmatmul.mubr.f32.gmra.mrb[0].mxu0 %v2460
    %v2530 = vpop.f32.mrb[0].mxu0
    %v2531 = vadd.f32 0.0, %v2530
    %v2532 = vpop.f32.mrb[0].mxu0
    %2533 = vdwg.mxu0
    %2534 = vrot.lane.b32.xlu0 %v2277, 64
    %v2535 = vpop.permute.xlu0 %2534
    %v2536 = vsel %vm250, %v2277, 0
    %v2538 = vsel %vm250, %v2535, 0
    %2540 = vmatprep.subr.mxu0 0.0
    %2541 = vmatpush1.xpose.msra.mxu0 %v2538
    %2542 = vmatprep.subr.mxu0 0.0
    %2543 = vmatpush1.xpose.msra.mxu0 0.0
    %2544 = vmatprep.subr.mxu0 0.0
    %2545 = vmatpush1.xpose.msra.mxu0 0.0
    %2546 = vmatprep.subr.mxu0 0.0
    %2547 = vmatpush1.xpose.msra.mxu0 0.0
    %2548 = vmatprep.subr.mxu0 0.0
    %2549 = vmatpush1.xpose.msra.mxu0 0.0
    %2550 = vmatprep.subr.mxu0 0.0
    %2551 = vmatpush1.xpose.msra.mxu0 0.0
    %2552 = vmatprep.subr.mxu0 0.0
    %2553 = vmatpush1.xpose.msra.mxu0 0.0
    %2554 = vmatprep.subr.mxu0 0.0
    %2555 = vmatpush1.xpose.msra.mxu0 0.0
    %2556 = vmatprep.subr.mxu0 0.0
    %2557 = vmatpush1.xpose.msra.mxu0 0.0
    %2558 = vmatprep.subr.mxu0 0.0
    %2559 = vmatpush1.xpose.msra.mxu0 0.0
    %2560 = vmatprep.subr.mxu0 0.0
    %2561 = vmatpush1.xpose.msra.mxu0 0.0
    %2562 = vmatprep.subr.mxu0 0.0
    %2563 = vmatpush1.xpose.msra.mxu0 0.0
    %2564 = vmatprep.subr.mxu0 0.0
    %2565 = vmatpush1.xpose.msra.mxu0 0.0
    %2566 = vmatprep.subr.mxu0 0.0
    %2567 = vmatpush1.xpose.msra.mxu0 0.0
    %2568 = vmatprep.subr.mxu0 0.0
    %2569 = vmatpush1.xpose.msra.mxu0 0.0
    %2570 = vmatprep.subr.mxu0 0.0
    %2571 = vmatpush1.xpose.msra.mxu0 0.0
    %2572 = vmatprep.subr.mxu0 0.0
    %2573 = vmatpush1.xpose.msra.mxu0 0.0
    %2574 = vmatprep.subr.mxu0 0.0
    %2575 = vmatpush1.xpose.msra.mxu0 0.0
    %2576 = vmatprep.subr.mxu0 0.0
    %2577 = vmatpush1.xpose.msra.mxu0 0.0
    %2578 = vmatprep.subr.mxu0 0.0
    %2579 = vmatpush1.xpose.msra.mxu0 0.0
    %2580 = vmatprep.subr.mxu0 0.0
    %2581 = vmatpush1.xpose.msra.mxu0 0.0
    %2582 = vmatprep.subr.mxu0 0.0
    %2583 = vmatpush1.xpose.msra.mxu0 0.0
    %2584 = vmatprep.subr.mxu0 0.0
    %2585 = vmatpush1.xpose.msra.mxu0 0.0
    %2586 = vmatprep.subr.mxu0 0.0
    %2587 = vmatpush1.xpose.msra.mxu0 0.0
    %2588 = vmatprep.subr.mxu0 0.0
    %2589 = vmatpush1.xpose.msra.mxu0 0.0
    %2590 = vmatprep.subr.mxu0 0.0
    %2591 = vmatpush1.xpose.msra.mxu0 0.0
    %2592 = vmatprep.subr.mxu0 0.0
    %2593 = vmatpush1.xpose.msra.mxu0 0.0
    %2594 = vmatprep.subr.mxu0 0.0
    %2595 = vmatpush1.xpose.msra.mxu0 0.0
    %2596 = vmatprep.subr.mxu0 0.0
    %2597 = vmatpush1.xpose.msra.mxu0 0.0
    %2598 = vmatprep.subr.mxu0 0.0
    %2599 = vmatpush1.xpose.msra.mxu0 0.0
    %2600 = vmatprep.subr.mxu0 0.0
    %2601 = vmatpush1.xpose.msra.mxu0 0.0
    %2602 = vmatprep.subr.mxu0 0.0
    %2603 = vmatpush1.xpose.msra.mxu0 0.0
    %2604 = vmatprep.mubr.f32.mxu0 0.0
    %2605 = vmatmul.mubr.f32.gmra.mrb[0].mxu0 %v2536
    %v2606 = vpop.f32.mrb[0].mxu0
    %v2607 = vadd.f32 0.0, %v2606
    %v2608 = vpop.f32.mrb[0].mxu0
    %2609 = vdwg.mxu0
    %2610 = vrot.lane.b32.xlu0 %v2279, 64
    %v2611 = vpop.permute.xlu0 %2610
    %v2612 = vsel %vm250, %v2279, 0
    %v2614 = vsel %vm250, %v2611, 0
    %2616 = vmatprep.subr.mxu0 0.0
    %2617 = vmatpush1.xpose.msra.mxu0 %v2614
    %2618 = vmatprep.subr.mxu0 0.0
    %2619 = vmatpush1.xpose.msra.mxu0 0.0
    %2620 = vmatprep.subr.mxu0 0.0
    %2621 = vmatpush1.xpose.msra.mxu0 0.0
    %2622 = vmatprep.subr.mxu0 0.0
    %2623 = vmatpush1.xpose.msra.mxu0 0.0
    %2624 = vmatprep.subr.mxu0 0.0
    %2625 = vmatpush1.xpose.msra.mxu0 0.0
    %2626 = vmatprep.subr.mxu0 0.0
    %2627 = vmatpush1.xpose.msra.mxu0 0.0
    %2628 = vmatprep.subr.mxu0 0.0
    %2629 = vmatpush1.xpose.msra.mxu0 0.0
    %2630 = vmatprep.subr.mxu0 0.0
    %2631 = vmatpush1.xpose.msra.mxu0 0.0
    %2632 = vmatprep.subr.mxu0 0.0
    %2633 = vmatpush1.xpose.msra.mxu0 0.0
    %2634 = vmatprep.subr.mxu0 0.0
    %2635 = vmatpush1.xpose.msra.mxu0 0.0
    %2636 = vmatprep.subr.mxu0 0.0
    %2637 = vmatpush1.xpose.msra.mxu0 0.0
    %2638 = vmatprep.subr.mxu0 0.0
    %2639 = vmatpush1.xpose.msra.mxu0 0.0
    %2640 = vmatprep.subr.mxu0 0.0
    %2641 = vmatpush1.xpose.msra.mxu0 0.0
    %2642 = vmatprep.subr.mxu0 0.0
    %2643 = vmatpush1.xpose.msra.mxu0 0.0
    %2644 = vmatprep.subr.mxu0 0.0
    %2645 = vmatpush1.xpose.msra.mxu0 0.0
    %2646 = vmatprep.subr.mxu0 0.0
    %2647 = vmatpush1.xpose.msra.mxu0 0.0
    %2648 = vmatprep.subr.mxu0 0.0
    %2649 = vmatpush1.xpose.msra.mxu0 0.0
    %2650 = vmatprep.subr.mxu0 0.0
    %2651 = vmatpush1.xpose.msra.mxu0 0.0
    %2652 = vmatprep.subr.mxu0 0.0
    %2653 = vmatpush1.xpose.msra.mxu0 0.0
    %2654 = vmatprep.subr.mxu0 0.0
    %2655 = vmatpush1.xpose.msra.mxu0 0.0
    %2656 = vmatprep.subr.mxu0 0.0
    %2657 = vmatpush1.xpose.msra.mxu0 0.0
    %2658 = vmatprep.subr.mxu0 0.0
    %2659 = vmatpush1.xpose.msra.mxu0 0.0
    %2660 = vmatprep.subr.mxu0 0.0
    %2661 = vmatpush1.xpose.msra.mxu0 0.0
    %2662 = vmatprep.subr.mxu0 0.0
    %2663 = vmatpush1.xpose.msra.mxu0 0.0
    %2664 = vmatprep.subr.mxu0 0.0
    %2665 = vmatpush1.xpose.msra.mxu0 0.0
    %2666 = vmatprep.subr.mxu0 0.0
    %2667 = vmatpush1.xpose.msra.mxu0 0.0
    %2668 = vmatprep.subr.mxu0 0.0
    %2669 = vmatpush1.xpose.msra.mxu0 0.0
    %2670 = vmatprep.subr.mxu0 0.0
    %2671 = vmatpush1.xpose.msra.mxu0 0.0
    %2672 = vmatprep.subr.mxu0 0.0
    %2673 = vmatpush1.xpose.msra.mxu0 0.0
    %2674 = vmatprep.subr.mxu0 0.0
    %2675 = vmatpush1.xpose.msra.mxu0 0.0
    %2676 = vmatprep.subr.mxu0 0.0
    %2677 = vmatpush1.xpose.msra.mxu0 0.0
    %2678 = vmatprep.subr.mxu0 0.0
    %2679 = vmatpush1.xpose.msra.mxu0 0.0
    %2680 = vmatprep.mubr.f32.mxu0 0.0
    %2681 = vmatmul.mubr.f32.gmra.mrb[0].mxu0 %v2612
    %v2682 = vpop.f32.mrb[0].mxu0
    %v2683 = vadd.f32 0.0, %v2682
    %v2684 = vpop.f32.mrb[0].mxu0
    %2685 = vdwg.mxu0
    %2686 = vrot.lane.b32.xlu0 %v2281, 64
    %v2687 = vpop.permute.xlu0 %2686
    %v2688 = vsel %vm250, %v2281, 0
    %v2690 = vsel %vm250, %v2687, 0
    %2692 = vmatprep.subr.mxu0 0.0
    %2693 = vmatpush1.xpose.msra.mxu0 %v2690
    %2694 = vmatprep.subr.mxu0 0.0
    %2695 = vmatpush1.xpose.msra.mxu0 0.0
    %2696 = vmatprep.subr.mxu0 0.0
    %2697 = vmatpush1.xpose.msra.mxu0 0.0
    %2698 = vmatprep.subr.mxu0 0.0
    %2699 = vmatpush1.xpose.msra.mxu0 0.0
    %2700 = vmatprep.subr.mxu0 0.0
    %2701 = vmatpush1.xpose.msra.mxu0 0.0
    %2702 = vmatprep.subr.mxu0 0.0
    %2703 = vmatpush1.xpose.msra.mxu0 0.0
    %2704 = vmatprep.subr.mxu0 0.0
    %2705 = vmatpush1.xpose.msra.mxu0 0.0
    %2706 = vmatprep.subr.mxu0 0.0
    %2707 = vmatpush1.xpose.msra.mxu0 0.0
    %2708 = vmatprep.subr.mxu0 0.0
    %2709 = vmatpush1.xpose.msra.mxu0 0.0
    %2710 = vmatprep.subr.mxu0 0.0
    %2711 = vmatpush1.xpose.msra.mxu0 0.0
    %2712 = vmatprep.subr.mxu0 0.0
    %2713 = vmatpush1.xpose.msra.mxu0 0.0
    %2714 = vmatprep.subr.mxu0 0.0
    %2715 = vmatpush1.xpose.msra.mxu0 0.0
    %2716 = vmatprep.subr.mxu0 0.0
    %2717 = vmatpush1.xpose.msra.mxu0 0.0
    %2718 = vmatprep.subr.mxu0 0.0
    %2719 = vmatpush1.xpose.msra.mxu0 0.0
    %2720 = vmatprep.subr.mxu0 0.0
    %2721 = vmatpush1.xpose.msra.mxu0 0.0
    %2722 = vmatprep.subr.mxu0 0.0
    %2723 = vmatpush1.xpose.msra.mxu0 0.0
    %2724 = vmatprep.subr.mxu0 0.0
    %2725 = vmatpush1.xpose.msra.mxu0 0.0
    %2726 = vmatprep.subr.mxu0 0.0
    %2727 = vmatpush1.xpose.msra.mxu0 0.0
    %2728 = vmatprep.subr.mxu0 0.0
    %2729 = vmatpush1.xpose.msra.mxu0 0.0
    %2730 = vmatprep.subr.mxu0 0.0
    %2731 = vmatpush1.xpose.msra.mxu0 0.0
    %2732 = vmatprep.subr.mxu0 0.0
    %2733 = vmatpush1.xpose.msra.mxu0 0.0
    %2734 = vmatprep.subr.mxu0 0.0
    %2735 = vmatpush1.xpose.msra.mxu0 0.0
    %2736 = vmatprep.subr.mxu0 0.0
    %2737 = vmatpush1.xpose.msra.mxu0 0.0
    %2738 = vmatprep.subr.mxu0 0.0
    %2739 = vmatpush1.xpose.msra.mxu0 0.0
    %2740 = vmatprep.subr.mxu0 0.0
    %2741 = vmatpush1.xpose.msra.mxu0 0.0
    %2742 = vmatprep.subr.mxu0 0.0
    %2743 = vmatpush1.xpose.msra.mxu0 0.0
    %2744 = vmatprep.subr.mxu0 0.0
    %2745 = vmatpush1.xpose.msra.mxu0 0.0
    %2746 = vmatprep.subr.mxu0 0.0
    %2747 = vmatpush1.xpose.msra.mxu0 0.0
    %2748 = vmatprep.subr.mxu0 0.0
    %2749 = vmatpush1.xpose.msra.mxu0 0.0
    %2750 = vmatprep.subr.mxu0 0.0
    %2751 = vmatpush1.xpose.msra.mxu0 0.0
    %2752 = vmatprep.subr.mxu0 0.0
    %2753 = vmatpush1.xpose.msra.mxu0 0.0
    %2754 = vmatprep.subr.mxu0 0.0
    %2755 = vmatpush1.xpose.msra.mxu0 0.0
    %2756 = vmatprep.mubr.f32.mxu0 0.0
    %2757 = vmatmul.mubr.f32.gmra.mrb[0].mxu0 %v2688
    %v2758 = vpop.f32.mrb[0].mxu0
    %v2759 = vadd.f32 0.0, %v2758
    %v2760 = vpop.f32.mrb[0].mxu0
    %2761 = vdwg.mxu0
    %2762 = vrot.lane.b32.xlu0 %v2283, 64
    %v2763 = vpop.permute.xlu0 %2762
    %v2764 = vsel %vm250, %v2283, 0
    %v2766 = vsel %vm250, %v2763, 0
    %2768 = vmatprep.subr.mxu0 0.0
    %2769 = vmatpush1.xpose.msra.mxu0 %v2766
    %2770 = vmatprep.subr.mxu0 0.0
    %2771 = vmatpush1.xpose.msra.mxu0 0.0
    %2772 = vmatprep.subr.mxu0 0.0
    %2773 = vmatpush1.xpose.msra.mxu0 0.0
    %2774 = vmatprep.subr.mxu0 0.0
    %2775 = vmatpush1.xpose.msra.mxu0 0.0
    %2776 = vmatprep.subr.mxu0 0.0
    %2777 = vmatpush1.xpose.msra.mxu0 0.0
    %2778 = vmatprep.subr.mxu0 0.0
    %2779 = vmatpush1.xpose.msra.mxu0 0.0
    %2780 = vmatprep.subr.mxu0 0.0
    %2781 = vmatpush1.xpose.msra.mxu0 0.0
    %2782 = vmatprep.subr.mxu0 0.0
    %2783 = vmatpush1.xpose.msra.mxu0 0.0
    %2784 = vmatprep.subr.mxu0 0.0
    %2785 = vmatpush1.xpose.msra.mxu0 0.0
    %2786 = vmatprep.subr.mxu0 0.0
    %2787 = vmatpush1.xpose.msra.mxu0 0.0
    %2788 = vmatprep.subr.mxu0 0.0
    %2789 = vmatpush1.xpose.msra.mxu0 0.0
    %2790 = vmatprep.subr.mxu0 0.0
    %2791 = vmatpush1.xpose.msra.mxu0 0.0
    %2792 = vmatprep.subr.mxu0 0.0
    %2793 = vmatpush1.xpose.msra.mxu0 0.0
    %2794 = vmatprep.subr.mxu0 0.0
    %2795 = vmatpush1.xpose.msra.mxu0 0.0
    %2796 = vmatprep.subr.mxu0 0.0
    %2797 = vmatpush1.xpose.msra.mxu0 0.0
    %2798 = vmatprep.subr.mxu0 0.0
    %2799 = vmatpush1.xpose.msra.mxu0 0.0
    %2800 = vmatprep.subr.mxu0 0.0
    %2801 = vmatpush1.xpose.msra.mxu0 0.0
    %2802 = vmatprep.subr.mxu0 0.0
    %2803 = vmatpush1.xpose.msra.mxu0 0.0
    %2804 = vmatprep.subr.mxu0 0.0
    %2805 = vmatpush1.xpose.msra.mxu0 0.0
    %2806 = vmatprep.subr.mxu0 0.0
    %2807 = vmatpush1.xpose.msra.mxu0 0.0
    %2808 = vmatprep.subr.mxu0 0.0
    %2809 = vmatpush1.xpose.msra.mxu0 0.0
    %2810 = vmatprep.subr.mxu0 0.0
    %2811 = vmatpush1.xpose.msra.mxu0 0.0
    %2812 = vmatprep.subr.mxu0 0.0
    %2813 = vmatpush1.xpose.msra.mxu0 0.0
    %2814 = vmatprep.subr.mxu0 0.0
    %2815 = vmatpush1.xpose.msra.mxu0 0.0
    %2816 = vmatprep.subr.mxu0 0.0
    %2817 = vmatpush1.xpose.msra.mxu0 0.0
    %2818 = vmatprep.subr.mxu0 0.0
    %2819 = vmatpush1.xpose.msra.mxu0 0.0
    %2820 = vmatprep.subr.mxu0 0.0
    %2821 = vmatpush1.xpose.msra.mxu0 0.0
    %2822 = vmatprep.subr.mxu0 0.0
    %2823 = vmatpush1.xpose.msra.mxu0 0.0
    %2824 = vmatprep.subr.mxu0 0.0
    %2825 = vmatpush1.xpose.msra.mxu0 0.0
    %2826 = vmatprep.subr.mxu0 0.0
    %2827 = vmatpush1.xpose.msra.mxu0 0.0
    %2828 = vmatprep.subr.mxu0 0.0
    %2829 = vmatpush1.xpose.msra.mxu0 0.0
    %2830 = vmatprep.subr.mxu0 0.0
    %2831 = vmatpush1.xpose.msra.mxu0 0.0
    %2832 = vmatprep.mubr.f32.mxu0 0.0
    %2833 = vmatmul.mubr.f32.gmra.mrb[0].mxu0 %v2764
    %v2834 = vpop.f32.mrb[0].mxu0
    %v2835 = vadd.f32 0.0, %v2834
    %v2836 = vpop.f32.mrb[0].mxu0
    %2837 = vdwg.mxu0
    %2838 = vrot.lane.b32.xlu0 %v2285, 64
    %v2839 = vpop.permute.xlu0 %2838
    %v2840 = vsel %vm250, %v2285, 0
    %v2842 = vsel %vm250, %v2839, 0
    %2844 = vmatprep.subr.mxu0 0.0
    %2845 = vmatpush1.xpose.msra.mxu0 %v2842
    %2846 = vmatprep.subr.mxu0 0.0
    %2847 = vmatpush1.xpose.msra.mxu0 0.0
    %2848 = vmatprep.subr.mxu0 0.0
    %2849 = vmatpush1.xpose.msra.mxu0 0.0
    %2850 = vmatprep.subr.mxu0 0.0
    %2851 = vmatpush1.xpose.msra.mxu0 0.0
    %2852 = vmatprep.subr.mxu0 0.0
    %2853 = vmatpush1.xpose.msra.mxu0 0.0
    %2854 = vmatprep.subr.mxu0 0.0
    %2855 = vmatpush1.xpose.msra.mxu0 0.0
    %2856 = vmatprep.subr.mxu0 0.0
    %2857 = vmatpush1.xpose.msra.mxu0 0.0
    %2858 = vmatprep.subr.mxu0 0.0
    %2859 = vmatpush1.xpose.msra.mxu0 0.0
    %2860 = vmatprep.subr.mxu0 0.0
    %2861 = vmatpush1.xpose.msra.mxu0 0.0
    %2862 = vmatprep.subr.mxu0 0.0
    %2863 = vmatpush1.xpose.msra.mxu0 0.0
    %2864 = vmatprep.subr.mxu0 0.0
    %2865 = vmatpush1.xpose.msra.mxu0 0.0
    %2866 = vmatprep.subr.mxu0 0.0
    %2867 = vmatpush1.xpose.msra.mxu0 0.0
    %2868 = vmatprep.subr.mxu0 0.0
    %2869 = vmatpush1.xpose.msra.mxu0 0.0
    %2870 = vmatprep.subr.mxu0 0.0
    %2871 = vmatpush1.xpose.msra.mxu0 0.0
    %2872 = vmatprep.subr.mxu0 0.0
    %2873 = vmatpush1.xpose.msra.mxu0 0.0
    %2874 = vmatprep.subr.mxu0 0.0
    %2875 = vmatpush1.xpose.msra.mxu0 0.0
    %2876 = vmatprep.subr.mxu0 0.0
    %2877 = vmatpush1.xpose.msra.mxu0 0.0
    %2878 = vmatprep.subr.mxu0 0.0
    %2879 = vmatpush1.xpose.msra.mxu0 0.0
    %2880 = vmatprep.subr.mxu0 0.0
    %2881 = vmatpush1.xpose.msra.mxu0 0.0
    %2882 = vmatprep.subr.mxu0 0.0
    %2883 = vmatpush1.xpose.msra.mxu0 0.0
    %2884 = vmatprep.subr.mxu0 0.0
    %2885 = vmatpush1.xpose.msra.mxu0 0.0
    %2886 = vmatprep.subr.mxu0 0.0
    %2887 = vmatpush1.xpose.msra.mxu0 0.0
    %2888 = vmatprep.subr.mxu0 0.0
    %2889 = vmatpush1.xpose.msra.mxu0 0.0
    %2890 = vmatprep.subr.mxu0 0.0
    %2891 = vmatpush1.xpose.msra.mxu0 0.0
    %2892 = vmatprep.subr.mxu0 0.0
    %2893 = vmatpush1.xpose.msra.mxu0 0.0
    %2894 = vmatprep.subr.mxu0 0.0
    %2895 = vmatpush1.xpose.msra.mxu0 0.0
    %2896 = vmatprep.subr.mxu0 0.0
    %2897 = vmatpush1.xpose.msra.mxu0 0.0
    %2898 = vmatprep.subr.mxu0 0.0
    %2899 = vmatpush1.xpose.msra.mxu0 0.0
    %2900 = vmatprep.subr.mxu0 0.0
    %2901 = vmatpush1.xpose.msra.mxu0 0.0
    %2902 = vmatprep.subr.mxu0 0.0
    %2903 = vmatpush1.xpose.msra.mxu0 0.0
    %2904 = vmatprep.subr.mxu0 0.0
    %2905 = vmatpush1.xpose.msra.mxu0 0.0
    %2906 = vmatprep.subr.mxu0 0.0
    %2907 = vmatpush1.xpose.msra.mxu0 0.0
    %2908 = vmatprep.mubr.f32.mxu0 0.0
    %2909 = vmatmul.mubr.f32.gmra.mrb[0].mxu0 %v2840
    %v2910 = vpop.f32.mrb[0].mxu0
    %v2911 = vadd.f32 0.0, %v2910
    %v2912 = vpop.f32.mrb[0].mxu0
    %2913 = vdwg.mxu0
    %v2914 = vsel %vm858, %v2379, -1e+30
    %v2915 = vsel %vm858, %v2455, -1e+30
    %v2916 = vsel %vm858, %v2531, -1e+30
    %v2917 = vsel %vm858, %v2607, -1e+30
    %v2918 = vsel %vm858, %v2683, -1e+30
    %v2919 = vsel %vm858, %v2759, -1e+30
    %v2920 = vsel %vm858, %v2835, -1e+30
    %v2921 = vsel %vm858, %v2911, -1e+30
    %v2922 = vsel %vm867, %v2914, -inf
    %2923 = vmax.xlane.f32.xlu0 %v2922
    %v2924 = vpop.xlane.xlu0 %2923
    %v2925 = vsel %vm867, %v2915, -inf
    %2926 = vmax.xlane.f32.xlu0 %v2925
    %v2927 = vpop.xlane.xlu0 %2926
    %v2928 = vsel %vm867, %v2916, -inf
    %2929 = vmax.xlane.f32.xlu0 %v2928
    %v2930 = vpop.xlane.xlu0 %2929
    %v2931 = vsel %vm867, %v2917, -inf
    %2932 = vmax.xlane.f32.xlu0 %v2931
    %v2933 = vpop.xlane.xlu0 %2932
    %v2934 = vsel %vm867, %v2918, -inf
    %2935 = vmax.xlane.f32.xlu0 %v2934
    %v2936 = vpop.xlane.xlu0 %2935
    %v2937 = vsel %vm867, %v2919, -inf
    %2938 = vmax.xlane.f32.xlu0 %v2937
    %v2939 = vpop.xlane.xlu0 %2938
    %v2940 = vsel %vm867, %v2920, -inf
    %2941 = vmax.xlane.f32.xlu0 %v2940
    %v2942 = vpop.xlane.xlu0 %2941
    %v2943 = vsel %vm867, %v2921, -inf
    %2944 = vmax.xlane.f32.xlu0 %v2943
    %v2945 = vpop.xlane.xlu0 %2944
    %v2946 = vsub.f32 %v2914, %v2924
    %v2947 = vsub.f32 %v2915, %v2927
    %v2948 = vsub.f32 %v2916, %v2930
    %v2949 = vsub.f32 %v2917, %v2933
    %v2950 = vsub.f32 %v2918, %v2936
    %v2951 = vsub.f32 %v2919, %v2939
    %v2952 = vsub.f32 %v2920, %v2942
    %v2953 = vsub.f32 %v2921, %v2945
    %v2954 = vmul.f32 %v2946, 1.442695
    %v2955 = vpow.pop %v2954
    %v2956 = vmul.f32 %v2947, 1.442695
    %v2957 = vpow.pop %v2956
    %v2958 = vmul.f32 %v2948, 1.442695
    %v2959 = vpow.pop %v2958
    %v2960 = vmul.f32 %v2949, 1.442695
    %v2961 = vpow.pop %v2960
    %v2962 = vmul.f32 %v2950, 1.442695
    %v2963 = vpow.pop %v2962
    %v2964 = vmul.f32 %v2951, 1.442695
    %v2965 = vpow.pop %v2964
    %v2966 = vmul.f32 %v2952, 1.442695
    %v2967 = vpow.pop %v2966
    %v2968 = vmul.f32 %v2953, 1.442695
    %v2969 = vpow.pop %v2968
    %v2970 = vsel %vm867, %v2955, 0.0
    %2971 = vadd.xlane.f32.xlu0 %v2970
    %v2972 = vpop.xlane.xlu0 %2971
    %v2973 = vsel %vm867, %v2957, 0.0
    %2974 = vadd.xlane.f32.xlu0 %v2973
    %v2975 = vpop.xlane.xlu0 %2974
    %v2976 = vsel %vm867, %v2959, 0.0
    %2977 = vadd.xlane.f32.xlu0 %v2976
    %v2978 = vpop.xlane.xlu0 %2977
    %v2979 = vsel %vm867, %v2961, 0.0
    %2980 = vadd.xlane.f32.xlu0 %v2979
    %v2981 = vpop.xlane.xlu0 %2980
    %v2982 = vsel %vm867, %v2963, 0.0
    %2983 = vadd.xlane.f32.xlu0 %v2982
    %v2984 = vpop.xlane.xlu0 %2983
    %v2985 = vsel %vm867, %v2965, 0.0
    %2986 = vadd.xlane.f32.xlu0 %v2985
    %v2987 = vpop.xlane.xlu0 %2986
    %v2988 = vsel %vm867, %v2967, 0.0
    %2989 = vadd.xlane.f32.xlu0 %v2988
    %v2990 = vpop.xlane.xlu0 %2989
    %v2991 = vsel %vm867, %v2969, 0.0
    %2992 = vadd.xlane.f32.xlu0 %v2991
    %v2993 = vpop.xlane.xlu0 %2992
    %v2994 = vrcp.pop %v2972
    %v2995 = vmul.f32 %v2955, %v2994
    %v2996 = vrcp.pop %v2975
    %v2997 = vmul.f32 %v2957, %v2996
    %v2998 = vrcp.pop %v2978
    %v2999 = vmul.f32 %v2959, %v2998
    %v3000 = vrcp.pop %v2981
    %v3001 = vmul.f32 %v2961, %v3000
    %v3002 = vrcp.pop %v2984
    %v3003 = vmul.f32 %v2963, %v3002
    %v3004 = vrcp.pop %v2987
    %v3005 = vmul.f32 %v2965, %v3004
    %v3006 = vrcp.pop %v2990
    %v3007 = vmul.f32 %v2967, %v3006
    %v3008 = vrcp.pop %v2993
    %v3009 = vmul.f32 %v2969, %v3008
    %v3011 = vsel %vm867, %v2995, 0
    %3013 = vmatprep.subr.mxu0 0.0
    %3014 = vmatpush1.msra.mxu0 %v2264
    %3015 = vmatprep.subr.mxu0 0.0
    %3016 = vmatpush1.msra.mxu0 0.0
    %3017 = vmatprep.subr.mxu0 0.0
    %3018 = vmatpush1.msra.mxu0 0.0
    %3019 = vmatprep.subr.mxu0 0.0
    %3020 = vmatpush1.msra.mxu0 0.0
    %3021 = vmatprep.subr.mxu0 0.0
    %3022 = vmatpush1.msra.mxu0 0.0
    %3023 = vmatprep.subr.mxu0 0.0
    %3024 = vmatpush1.msra.mxu0 0.0
    %3025 = vmatprep.subr.mxu0 0.0
    %3026 = vmatpush1.msra.mxu0 0.0
    %3027 = vmatprep.subr.mxu0 0.0
    %3028 = vmatpush1.msra.mxu0 0.0
    %3029 = vmatprep.subr.mxu0 0.0
    %3030 = vmatpush1.msra.mxu0 0.0
    %3031 = vmatprep.subr.mxu0 0.0
    %3032 = vmatpush1.msra.mxu0 0.0
    %3033 = vmatprep.subr.mxu0 0.0
    %3034 = vmatpush1.msra.mxu0 0.0
    %3035 = vmatprep.subr.mxu0 0.0
    %3036 = vmatpush1.msra.mxu0 0.0
    %3037 = vmatprep.subr.mxu0 0.0
    %3038 = vmatpush1.msra.mxu0 0.0
    %3039 = vmatprep.subr.mxu0 0.0
    %3040 = vmatpush1.msra.mxu0 0.0
    %3041 = vmatprep.subr.mxu0 0.0
    %3042 = vmatpush1.msra.mxu0 0.0
    %3043 = vmatprep.subr.mxu0 0.0
    %3044 = vmatpush1.msra.mxu0 0.0
    %3045 = vmatprep.subr.mxu0 0.0
    %3046 = vmatpush1.msra.mxu0 0.0
    %3047 = vmatprep.subr.mxu0 0.0
    %3048 = vmatpush1.msra.mxu0 0.0
    %3049 = vmatprep.subr.mxu0 0.0
    %3050 = vmatpush1.msra.mxu0 0.0
    %3051 = vmatprep.subr.mxu0 0.0
    %3052 = vmatpush1.msra.mxu0 0.0
    %3053 = vmatprep.subr.mxu0 0.0
    %3054 = vmatpush1.msra.mxu0 0.0
    %3055 = vmatprep.subr.mxu0 0.0
    %3056 = vmatpush1.msra.mxu0 0.0
    %3057 = vmatprep.subr.mxu0 0.0
    %3058 = vmatpush1.msra.mxu0 0.0
    %3059 = vmatprep.subr.mxu0 0.0
    %3060 = vmatpush1.msra.mxu0 0.0
    %3061 = vmatprep.subr.mxu0 0.0
    %3062 = vmatpush1.msra.mxu0 0.0
    %3063 = vmatprep.subr.mxu0 0.0
    %3064 = vmatpush1.msra.mxu0 0.0
    %3065 = vmatprep.subr.mxu0 0.0
    %3066 = vmatpush1.msra.mxu0 0.0
    %3067 = vmatprep.subr.mxu0 0.0
    %3068 = vmatpush1.msra.mxu0 0.0
    %3069 = vmatprep.subr.mxu0 0.0
    %3070 = vmatpush1.msra.mxu0 0.0
    %3071 = vmatprep.subr.mxu0 0.0
    %3072 = vmatpush1.msra.mxu0 0.0
    %3073 = vmatprep.subr.mxu0 0.0
    %3074 = vmatpush1.msra.mxu0 0.0
    %3075 = vmatprep.subr.mxu0 0.0
    %3076 = vmatpush1.msra.mxu0 0.0
    %3077 = vmatprep.mubr.f32.mxu0 0.0
    %3078 = vmatmul.mubr.f32.gmra.mrb[0].mxu0 %v3011
    %v3079 = vpop.f32.mrb[0].mxu0
    %v3080 = vadd.f32 0.0, %v3079
    %v3081 = vpop.f32.mrb[0].mxu0
    %3082 = vdwg.mxu0
    %v3084 = vsel %vm867, %v2997, 0
    %3086 = vmatprep.subr.mxu0 0.0
    %3087 = vmatpush1.msra.mxu0 %v2270
    %3088 = vmatprep.subr.mxu0 0.0
    %3089 = vmatpush1.msra.mxu0 0.0
    %3090 = vmatprep.subr.mxu0 0.0
    %3091 = vmatpush1.msra.mxu0 0.0
    %3092 = vmatprep.subr.mxu0 0.0
    %3093 = vmatpush1.msra.mxu0 0.0
    %3094 = vmatprep.subr.mxu0 0.0
    %3095 = vmatpush1.msra.mxu0 0.0
    %3096 = vmatprep.subr.mxu0 0.0
    %3097 = vmatpush1.msra.mxu0 0.0
    %3098 = vmatprep.subr.mxu0 0.0
    %3099 = vmatpush1.msra.mxu0 0.0
    %3100 = vmatprep.subr.mxu0 0.0
    %3101 = vmatpush1.msra.mxu0 0.0
    %3102 = vmatprep.subr.mxu0 0.0
    %3103 = vmatpush1.msra.mxu0 0.0
    %3104 = vmatprep.subr.mxu0 0.0
    %3105 = vmatpush1.msra.mxu0 0.0
    %3106 = vmatprep.subr.mxu0 0.0
    %3107 = vmatpush1.msra.mxu0 0.0
    %3108 = vmatprep.subr.mxu0 0.0
    %3109 = vmatpush1.msra.mxu0 0.0
    %3110 = vmatprep.subr.mxu0 0.0
    %3111 = vmatpush1.msra.mxu0 0.0
    %3112 = vmatprep.subr.mxu0 0.0
    %3113 = vmatpush1.msra.mxu0 0.0
    %3114 = vmatprep.subr.mxu0 0.0
    %3115 = vmatpush1.msra.mxu0 0.0
    %3116 = vmatprep.subr.mxu0 0.0
    %3117 = vmatpush1.msra.mxu0 0.0
    %3118 = vmatprep.subr.mxu0 0.0
    %3119 = vmatpush1.msra.mxu0 0.0
    %3120 = vmatprep.subr.mxu0 0.0
    %3121 = vmatpush1.msra.mxu0 0.0
    %3122 = vmatprep.subr.mxu0 0.0
    %3123 = vmatpush1.msra.mxu0 0.0
    %3124 = vmatprep.subr.mxu0 0.0
    %3125 = vmatpush1.msra.mxu0 0.0
    %3126 = vmatprep.subr.mxu0 0.0
    %3127 = vmatpush1.msra.mxu0 0.0
    %3128 = vmatprep.subr.mxu0 0.0
    %3129 = vmatpush1.msra.mxu0 0.0
    %3130 = vmatprep.subr.mxu0 0.0
    %3131 = vmatpush1.msra.mxu0 0.0
    %3132 = vmatprep.subr.mxu0 0.0
    %3133 = vmatpush1.msra.mxu0 0.0
    %3134 = vmatprep.subr.mxu0 0.0
    %3135 = vmatpush1.msra.mxu0 0.0
    %3136 = vmatprep.subr.mxu0 0.0
    %3137 = vmatpush1.msra.mxu0 0.0
    %3138 = vmatprep.subr.mxu0 0.0
    %3139 = vmatpush1.msra.mxu0 0.0
    %3140 = vmatprep.subr.mxu0 0.0
    %3141 = vmatpush1.msra.mxu0 0.0
    %3142 = vmatprep.subr.mxu0 0.0
    %3143 = vmatpush1.msra.mxu0 0.0
    %3144 = vmatprep.subr.mxu0 0.0
    %3145 = vmatpush1.msra.mxu0 0.0
    %3146 = vmatprep.subr.mxu0 0.0
    %3147 = vmatpush1.msra.mxu0 0.0
    %3148 = vmatprep.subr.mxu0 0.0
    %3149 = vmatpush1.msra.mxu0 0.0
    %3150 = vmatprep.mubr.f32.mxu0 0.0
    %3151 = vmatmul.mubr.f32.gmra.mrb[0].mxu0 %v3084
    %v3152 = vpop.f32.mrb[0].mxu0
    %v3153 = vadd.f32 0.0, %v3152
    %v3154 = vpop.f32.mrb[0].mxu0
    %3155 = vdwg.mxu0
    %v3157 = vsel %vm867, %v2999, 0
    %3159 = vmatprep.subr.mxu0 0.0
    %3160 = vmatpush1.msra.mxu0 %v2289
    %3161 = vmatprep.subr.mxu0 0.0
    %3162 = vmatpush1.msra.mxu0 0.0
    %3163 = vmatprep.subr.mxu0 0.0
    %3164 = vmatpush1.msra.mxu0 0.0
    %3165 = vmatprep.subr.mxu0 0.0
    %3166 = vmatpush1.msra.mxu0 0.0
    %3167 = vmatprep.subr.mxu0 0.0
    %3168 = vmatpush1.msra.mxu0 0.0
    %3169 = vmatprep.subr.mxu0 0.0
    %3170 = vmatpush1.msra.mxu0 0.0
    %3171 = vmatprep.subr.mxu0 0.0
    %3172 = vmatpush1.msra.mxu0 0.0
    %3173 = vmatprep.subr.mxu0 0.0
    %3174 = vmatpush1.msra.mxu0 0.0
    %3175 = vmatprep.subr.mxu0 0.0
    %3176 = vmatpush1.msra.mxu0 0.0
    %3177 = vmatprep.subr.mxu0 0.0
    %3178 = vmatpush1.msra.mxu0 0.0
    %3179 = vmatprep.subr.mxu0 0.0
    %3180 = vmatpush1.msra.mxu0 0.0
    %3181 = vmatprep.subr.mxu0 0.0
    %3182 = vmatpush1.msra.mxu0 0.0
    %3183 = vmatprep.subr.mxu0 0.0
    %3184 = vmatpush1.msra.mxu0 0.0
    %3185 = vmatprep.subr.mxu0 0.0
    %3186 = vmatpush1.msra.mxu0 0.0
    %3187 = vmatprep.subr.mxu0 0.0
    %3188 = vmatpush1.msra.mxu0 0.0
    %3189 = vmatprep.subr.mxu0 0.0
    %3190 = vmatpush1.msra.mxu0 0.0
    %3191 = vmatprep.subr.mxu0 0.0
    %3192 = vmatpush1.msra.mxu0 0.0
    %3193 = vmatprep.subr.mxu0 0.0
    %3194 = vmatpush1.msra.mxu0 0.0
    %3195 = vmatprep.subr.mxu0 0.0
    %3196 = vmatpush1.msra.mxu0 0.0
    %3197 = vmatprep.subr.mxu0 0.0
    %3198 = vmatpush1.msra.mxu0 0.0
    %3199 = vmatprep.subr.mxu0 0.0
    %3200 = vmatpush1.msra.mxu0 0.0
    %3201 = vmatprep.subr.mxu0 0.0
    %3202 = vmatpush1.msra.mxu0 0.0
    %3203 = vmatprep.subr.mxu0 0.0
    %3204 = vmatpush1.msra.mxu0 0.0
    %3205 = vmatprep.subr.mxu0 0.0
    %3206 = vmatpush1.msra.mxu0 0.0
    %3207 = vmatprep.subr.mxu0 0.0
    %3208 = vmatpush1.msra.mxu0 0.0
    %3209 = vmatprep.subr.mxu0 0.0
    %3210 = vmatpush1.msra.mxu0 0.0
    %3211 = vmatprep.subr.mxu0 0.0
    %3212 = vmatpush1.msra.mxu0 0.0
    %3213 = vmatprep.subr.mxu0 0.0
    %3214 = vmatpush1.msra.mxu0 0.0
    %3215 = vmatprep.subr.mxu0 0.0
    %3216 = vmatpush1.msra.mxu0 0.0
    %3217 = vmatprep.subr.mxu0 0.0
    %3218 = vmatpush1.msra.mxu0 0.0
    %3219 = vmatprep.subr.mxu0 0.0
    %3220 = vmatpush1.msra.mxu0 0.0
    %3221 = vmatprep.subr.mxu0 0.0
    %3222 = vmatpush1.msra.mxu0 0.0
    %3223 = vmatprep.mubr.f32.mxu0 0.0
    %3224 = vmatmul.mubr.f32.gmra.mrb[0].mxu0 %v3157
    %v3225 = vpop.f32.mrb[0].mxu0
    %v3226 = vadd.f32 0.0, %v3225
    %v3227 = vpop.f32.mrb[0].mxu0
    %3228 = vdwg.mxu0
    %v3230 = vsel %vm867, %v3001, 0
    %3232 = vmatprep.subr.mxu0 0.0
    %3233 = vmatpush1.msra.mxu0 %v2291
    %3234 = vmatprep.subr.mxu0 0.0
    %3235 = vmatpush1.msra.mxu0 0.0
    %3236 = vmatprep.subr.mxu0 0.0
    %3237 = vmatpush1.msra.mxu0 0.0
    %3238 = vmatprep.subr.mxu0 0.0
    %3239 = vmatpush1.msra.mxu0 0.0
    %3240 = vmatprep.subr.mxu0 0.0
    %3241 = vmatpush1.msra.mxu0 0.0
    %3242 = vmatprep.subr.mxu0 0.0
    %3243 = vmatpush1.msra.mxu0 0.0
    %3244 = vmatprep.subr.mxu0 0.0
    %3245 = vmatpush1.msra.mxu0 0.0
    %3246 = vmatprep.subr.mxu0 0.0
    %3247 = vmatpush1.msra.mxu0 0.0
    %3248 = vmatprep.subr.mxu0 0.0
    %3249 = vmatpush1.msra.mxu0 0.0
    %3250 = vmatprep.subr.mxu0 0.0
    %3251 = vmatpush1.msra.mxu0 0.0
    %3252 = vmatprep.subr.mxu0 0.0
    %3253 = vmatpush1.msra.mxu0 0.0
    %3254 = vmatprep.subr.mxu0 0.0
    %3255 = vmatpush1.msra.mxu0 0.0
    %3256 = vmatprep.subr.mxu0 0.0
    %3257 = vmatpush1.msra.mxu0 0.0
    %3258 = vmatprep.subr.mxu0 0.0
    %3259 = vmatpush1.msra.mxu0 0.0
    %3260 = vmatprep.subr.mxu0 0.0
    %3261 = vmatpush1.msra.mxu0 0.0
    %3262 = vmatprep.subr.mxu0 0.0
    %3263 = vmatpush1.msra.mxu0 0.0
    %3264 = vmatprep.subr.mxu0 0.0
    %3265 = vmatpush1.msra.mxu0 0.0
    %3266 = vmatprep.subr.mxu0 0.0
    %3267 = vmatpush1.msra.mxu0 0.0
    %3268 = vmatprep.subr.mxu0 0.0
    %3269 = vmatpush1.msra.mxu0 0.0
    %3270 = vmatprep.subr.mxu0 0.0
    %3271 = vmatpush1.msra.mxu0 0.0
    %3272 = vmatprep.subr.mxu0 0.0
    %3273 = vmatpush1.msra.mxu0 0.0
    %3274 = vmatprep.subr.mxu0 0.0
    %3275 = vmatpush1.msra.mxu0 0.0
    %3276 = vmatprep.subr.mxu0 0.0
    %3277 = vmatpush1.msra.mxu0 0.0
    %3278 = vmatprep.subr.mxu0 0.0
    %3279 = vmatpush1.msra.mxu0 0.0
    %3280 = vmatprep.subr.mxu0 0.0
    %3281 = vmatpush1.msra.mxu0 0.0
    %3282 = vmatprep.subr.mxu0 0.0
    %3283 = vmatpush1.msra.mxu0 0.0
    %3284 = vmatprep.subr.mxu0 0.0
    %3285 = vmatpush1.msra.mxu0 0.0
    %3286 = vmatprep.subr.mxu0 0.0
    %3287 = vmatpush1.msra.mxu0 0.0
    %3288 = vmatprep.subr.mxu0 0.0
    %3289 = vmatpush1.msra.mxu0 0.0
    %3290 = vmatprep.subr.mxu0 0.0
    %3291 = vmatpush1.msra.mxu0 0.0
    %3292 = vmatprep.subr.mxu0 0.0
    %3293 = vmatpush1.msra.mxu0 0.0
    %3294 = vmatprep.subr.mxu0 0.0
    %3295 = vmatpush1.msra.mxu0 0.0
    %3296 = vmatprep.mubr.f32.mxu0 0.0
    %3297 = vmatmul.mubr.f32.gmra.mrb[0].mxu0 %v3230
    %v3298 = vpop.f32.mrb[0].mxu0
    %v3299 = vadd.f32 0.0, %v3298
    %v3300 = vpop.f32.mrb[0].mxu0
    %3301 = vdwg.mxu0
    %v3303 = vsel %vm867, %v3003, 0
    %3305 = vmatprep.subr.mxu0 0.0
    %3306 = vmatpush1.msra.mxu0 %v2295
    %3307 = vmatprep.subr.mxu0 0.0
    %3308 = vmatpush1.msra.mxu0 0.0
    %3309 = vmatprep.subr.mxu0 0.0
    %3310 = vmatpush1.msra.mxu0 0.0
    %3311 = vmatprep.subr.mxu0 0.0
    %3312 = vmatpush1.msra.mxu0 0.0
    %3313 = vmatprep.subr.mxu0 0.0
    %3314 = vmatpush1.msra.mxu0 0.0
    %3315 = vmatprep.subr.mxu0 0.0
    %3316 = vmatpush1.msra.mxu0 0.0
    %3317 = vmatprep.subr.mxu0 0.0
    %3318 = vmatpush1.msra.mxu0 0.0
    %3319 = vmatprep.subr.mxu0 0.0
    %3320 = vmatpush1.msra.mxu0 0.0
    %3321 = vmatprep.subr.mxu0 0.0
    %3322 = vmatpush1.msra.mxu0 0.0
    %3323 = vmatprep.subr.mxu0 0.0
    %3324 = vmatpush1.msra.mxu0 0.0
    %3325 = vmatprep.subr.mxu0 0.0
    %3326 = vmatpush1.msra.mxu0 0.0
    %3327 = vmatprep.subr.mxu0 0.0
    %3328 = vmatpush1.msra.mxu0 0.0
    %3329 = vmatprep.subr.mxu0 0.0
    %3330 = vmatpush1.msra.mxu0 0.0
    %3331 = vmatprep.subr.mxu0 0.0
    %3332 = vmatpush1.msra.mxu0 0.0
    %3333 = vmatprep.subr.mxu0 0.0
    %3334 = vmatpush1.msra.mxu0 0.0
    %3335 = vmatprep.subr.mxu0 0.0
    %3336 = vmatpush1.msra.mxu0 0.0
    %3337 = vmatprep.subr.mxu0 0.0
    %3338 = vmatpush1.msra.mxu0 0.0
    %3339 = vmatprep.subr.mxu0 0.0
    %3340 = vmatpush1.msra.mxu0 0.0
    %3341 = vmatprep.subr.mxu0 0.0
    %3342 = vmatpush1.msra.mxu0 0.0
    %3343 = vmatprep.subr.mxu0 0.0
    %3344 = vmatpush1.msra.mxu0 0.0
    %3345 = vmatprep.subr.mxu0 0.0
    %3346 = vmatpush1.msra.mxu0 0.0
    %3347 = vmatprep.subr.mxu0 0.0
    %3348 = vmatpush1.msra.mxu0 0.0
    %3349 = vmatprep.subr.mxu0 0.0
    %3350 = vmatpush1.msra.mxu0 0.0
    %3351 = vmatprep.subr.mxu0 0.0
    %3352 = vmatpush1.msra.mxu0 0.0
    %3353 = vmatprep.subr.mxu0 0.0
    %3354 = vmatpush1.msra.mxu0 0.0
    %3355 = vmatprep.subr.mxu0 0.0
    %3356 = vmatpush1.msra.mxu0 0.0
    %3357 = vmatprep.subr.mxu0 0.0
    %3358 = vmatpush1.msra.mxu0 0.0
    %3359 = vmatprep.subr.mxu0 0.0
    %3360 = vmatpush1.msra.mxu0 0.0
    %3361 = vmatprep.subr.mxu0 0.0
    %3362 = vmatpush1.msra.mxu0 0.0
    %3363 = vmatprep.subr.mxu0 0.0
    %3364 = vmatpush1.msra.mxu0 0.0
    %3365 = vmatprep.subr.mxu0 0.0
    %3366 = vmatpush1.msra.mxu0 0.0
    %3367 = vmatprep.subr.mxu0 0.0
    %3368 = vmatpush1.msra.mxu0 0.0
    %3369 = vmatprep.mubr.f32.mxu0 0.0
    %3370 = vmatmul.mubr.f32.gmra.mrb[0].mxu0 %v3303
    %v3371 = vpop.f32.mrb[0].mxu0
    %v3372 = vadd.f32 0.0, %v3371
    %v3373 = vpop.f32.mrb[0].mxu0
    %3374 = vdwg.mxu0
    %v3376 = vsel %vm867, %v3005, 0
    %3378 = vmatprep.subr.mxu0 0.0
    %3379 = vmatpush1.msra.mxu0 %v2297
    %3380 = vmatprep.subr.mxu0 0.0
    %3381 = vmatpush1.msra.mxu0 0.0
    %3382 = vmatprep.subr.mxu0 0.0
    %3383 = vmatpush1.msra.mxu0 0.0
    %3384 = vmatprep.subr.mxu0 0.0
    %3385 = vmatpush1.msra.mxu0 0.0
    %3386 = vmatprep.subr.mxu0 0.0
    %3387 = vmatpush1.msra.mxu0 0.0
    %3388 = vmatprep.subr.mxu0 0.0
    %3389 = vmatpush1.msra.mxu0 0.0
    %3390 = vmatprep.subr.mxu0 0.0
    %3391 = vmatpush1.msra.mxu0 0.0
    %3392 = vmatprep.subr.mxu0 0.0
    %3393 = vmatpush1.msra.mxu0 0.0
    %3394 = vmatprep.subr.mxu0 0.0
    %3395 = vmatpush1.msra.mxu0 0.0
    %3396 = vmatprep.subr.mxu0 0.0
    %3397 = vmatpush1.msra.mxu0 0.0
    %3398 = vmatprep.subr.mxu0 0.0
    %3399 = vmatpush1.msra.mxu0 0.0
    %3400 = vmatprep.subr.mxu0 0.0
    %3401 = vmatpush1.msra.mxu0 0.0
    %3402 = vmatprep.subr.mxu0 0.0
    %3403 = vmatpush1.msra.mxu0 0.0
    %3404 = vmatprep.subr.mxu0 0.0
    %3405 = vmatpush1.msra.mxu0 0.0
    %3406 = vmatprep.subr.mxu0 0.0
    %3407 = vmatpush1.msra.mxu0 0.0
    %3408 = vmatprep.subr.mxu0 0.0
    %3409 = vmatpush1.msra.mxu0 0.0
    %3410 = vmatprep.subr.mxu0 0.0
    %3411 = vmatpush1.msra.mxu0 0.0
    %3412 = vmatprep.subr.mxu0 0.0
    %3413 = vmatpush1.msra.mxu0 0.0
    %3414 = vmatprep.subr.mxu0 0.0
    %3415 = vmatpush1.msra.mxu0 0.0
    %3416 = vmatprep.subr.mxu0 0.0
    %3417 = vmatpush1.msra.mxu0 0.0
    %3418 = vmatprep.subr.mxu0 0.0
    %3419 = vmatpush1.msra.mxu0 0.0
    %3420 = vmatprep.subr.mxu0 0.0
    %3421 = vmatpush1.msra.mxu0 0.0
    %3422 = vmatprep.subr.mxu0 0.0
    %3423 = vmatpush1.msra.mxu0 0.0
    %3424 = vmatprep.subr.mxu0 0.0
    %3425 = vmatpush1.msra.mxu0 0.0
    %3426 = vmatprep.subr.mxu0 0.0
    %3427 = vmatpush1.msra.mxu0 0.0
    %3428 = vmatprep.subr.mxu0 0.0
    %3429 = vmatpush1.msra.mxu0 0.0
    %3430 = vmatprep.subr.mxu0 0.0
    %3431 = vmatpush1.msra.mxu0 0.0
    %3432 = vmatprep.subr.mxu0 0.0
    %3433 = vmatpush1.msra.mxu0 0.0
    %3434 = vmatprep.subr.mxu0 0.0
    %3435 = vmatpush1.msra.mxu0 0.0
    %3436 = vmatprep.subr.mxu0 0.0
    %3437 = vmatpush1.msra.mxu0 0.0
    %3438 = vmatprep.subr.mxu0 0.0
    %3439 = vmatpush1.msra.mxu0 0.0
    %3440 = vmatprep.subr.mxu0 0.0
    %3441 = vmatpush1.msra.mxu0 0.0
    %3442 = vmatprep.mubr.f32.mxu0 0.0
    %3443 = vmatmul.mubr.f32.gmra.mrb[0].mxu0 %v3376
    %v3444 = vpop.f32.mrb[0].mxu0
    %v3445 = vadd.f32 0.0, %v3444
    %v3446 = vpop.f32.mrb[0].mxu0
    %3447 = vdwg.mxu0
    %v3449 = vsel %vm867, %v3007, 0
    %3451 = vmatprep.subr.mxu0 0.0
    %3452 = vmatpush1.msra.mxu0 %v2301
    %3453 = vmatprep.subr.mxu0 0.0
    %3454 = vmatpush1.msra.mxu0 0.0
    %3455 = vmatprep.subr.mxu0 0.0
    %3456 = vmatpush1.msra.mxu0 0.0
    %3457 = vmatprep.subr.mxu0 0.0
    %3458 = vmatpush1.msra.mxu0 0.0
    %3459 = vmatprep.subr.mxu0 0.0
    %3460 = vmatpush1.msra.mxu0 0.0
    %3461 = vmatprep.subr.mxu0 0.0
    %3462 = vmatpush1.msra.mxu0 0.0
    %3463 = vmatprep.subr.mxu0 0.0
    %3464 = vmatpush1.msra.mxu0 0.0
    %3465 = vmatprep.subr.mxu0 0.0
    %3466 = vmatpush1.msra.mxu0 0.0
    %3467 = vmatprep.subr.mxu0 0.0
    %3468 = vmatpush1.msra.mxu0 0.0
    %3469 = vmatprep.subr.mxu0 0.0
    %3470 = vmatpush1.msra.mxu0 0.0
    %3471 = vmatprep.subr.mxu0 0.0
    %3472 = vmatpush1.msra.mxu0 0.0
    %3473 = vmatprep.subr.mxu0 0.0
    %3474 = vmatpush1.msra.mxu0 0.0
    %3475 = vmatprep.subr.mxu0 0.0
    %3476 = vmatpush1.msra.mxu0 0.0
    %3477 = vmatprep.subr.mxu0 0.0
    %3478 = vmatpush1.msra.mxu0 0.0
    %3479 = vmatprep.subr.mxu0 0.0
    %3480 = vmatpush1.msra.mxu0 0.0
    %3481 = vmatprep.subr.mxu0 0.0
    %3482 = vmatpush1.msra.mxu0 0.0
    %3483 = vmatprep.subr.mxu0 0.0
    %3484 = vmatpush1.msra.mxu0 0.0
    %3485 = vmatprep.subr.mxu0 0.0
    %3486 = vmatpush1.msra.mxu0 0.0
    %3487 = vmatprep.subr.mxu0 0.0
    %3488 = vmatpush1.msra.mxu0 0.0
    %3489 = vmatprep.subr.mxu0 0.0
    %3490 = vmatpush1.msra.mxu0 0.0
    %3491 = vmatprep.subr.mxu0 0.0
    %3492 = vmatpush1.msra.mxu0 0.0
    %3493 = vmatprep.subr.mxu0 0.0
    %3494 = vmatpush1.msra.mxu0 0.0
    %3495 = vmatprep.subr.mxu0 0.0
    %3496 = vmatpush1.msra.mxu0 0.0
    %3497 = vmatprep.subr.mxu0 0.0
    %3498 = vmatpush1.msra.mxu0 0.0
    %3499 = vmatprep.subr.mxu0 0.0
    %3500 = vmatpush1.msra.mxu0 0.0
    %3501 = vmatprep.subr.mxu0 0.0
    %3502 = vmatpush1.msra.mxu0 0.0
    %3503 = vmatprep.subr.mxu0 0.0
    %3504 = vmatpush1.msra.mxu0 0.0
    %3505 = vmatprep.subr.mxu0 0.0
    %3506 = vmatpush1.msra.mxu0 0.0
    %3507 = vmatprep.subr.mxu0 0.0
    %3508 = vmatpush1.msra.mxu0 0.0
    %3509 = vmatprep.subr.mxu0 0.0
    %3510 = vmatpush1.msra.mxu0 0.0
    %3511 = vmatprep.subr.mxu0 0.0
    %3512 = vmatpush1.msra.mxu0 0.0
    %3513 = vmatprep.subr.mxu0 0.0
    %3514 = vmatpush1.msra.mxu0 0.0
    %3515 = vmatprep.mubr.f32.mxu0 0.0
    %3516 = vmatmul.mubr.f32.gmra.mrb[0].mxu0 %v3449
    %v3517 = vpop.f32.mrb[0].mxu0
    %v3518 = vadd.f32 0.0, %v3517
    %v3519 = vpop.f32.mrb[0].mxu0
    %3520 = vdwg.mxu0
    %v3522 = vsel %vm867, %v3009, 0
    %3524 = vmatprep.subr.mxu0 0.0
    %3525 = vmatpush1.msra.mxu0 %v2303
    %3526 = vmatprep.subr.mxu0 0.0
    %3527 = vmatpush1.msra.mxu0 0.0
    %3528 = vmatprep.subr.mxu0 0.0
    %3529 = vmatpush1.msra.mxu0 0.0
    %3530 = vmatprep.subr.mxu0 0.0
    %3531 = vmatpush1.msra.mxu0 0.0
    %3532 = vmatprep.subr.mxu0 0.0
    %3533 = vmatpush1.msra.mxu0 0.0
    %3534 = vmatprep.subr.mxu0 0.0
    %3535 = vmatpush1.msra.mxu0 0.0
    %3536 = vmatprep.subr.mxu0 0.0
    %3537 = vmatpush1.msra.mxu0 0.0
    %3538 = vmatprep.subr.mxu0 0.0
    %3539 = vmatpush1.msra.mxu0 0.0
    %3540 = vmatprep.subr.mxu0 0.0
    %3541 = vmatpush1.msra.mxu0 0.0
    %3542 = vmatprep.subr.mxu0 0.0
    %3543 = vmatpush1.msra.mxu0 0.0
    %3544 = vmatprep.subr.mxu0 0.0
    %3545 = vmatpush1.msra.mxu0 0.0
    %3546 = vmatprep.subr.mxu0 0.0
    %3547 = vmatpush1.msra.mxu0 0.0
    %3548 = vmatprep.subr.mxu0 0.0
    %3549 = vmatpush1.msra.mxu0 0.0
    %3550 = vmatprep.subr.mxu0 0.0
    %3551 = vmatpush1.msra.mxu0 0.0
    %3552 = vmatprep.subr.mxu0 0.0
    %3553 = vmatpush1.msra.mxu0 0.0
    %3554 = vmatprep.subr.mxu0 0.0
    %3555 = vmatpush1.msra.mxu0 0.0
    %3556 = vmatprep.subr.mxu0 0.0
    %3557 = vmatpush1.msra.mxu0 0.0
    %3558 = vmatprep.subr.mxu0 0.0
    %3559 = vmatpush1.msra.mxu0 0.0
    %3560 = vmatprep.subr.mxu0 0.0
    %3561 = vmatpush1.msra.mxu0 0.0
    %3562 = vmatprep.subr.mxu0 0.0
    %3563 = vmatpush1.msra.mxu0 0.0
    %3564 = vmatprep.subr.mxu0 0.0
    %3565 = vmatpush1.msra.mxu0 0.0
    %3566 = vmatprep.subr.mxu0 0.0
    %3567 = vmatpush1.msra.mxu0 0.0
    %3568 = vmatprep.subr.mxu0 0.0
    %3569 = vmatpush1.msra.mxu0 0.0
    %3570 = vmatprep.subr.mxu0 0.0
    %3571 = vmatpush1.msra.mxu0 0.0
    %3572 = vmatprep.subr.mxu0 0.0
    %3573 = vmatpush1.msra.mxu0 0.0
    %3574 = vmatprep.subr.mxu0 0.0
    %3575 = vmatpush1.msra.mxu0 0.0
    %3576 = vmatprep.subr.mxu0 0.0
    %3577 = vmatpush1.msra.mxu0 0.0
    %3578 = vmatprep.subr.mxu0 0.0
    %3579 = vmatpush1.msra.mxu0 0.0
    %3580 = vmatprep.subr.mxu0 0.0
    %3581 = vmatpush1.msra.mxu0 0.0
    %3582 = vmatprep.subr.mxu0 0.0
    %3583 = vmatpush1.msra.mxu0 0.0
    %3584 = vmatprep.subr.mxu0 0.0
    %3585 = vmatpush1.msra.mxu0 0.0
    %3586 = vmatprep.subr.mxu0 0.0
    %3587 = vmatpush1.msra.mxu0 0.0
    %3588 = vmatprep.mubr.f32.mxu0 0.0
    %3589 = vmatmul.mubr.f32.gmra.mrb[0].mxu0 %v3522
    %v3590 = vpop.f32.mrb[0].mxu0
    %v3591 = vadd.f32 0.0, %v3590
    %v3592 = vpop.f32.mrb[0].mxu0
    %3593 = vdwg.mxu0
    %v3594 = vmax.f32 %v3080, 0.0
    %v3595 = vmax.f32 %v3153, 0.0
    %v3596 = vmax.f32 %v3226, 0.0
    %v3597 = vmax.f32 %v3299, 0.0
    %v3598 = vmax.f32 %v3372, 0.0
    %v3599 = vmax.f32 %v3445, 0.0
    %v3600 = vmax.f32 %v3518, 0.0
    %v3601 = vmax.f32 %v3591, 0.0
    %v3602 = vld [vmem:[%s6 + $0x15] ss:$0 sm:$0xff]
    %s3603 = scalar_lea.vmem [#allocation5], 64
    %v3604 = vld [vmem:[%s3603] sm:$0xff]
    %v3605 = vld [vmem:[%s3603 + $0x8] sm:$0xff]
    %v3607 = vsel %vm250, %v3594, 0
    %v3610 = vsel %vm250, %v3595, 0
    %3612 = vmatprep.subr.mxu0 0.0
    %3613 = vmatpush1.msra.mxu0 %v3604
    %3614 = vmatprep.subr.mxu0 0.0
    %3615 = vmatpush1.msra.mxu0 %v3605
    %3616 = vmatprep.subr.mxu0 0.0
    %3617 = vmatpush1.msra.mxu0 0.0
    %3618 = vmatprep.subr.mxu0 0.0
    %3619 = vmatpush1.msra.mxu0 0.0
    %3620 = vmatprep.subr.mxu0 0.0
    %3621 = vmatpush1.msra.mxu0 0.0
    %3622 = vmatprep.subr.mxu0 0.0
    %3623 = vmatpush1.msra.mxu0 0.0
    %3624 = vmatprep.subr.mxu0 0.0
    %3625 = vmatpush1.msra.mxu0 0.0
    %3626 = vmatprep.subr.mxu0 0.0
    %3627 = vmatpush1.msra.mxu0 0.0
    %3628 = vmatprep.subr.mxu0 0.0
    %3629 = vmatpush1.msra.mxu0 0.0
    %3630 = vmatprep.subr.mxu0 0.0
    %3631 = vmatpush1.msra.mxu0 0.0
    %3632 = vmatprep.subr.mxu0 0.0
    %3633 = vmatpush1.msra.mxu0 0.0
    %3634 = vmatprep.subr.mxu0 0.0
    %3635 = vmatpush1.msra.mxu0 0.0
    %3636 = vmatprep.subr.mxu0 0.0
    %3637 = vmatpush1.msra.mxu0 0.0
    %3638 = vmatprep.subr.mxu0 0.0
    %3639 = vmatpush1.msra.mxu0 0.0
    %3640 = vmatprep.subr.mxu0 0.0
    %3641 = vmatpush1.msra.mxu0 0.0
    %3642 = vmatprep.subr.mxu0 0.0
    %3643 = vmatpush1.msra.mxu0 0.0
    %3644 = vmatprep.subr.mxu0 0.0
    %3645 = vmatpush1.msra.mxu0 0.0
    %3646 = vmatprep.subr.mxu0 0.0
    %3647 = vmatpush1.msra.mxu0 0.0
    %3648 = vmatprep.subr.mxu0 0.0
    %3649 = vmatpush1.msra.mxu0 0.0
    %3650 = vmatprep.subr.mxu0 0.0
    %3651 = vmatpush1.msra.mxu0 0.0
    %3652 = vmatprep.subr.mxu0 0.0
    %3653 = vmatpush1.msra.mxu0 0.0
    %3654 = vmatprep.subr.mxu0 0.0
    %3655 = vmatpush1.msra.mxu0 0.0
    %3656 = vmatprep.subr.mxu0 0.0
    %3657 = vmatpush1.msra.mxu0 0.0
    %3658 = vmatprep.subr.mxu0 0.0
    %3659 = vmatpush1.msra.mxu0 0.0
    %3660 = vmatprep.subr.mxu0 0.0
    %3661 = vmatpush1.msra.mxu0 0.0
    %3662 = vmatprep.subr.mxu0 0.0
    %3663 = vmatpush1.msra.mxu0 0.0
    %3664 = vmatprep.subr.mxu0 0.0
    %3665 = vmatpush1.msra.mxu0 0.0
    %3666 = vmatprep.subr.mxu0 0.0
    %3667 = vmatpush1.msra.mxu0 0.0
    %3668 = vmatprep.subr.mxu0 0.0
    %3669 = vmatpush1.msra.mxu0 0.0
    %3670 = vmatprep.subr.mxu0 0.0
    %3671 = vmatpush1.msra.mxu0 0.0
    %3672 = vmatprep.subr.mxu0 0.0
    %3673 = vmatpush1.msra.mxu0 0.0
    %3674 = vmatprep.subr.mxu0 0.0
    %3675 = vmatpush1.msra.mxu0 0.0
    %3676 = vmatprep.mubr.f32.mxu0 0.0
    %3677 = vmatmul.mubr.f32.gmra.mrb[0].mxu0 %v3607
    %v3678 = vpop.f32.mrb[0].mxu0
    %v3679 = vadd.f32 0.0, %v3678
    %v3680 = vpop.f32.mrb[0].mxu0
    %3681 = vmatprep.mubr.f32.mxu0 0.0
    %3682 = vmatmul.mubr.f32.gmra.mrb[0].mxu0 %v3610
    %v3683 = vpop.f32.mrb[0].mxu0
    %v3684 = vadd.f32 0.0, %v3683
    %v3685 = vpop.f32.mrb[0].mxu0
    %3686 = vdwg.mxu0
    %v3687 = vadd.f32 %v3602, %v3679
    %v3688 = vadd.f32 %v3602, %v3684
    %s3689 = scalar_lea.vmem [#allocation5], 80
    %v3690 = vld [vmem:[%s3689] sm:$0xff]
    %v3691 = vld [vmem:[%s3689 + $0x8] sm:$0xff]
    %v3693 = vsel %vm250, %v3596, 0
    %v3696 = vsel %vm250, %v3597, 0
    %3698 = vmatprep.subr.mxu0 0.0
    %3699 = vmatpush1.msra.mxu0 %v3690
    %3700 = vmatprep.subr.mxu0 0.0
    %3701 = vmatpush1.msra.mxu0 %v3691
    %3702 = vmatprep.subr.mxu0 0.0
    %3703 = vmatpush1.msra.mxu0 0.0
    %3704 = vmatprep.subr.mxu0 0.0
    %3705 = vmatpush1.msra.mxu0 0.0
    %3706 = vmatprep.subr.mxu0 0.0
    %3707 = vmatpush1.msra.mxu0 0.0
    %3708 = vmatprep.subr.mxu0 0.0
    %3709 = vmatpush1.msra.mxu0 0.0
    %3710 = vmatprep.subr.mxu0 0.0
    %3711 = vmatpush1.msra.mxu0 0.0
    %3712 = vmatprep.subr.mxu0 0.0
    %3713 = vmatpush1.msra.mxu0 0.0
    %3714 = vmatprep.subr.mxu0 0.0
    %3715 = vmatpush1.msra.mxu0 0.0
    %3716 = vmatprep.subr.mxu0 0.0
    %3717 = vmatpush1.msra.mxu0 0.0
    %3718 = vmatprep.subr.mxu0 0.0
    %3719 = vmatpush1.msra.mxu0 0.0
    %3720 = vmatprep.subr.mxu0 0.0
    %3721 = vmatpush1.msra.mxu0 0.0
    %3722 = vmatprep.subr.mxu0 0.0
    %3723 = vmatpush1.msra.mxu0 0.0
    %3724 = vmatprep.subr.mxu0 0.0
    %3725 = vmatpush1.msra.mxu0 0.0
    %3726 = vmatprep.subr.mxu0 0.0
    %3727 = vmatpush1.msra.mxu0 0.0
    %3728 = vmatprep.subr.mxu0 0.0
    %3729 = vmatpush1.msra.mxu0 0.0
    %3730 = vmatprep.subr.mxu0 0.0
    %3731 = vmatpush1.msra.mxu0 0.0
    %3732 = vmatprep.subr.mxu0 0.0
    %3733 = vmatpush1.msra.mxu0 0.0
    %3734 = vmatprep.subr.mxu0 0.0
    %3735 = vmatpush1.msra.mxu0 0.0
    %3736 = vmatprep.subr.mxu0 0.0
    %3737 = vmatpush1.msra.mxu0 0.0
    %3738 = vmatprep.subr.mxu0 0.0
    %3739 = vmatpush1.msra.mxu0 0.0
    %3740 = vmatprep.subr.mxu0 0.0
    %3741 = vmatpush1.msra.mxu0 0.0
    %3742 = vmatprep.subr.mxu0 0.0
    %3743 = vmatpush1.msra.mxu0 0.0
    %3744 = vmatprep.subr.mxu0 0.0
    %3745 = vmatpush1.msra.mxu0 0.0
    %3746 = vmatprep.subr.mxu0 0.0
    %3747 = vmatpush1.msra.mxu0 0.0
    %3748 = vmatprep.subr.mxu0 0.0
    %3749 = vmatpush1.msra.mxu0 0.0
    %3750 = vmatprep.subr.mxu0 0.0
    %3751 = vmatpush1.msra.mxu0 0.0
    %3752 = vmatprep.subr.mxu0 0.0
    %3753 = vmatpush1.msra.mxu0 0.0
    %3754 = vmatprep.subr.mxu0 0.0
    %3755 = vmatpush1.msra.mxu0 0.0
    %3756 = vmatprep.subr.mxu0 0.0
    %3757 = vmatpush1.msra.mxu0 0.0
    %3758 = vmatprep.subr.mxu0 0.0
    %3759 = vmatpush1.msra.mxu0 0.0
    %3760 = vmatprep.subr.mxu0 0.0
    %3761 = vmatpush1.msra.mxu0 0.0
    %3762 = vmatprep.mubr.f32.mxu0 0.0
    %3763 = vmatmul.mubr.f32.gmra.mrb[0].mxu0 %v3693
    %v3764 = vpop.f32.mrb[0].mxu0
    %v3765 = vadd.f32 0.0, %v3764
    %v3766 = vpop.f32.mrb[0].mxu0
    %3767 = vmatprep.mubr.f32.mxu0 0.0
    %3768 = vmatmul.mubr.f32.gmra.mrb[0].mxu0 %v3696
    %v3769 = vpop.f32.mrb[0].mxu0
    %v3770 = vadd.f32 0.0, %v3769
    %v3771 = vpop.f32.mrb[0].mxu0
    %3772 = vdwg.mxu0
    %v3773 = vadd.f32 %v3687, %v3765
    %v3774 = vadd.f32 %v3688, %v3770
    %s3775 = scalar_lea.vmem [#allocation5], 96
    %v3776 = vld [vmem:[%s3775] sm:$0xff]
    %v3777 = vld [vmem:[%s3775 + $0x8] sm:$0xff]
    %v3779 = vsel %vm250, %v3598, 0
    %v3782 = vsel %vm250, %v3599, 0
    %3784 = vmatprep.subr.mxu0 0.0
    %3785 = vmatpush1.msra.mxu0 %v3776
    %3786 = vmatprep.subr.mxu0 0.0
    %3787 = vmatpush1.msra.mxu0 %v3777
    %3788 = vmatprep.subr.mxu0 0.0
    %3789 = vmatpush1.msra.mxu0 0.0
    %3790 = vmatprep.subr.mxu0 0.0
    %3791 = vmatpush1.msra.mxu0 0.0
    %3792 = vmatprep.subr.mxu0 0.0
    %3793 = vmatpush1.msra.mxu0 0.0
    %3794 = vmatprep.subr.mxu0 0.0
    %3795 = vmatpush1.msra.mxu0 0.0
    %3796 = vmatprep.subr.mxu0 0.0
    %3797 = vmatpush1.msra.mxu0 0.0
    %3798 = vmatprep.subr.mxu0 0.0
    %3799 = vmatpush1.msra.mxu0 0.0
    %3800 = vmatprep.subr.mxu0 0.0
    %3801 = vmatpush1.msra.mxu0 0.0
    %3802 = vmatprep.subr.mxu0 0.0
    %3803 = vmatpush1.msra.mxu0 0.0
    %3804 = vmatprep.subr.mxu0 0.0
    %3805 = vmatpush1.msra.mxu0 0.0
    %3806 = vmatprep.subr.mxu0 0.0
    %3807 = vmatpush1.msra.mxu0 0.0
    %3808 = vmatprep.subr.mxu0 0.0
    %3809 = vmatpush1.msra.mxu0 0.0
    %3810 = vmatprep.subr.mxu0 0.0
    %3811 = vmatpush1.msra.mxu0 0.0
    %3812 = vmatprep.subr.mxu0 0.0
    %3813 = vmatpush1.msra.mxu0 0.0
    %3814 = vmatprep.subr.mxu0 0.0
    %3815 = vmatpush1.msra.mxu0 0.0
    %3816 = vmatprep.subr.mxu0 0.0
    %3817 = vmatpush1.msra.mxu0 0.0
    %3818 = vmatprep.subr.mxu0 0.0
    %3819 = vmatpush1.msra.mxu0 0.0
    %3820 = vmatprep.subr.mxu0 0.0
    %3821 = vmatpush1.msra.mxu0 0.0
    %3822 = vmatprep.subr.mxu0 0.0
    %3823 = vmatpush1.msra.mxu0 0.0
    %3824 = vmatprep.subr.mxu0 0.0
    %3825 = vmatpush1.msra.mxu0 0.0
    %3826 = vmatprep.subr.mxu0 0.0
    %3827 = vmatpush1.msra.mxu0 0.0
    %3828 = vmatprep.subr.mxu0 0.0
    %3829 = vmatpush1.msra.mxu0 0.0
    %3830 = vmatprep.subr.mxu0 0.0
    %3831 = vmatpush1.msra.mxu0 0.0
    %3832 = vmatprep.subr.mxu0 0.0
    %3833 = vmatpush1.msra.mxu0 0.0
    %3834 = vmatprep.subr.mxu0 0.0
    %3835 = vmatpush1.msra.mxu0 0.0
    %3836 = vmatprep.subr.mxu0 0.0
    %3837 = vmatpush1.msra.mxu0 0.0
    %3838 = vmatprep.subr.mxu0 0.0
    %3839 = vmatpush1.msra.mxu0 0.0
    %3840 = vmatprep.subr.mxu0 0.0
    %3841 = vmatpush1.msra.mxu0 0.0
    %3842 = vmatprep.subr.mxu0 0.0
    %3843 = vmatpush1.msra.mxu0 0.0
    %3844 = vmatprep.subr.mxu0 0.0
    %3845 = vmatpush1.msra.mxu0 0.0
    %3846 = vmatprep.subr.mxu0 0.0
    %3847 = vmatpush1.msra.mxu0 0.0
    %3848 = vmatprep.mubr.f32.mxu0 0.0
    %3849 = vmatmul.mubr.f32.gmra.mrb[0].mxu0 %v3779
    %v3850 = vpop.f32.mrb[0].mxu0
    %v3851 = vadd.f32 0.0, %v3850
    %v3852 = vpop.f32.mrb[0].mxu0
    %3853 = vmatprep.mubr.f32.mxu0 0.0
    %3854 = vmatmul.mubr.f32.gmra.mrb[0].mxu0 %v3782
    %v3855 = vpop.f32.mrb[0].mxu0
    %v3856 = vadd.f32 0.0, %v3855
    %v3857 = vpop.f32.mrb[0].mxu0
    %3858 = vdwg.mxu0
    %v3859 = vadd.f32 %v3773, %v3851
    %v3860 = vadd.f32 %v3774, %v3856
    %s3861 = scalar_lea.vmem [#allocation5], 112
    %v3862 = vld [vmem:[%s3861] sm:$0xff]
    %v3863 = vld [vmem:[%s3861 + $0x8] sm:$0xff]
    %v3865 = vsel %vm250, %v3600, 0
    %v3868 = vsel %vm250, %v3601, 0
    %3870 = vmatprep.subr.mxu0 0.0
    %3871 = vmatpush1.msra.mxu0 %v3862
    %3872 = vmatprep.subr.mxu0 0.0
    %3873 = vmatpush1.msra.mxu0 %v3863
    %3874 = vmatprep.subr.mxu0 0.0
    %3875 = vmatpush1.msra.mxu0 0.0
    %3876 = vmatprep.subr.mxu0 0.0
    %3877 = vmatpush1.msra.mxu0 0.0
    %3878 = vmatprep.subr.mxu0 0.0
    %3879 = vmatpush1.msra.mxu0 0.0
    %3880 = vmatprep.subr.mxu0 0.0
    %3881 = vmatpush1.msra.mxu0 0.0
    %3882 = vmatprep.subr.mxu0 0.0
    %3883 = vmatpush1.msra.mxu0 0.0
    %3884 = vmatprep.subr.mxu0 0.0
    %3885 = vmatpush1.msra.mxu0 0.0
    %3886 = vmatprep.subr.mxu0 0.0
    %3887 = vmatpush1.msra.mxu0 0.0
    %3888 = vmatprep.subr.mxu0 0.0
    %3889 = vmatpush1.msra.mxu0 0.0
    %3890 = vmatprep.subr.mxu0 0.0
    %3891 = vmatpush1.msra.mxu0 0.0
    %3892 = vmatprep.subr.mxu0 0.0
    %3893 = vmatpush1.msra.mxu0 0.0
    %3894 = vmatprep.subr.mxu0 0.0
    %3895 = vmatpush1.msra.mxu0 0.0
    %3896 = vmatprep.subr.mxu0 0.0
    %3897 = vmatpush1.msra.mxu0 0.0
    %3898 = vmatprep.subr.mxu0 0.0
    %3899 = vmatpush1.msra.mxu0 0.0
    %3900 = vmatprep.subr.mxu0 0.0
    %3901 = vmatpush1.msra.mxu0 0.0
    %3902 = vmatprep.subr.mxu0 0.0
    %3903 = vmatpush1.msra.mxu0 0.0
    %3904 = vmatprep.subr.mxu0 0.0
    %3905 = vmatpush1.msra.mxu0 0.0
    %3906 = vmatprep.subr.mxu0 0.0
    %3907 = vmatpush1.msra.mxu0 0.0
    %3908 = vmatprep.subr.mxu0 0.0
    %3909 = vmatpush1.msra.mxu0 0.0
    %3910 = vmatprep.subr.mxu0 0.0
    %3911 = vmatpush1.msra.mxu0 0.0
    %3912 = vmatprep.subr.mxu0 0.0
    %3913 = vmatpush1.msra.mxu0 0.0
    %3914 = vmatprep.subr.mxu0 0.0
    %3915 = vmatpush1.msra.mxu0 0.0
    %3916 = vmatprep.subr.mxu0 0.0
    %3917 = vmatpush1.msra.mxu0 0.0
    %3918 = vmatprep.subr.mxu0 0.0
    %3919 = vmatpush1.msra.mxu0 0.0
    %3920 = vmatprep.subr.mxu0 0.0
    %3921 = vmatpush1.msra.mxu0 0.0
    %3922 = vmatprep.subr.mxu0 0.0
    %3923 = vmatpush1.msra.mxu0 0.0
    %3924 = vmatprep.subr.mxu0 0.0
    %3925 = vmatpush1.msra.mxu0 0.0
    %3926 = vmatprep.subr.mxu0 0.0
    %3927 = vmatpush1.msra.mxu0 0.0
    %3928 = vmatprep.subr.mxu0 0.0
    %3929 = vmatpush1.msra.mxu0 0.0
    %3930 = vmatprep.subr.mxu0 0.0
    %3931 = vmatpush1.msra.mxu0 0.0
    %3932 = vmatprep.subr.mxu0 0.0
    %3933 = vmatpush1.msra.mxu0 0.0
    %3934 = vmatprep.mubr.f32.mxu0 0.0
    %3935 = vmatmul.mubr.f32.gmra.mrb[0].mxu0 %v3865
    %v3936 = vpop.f32.mrb[0].mxu0
    %v3937 = vadd.f32 0.0, %v3936
    %v3938 = vpop.f32.mrb[0].mxu0
    %3939 = vmatprep.mubr.f32.mxu0 0.0
    %3940 = vmatmul.mubr.f32.gmra.mrb[0].mxu0 %v3868
    %v3941 = vpop.f32.mrb[0].mxu0
    %v3942 = vadd.f32 0.0, %v3941
    %v3943 = vpop.f32.mrb[0].mxu0
    %3944 = vdwg.mxu0
    %v3945 = vadd.f32 %v3859, %v3937
    %v3946 = vadd.f32 %v3860, %v3942
    %v3947 = vadd.f32 %v2119, %v3945
    %v3948 = vadd.f32 %v2120, %v3946
    %v3949 = vld [vmem:[%s6 + $0x12] ss:$0 sm:$0xff]
    %v3950 = vld [vmem:[%s6 + $0x13] ss:$0 sm:$0xff]
    %v3951 = vsel %vm64, %v3947, 0.0
    %3952 = vadd.xlane.f32.xlu0 %v3951
    %v3953 = vpop.xlane.xlu0 %3952
    %v3954 = vsel %vm64, %v3948, 0.0
    %3955 = vadd.xlane.f32.xlu0 %v3954
    %v3956 = vpop.xlane.xlu0 %3955
    %v3957 = vmul.f32 %v3953, %v71
    %v3958 = vmul.f32 %v3956, %v71
    %v3959 = vsub.f32 %v3947, %v3957
    %v3960 = vsub.f32 %v3948, %v3958
    %v3961 = vmul.f32 %v3959, %v3959
    %v3962 = vmul.f32 %v3960, %v3960
    %v3963 = vsel %vm64, %v3961, 0.0
    %3964 = vadd.xlane.f32.xlu0 %v3963
    %v3965 = vpop.xlane.xlu0 %3964
    %v3966 = vsel %vm64, %v3962, 0.0
    %3967 = vadd.xlane.f32.xlu0 %v3966
    %v3968 = vpop.xlane.xlu0 %3967
    %v3969 = vmul.f32 %v3965, %v71
    %v3970 = vmul.f32 %v3968, %v71
    %v3971 = vadd.f32 %v3969, 1e-05
    %v3972 = vadd.f32 %v3970, 1e-05
    %v3973 = vrsqrt.pop %v3971
    %v3974 = vmul.f32 %v3971, %v3973
    %vm3975 = vcmp.eq.f32.partialorder %v3971, inf
    %v3976 = vsel %vm3975, %v3971, %v3974
    %vm3977 = vcmp.eq.f32.partialorder %v3971, 0.0
    %v3978 = vand.u32 %v3971, 2147483648
    %v3979 = vsel %vm3977, %v3978, %v3976
    %v3980 = vrsqrt.pop %v3972
    %v3981 = vmul.f32 %v3972, %v3980
    %vm3982 = vcmp.eq.f32.partialorder %v3972, inf
    %v3983 = vsel %vm3982, %v3972, %v3981
    %vm3984 = vcmp.eq.f32.partialorder %v3972, 0.0
    %v3985 = vand.u32 %v3972, 2147483648
    %v3986 = vsel %vm3984, %v3985, %v3983
    %v3987 = vrcp.pop %v3979
    %v3988 = vmul.f32 %v3959, %v3987
    %v3989 = vrcp.pop %v3986
    %v3990 = vmul.f32 %v3960, %v3989
    %v3991 = vmul.f32 %v3988, %v3949
    %v3992 = vmul.f32 %v3990, %v3949
    %v3993 = vadd.f32 %v3991, %v3950
    %v3994 = vadd.f32 %v3992, %v3950
    %s3995 = scalar_lea.vmem %s3, 32
    %v3996 = vld [vmem:[%s3995] sm:$0xff]
    %v3997 = vld [vmem:[%s3995 + $0x8] sm:$0xff]
    %v3998 = vld [vmem:[%s3995 + $0x10] sm:$0xff]
    %v3999 = vld [vmem:[%s3995 + $0x18] sm:$0xff]
    %v4000 = vld [vmem:[%s6 + $0x16] ss:$0 sm:$0xff]
    %v4002 = vsel %vm64, %v3993, 0
    %v4005 = vsel %vm64, %v3994, 0
    %4007 = vmatprep.subr.mxu0 0.0
    %4008 = vmatpush1.msra.mxu0 %v3996
    %4009 = vmatprep.subr.mxu0 0.0
    %4010 = vmatpush1.msra.mxu0 %v3997
    %4011 = vmatprep.subr.mxu0 0.0
    %4012 = vmatpush1.msra.mxu0 %v3998
    %4013 = vmatprep.subr.mxu0 0.0
    %4014 = vmatpush1.msra.mxu0 %v3999
    %4015 = vmatprep.subr.mxu0 0.0
    %4016 = vmatpush1.msra.mxu0 0.0
    %4017 = vmatprep.subr.mxu0 0.0
    %4018 = vmatpush1.msra.mxu0 0.0
    %4019 = vmatprep.subr.mxu0 0.0
    %4020 = vmatpush1.msra.mxu0 0.0
    %4021 = vmatprep.subr.mxu0 0.0
    %4022 = vmatpush1.msra.mxu0 0.0
    %4023 = vmatprep.subr.mxu0 0.0
    %4024 = vmatpush1.msra.mxu0 0.0
    %4025 = vmatprep.subr.mxu0 0.0
    %4026 = vmatpush1.msra.mxu0 0.0
    %4027 = vmatprep.subr.mxu0 0.0
    %4028 = vmatpush1.msra.mxu0 0.0
    %4029 = vmatprep.subr.mxu0 0.0
    %4030 = vmatpush1.msra.mxu0 0.0
    %4031 = vmatprep.subr.mxu0 0.0
    %4032 = vmatpush1.msra.mxu0 0.0
    %4033 = vmatprep.subr.mxu0 0.0
    %4034 = vmatpush1.msra.mxu0 0.0
    %4035 = vmatprep.subr.mxu0 0.0
    %4036 = vmatpush1.msra.mxu0 0.0
    %4037 = vmatprep.subr.mxu0 0.0
    %4038 = vmatpush1.msra.mxu0 0.0
    %4039 = vmatprep.subr.mxu0 0.0
    %4040 = vmatpush1.msra.mxu0 0.0
    %4041 = vmatprep.subr.mxu0 0.0
    %4042 = vmatpush1.msra.mxu0 0.0
    %4043 = vmatprep.subr.mxu0 0.0
    %4044 = vmatpush1.msra.mxu0 0.0
    %4045 = vmatprep.subr.mxu0 0.0
    %4046 = vmatpush1.msra.mxu0 0.0
    %4047 = vmatprep.subr.mxu0 0.0
    %4048 = vmatpush1.msra.mxu0 0.0
    %4049 = vmatprep.subr.mxu0 0.0
    %4050 = vmatpush1.msra.mxu0 0.0
    %4051 = vmatprep.subr.mxu0 0.0
    %4052 = vmatpush1.msra.mxu0 0.0
    %4053 = vmatprep.subr.mxu0 0.0
    %4054 = vmatpush1.msra.mxu0 0.0
    %4055 = vmatprep.subr.mxu0 0.0
    %4056 = vmatpush1.msra.mxu0 0.0
    %4057 = vmatprep.subr.mxu0 0.0
    %4058 = vmatpush1.msra.mxu0 0.0
    %4059 = vmatprep.subr.mxu0 0.0
    %4060 = vmatpush1.msra.mxu0 0.0
    %4061 = vmatprep.subr.mxu0 0.0
    %4062 = vmatpush1.msra.mxu0 0.0
    %4063 = vmatprep.subr.mxu0 0.0
    %4064 = vmatpush1.msra.mxu0 0.0
    %4065 = vmatprep.subr.mxu0 0.0
    %4066 = vmatpush1.msra.mxu0 0.0
    %4067 = vmatprep.subr.mxu0 0.0
    %4068 = vmatpush1.msra.mxu0 0.0
    %4069 = vmatprep.subr.mxu0 0.0
    %4070 = vmatpush1.msra.mxu0 0.0
    %4071 = vmatprep.mubr.f32.mxu0 0.0
    %4072 = vmatmul.mubr.f32.gmra.mrb[0].mxu0 %v4002
    %v4073 = vpop.f32.mrb[0].mxu0
    %v4074 = vadd.f32 %v4000, %v4073
    %v4075 = vpop.f32.mrb[0].mxu0
    %4076 = vmatprep.mubr.f32.mxu0 0.0
    %4077 = vmatmul.mubr.f32.gmra.mrb[0].mxu0 %v4005
    %v4078 = vpop.f32.mrb[0].mxu0
    %v4079 = vadd.f32 %v4000, %v4078
    %v4080 = vpop.f32.mrb[0].mxu0
    %4081 = vdwg.mxu0
    %v4082 = vmax.f32 %v4074, 0.0
    %v4083 = vmax.f32 %v4079, 0.0
    %s4084 = scalar_lea.vmem %s4, 64
    %v4085 = vld [vmem:[%s4084] sm:$0xff]
    %v4086 = vld [vmem:[%s4084 + $0x8] sm:$0xff]
    %v4087 = vld [vmem:[%s4084 + $0x10] sm:$0xff]
    %v4088 = vld [vmem:[%s4084 + $0x18] sm:$0xff]
    %v4089 = vld [vmem:[%s4084 + $0x20] sm:$0xff]
    %v4090 = vld [vmem:[%s4084 + $0x28] sm:$0xff]
    %v4091 = vld [vmem:[%s4084 + $0x30] sm:$0xff]
    %v4092 = vld [vmem:[%s4084 + $0x38] sm:$0xff]
    %v4093 = vld [vmem:[%s6 + $0x17] ss:$0 sm:$0xff]
    %v4095 = vsel %vm2037, %v4082, 0
    %v4098 = vsel %vm2037, %v4083, 0
    %4100 = vmatprep.subr.mxu0 0.0
    %4101 = vmatpush1.msra.mxu0 %v4085
    %4102 = vmatprep.subr.mxu0 0.0
    %4103 = vmatpush1.msra.mxu0 %v4086
    %4104 = vmatprep.subr.mxu0 0.0
    %4105 = vmatpush1.msra.mxu0 %v4087
    %4106 = vmatprep.subr.mxu0 0.0
    %4107 = vmatpush1.msra.mxu0 %v4088
    %4108 = vmatprep.subr.mxu0 0.0
    %4109 = vmatpush1.msra.mxu0 %v4089
    %4110 = vmatprep.subr.mxu0 0.0
    %4111 = vmatpush1.msra.mxu0 %v4090
    %4112 = vmatprep.subr.mxu0 0.0
    %4113 = vmatpush1.msra.mxu0 %v4091
    %4114 = vmatprep.subr.mxu0 0.0
    %4115 = vmatpush1.msra.mxu0 %v4092
    %4116 = vmatprep.subr.mxu0 0.0
    %4117 = vmatpush1.msra.mxu0 0.0
    %4118 = vmatprep.subr.mxu0 0.0
    %4119 = vmatpush1.msra.mxu0 0.0
    %4120 = vmatprep.subr.mxu0 0.0
    %4121 = vmatpush1.msra.mxu0 0.0
    %4122 = vmatprep.subr.mxu0 0.0
    %4123 = vmatpush1.msra.mxu0 0.0
    %4124 = vmatprep.subr.mxu0 0.0
    %4125 = vmatpush1.msra.mxu0 0.0
    %4126 = vmatprep.subr.mxu0 0.0
    %4127 = vmatpush1.msra.mxu0 0.0
    %4128 = vmatprep.subr.mxu0 0.0
    %4129 = vmatpush1.msra.mxu0 0.0
    %4130 = vmatprep.subr.mxu0 0.0
    %4131 = vmatpush1.msra.mxu0 0.0
    %4132 = vmatprep.subr.mxu0 0.0
    %4133 = vmatpush1.msra.mxu0 0.0
    %4134 = vmatprep.subr.mxu0 0.0
    %4135 = vmatpush1.msra.mxu0 0.0
    %4136 = vmatprep.subr.mxu0 0.0
    %4137 = vmatpush1.msra.mxu0 0.0
    %4138 = vmatprep.subr.mxu0 0.0
    %4139 = vmatpush1.msra.mxu0 0.0
    %4140 = vmatprep.subr.mxu0 0.0
    %4141 = vmatpush1.msra.mxu0 0.0
    %4142 = vmatprep.subr.mxu0 0.0
    %4143 = vmatpush1.msra.mxu0 0.0
    %4144 = vmatprep.subr.mxu0 0.0
    %4145 = vmatpush1.msra.mxu0 0.0
    %4146 = vmatprep.subr.mxu0 0.0
    %4147 = vmatpush1.msra.mxu0 0.0
    %4148 = vmatprep.subr.mxu0 0.0
    %4149 = vmatpush1.msra.mxu0 0.0
    %4150 = vmatprep.subr.mxu0 0.0
    %4151 = vmatpush1.msra.mxu0 0.0
    %4152 = vmatprep.subr.mxu0 0.0
    %4153 = vmatpush1.msra.mxu0 0.0
    %4154 = vmatprep.subr.mxu0 0.0
    %4155 = vmatpush1.msra.mxu0 0.0
    %4156 = vmatprep.subr.mxu0 0.0
    %4157 = vmatpush1.msra.mxu0 0.0
    %4158 = vmatprep.subr.mxu0 0.0
    %4159 = vmatpush1.msra.mxu0 0.0
    %4160 = vmatprep.subr.mxu0 0.0
    %4161 = vmatpush1.msra.mxu0 0.0
    %4162 = vmatprep.subr.mxu0 0.0
    %4163 = vmatpush1.msra.mxu0 0.0
    %4164 = vmatprep.mubr.f32.mxu0 0.0
    %4165 = vmatmul.mubr.f32.gmra.mrb[0].mxu0 %v4095
    %v4166 = vpop.f32.mrb[0].mxu0
    %v4167 = vadd.f32 %v4093, %v4166
    %v4168 = vpop.f32.mrb[0].mxu0
    %4169 = vmatprep.mubr.f32.mxu0 0.0
    %4170 = vmatmul.mubr.f32.gmra.mrb[0].mxu0 %v4098
    %v4171 = vpop.f32.mrb[0].mxu0
    %v4172 = vadd.f32 %v4093, %v4171
    %v4173 = vpop.f32.mrb[0].mxu0
    %4174 = vdwg.mxu0
    %v4175 = vadd.f32 %v3947, %v4167
    %v4176 = vadd.f32 %v3948, %v4172
    %v4177 = vmax.f32 %v4175, 0.0
    %v4178 = vmax.f32 %v4176, 0.0
    %v4179 = vld [vmem:[%s6 + $0x20] ss:$0 sm:$0xff]
    %v4180 = vld [vmem:[%s6 + $0x21] ss:$0 sm:$0xff]
    %v4183 = vrot.slane %v4178, 7
    %vm4186 = vcmask 261127
    %v4187 = vsel %vm4186, %v4177, 0.0
    %4188 = vadd.xlane.f32.xlu0 %v4187
    %v4189 = vpop.xlane.xlu0 %4188
    %vm4190 = vcmask 253952
    %v4191 = vsel %vm4190, %v4183, 0.0
    %4192 = vadd.xlane.f32.xlu0 %v4191
    %v4193 = vpop.xlane.xlu0 %4192
    %v4194 = vmul.f32 %v4189, %v71
    %v4195 = vmul.f32 %v4193, %v71
    %v4198 = vrot.slane %v4195, 1
    %v4201 = vsub.f32 %v4177, %v4194
    %v4202 = vsub.f32 %v4178, %v4198
    %v4203 = vmul.f32 %v4201, %v4201
    %v4204 = vmul.f32 %v4202, %v4202
    %v4207 = vrot.slane %v4204, 7
    %v4210 = vsel %vm4186, %v4203, 0.0
    %4211 = vadd.xlane.f32.xlu0 %v4210
    %v4212 = vpop.xlane.xlu0 %4211
    %v4213 = vsel %vm4190, %v4207, 0.0
    %4214 = vadd.xlane.f32.xlu0 %v4213
    %v4215 = vpop.xlane.xlu0 %4214
    %v4216 = vmul.f32 %v4212, %v71
    %v4217 = vmul.f32 %v4215, %v71
    %v4218 = vadd.f32 %v4216, 1e-05
    %v4219 = vadd.f32 %v4217, 1e-05
    %v4220 = vrsqrt.pop %v4218
    %v4221 = vmul.f32 %v4218, %v4220
    %vm4222 = vcmp.eq.f32.partialorder %v4218, inf
    %v4223 = vsel %vm4222, %v4218, %v4221
    %vm4224 = vcmp.eq.f32.partialorder %v4218, 0.0
    %v4225 = vand.u32 %v4218, 2147483648
    %v4226 = vsel %vm4224, %v4225, %v4223
    %v4227 = vrsqrt.pop %v4219
    %v4228 = vmul.f32 %v4219, %v4227
    %vm4229 = vcmp.eq.f32.partialorder %v4219, inf
    %v4230 = vsel %vm4229, %v4219, %v4228
    %vm4231 = vcmp.eq.f32.partialorder %v4219, 0.0
    %v4232 = vand.u32 %v4219, 2147483648
    %v4233 = vsel %vm4231, %v4232, %v4230
    %v4236 = vrot.slane %v4233, 1
    %v4239 = vrcp.pop %v4226
    %v4240 = vmul.f32 %v4201, %v4239
    %v4241 = vrcp.pop %v4236
    %v4242 = vmul.f32 %v4202, %v4241
    %v4243 = vmul.f32 %v4240, %v4179
    %v4244 = vmul.f32 %v4242, %v4179
    %v4245 = vadd.f32 %v4243, %v4180
    %v4246 = vadd.f32 %v4244, %v4180
    %v4247 = vld [vmem:[%s5] sm:$0xff]
    %v4248 = vld [vmem:[%s5 + $0x8] sm:$0xff]
    %v4249 = vld [vmem:[%s5 + $0x10] sm:$0xff]
    %v4250 = vld [vmem:[%s5 + $0x18] sm:$0xff]
    %v4251 = vld [vmem:[%s6 + $0x22] ss:$0 sm:$0xff]
    %v4254 = vrot.slane %v4245, 7
    %v4255 = vrot.slane %v4246, 6
    %vm4256 = vcmask 1041409
    %v4257 = vsel %vm4256, %v4255, %v4254
    %v4258 = vsel %vm64, %v4257, 0
    %4260 = vmatprep.subr.mxu0 0.0
    %4261 = vmatpush1.msra.mxu0 %v4247
    %4262 = vmatprep.subr.mxu0 0.0
    %4263 = vmatpush1.msra.mxu0 %v4248
    %4264 = vmatprep.subr.mxu0 0.0
    %4265 = vmatpush1.msra.mxu0 %v4249
    %4266 = vmatprep.subr.mxu0 0.0
    %4267 = vmatpush1.msra.mxu0 %v4250
    %4268 = vmatprep.subr.mxu0 0.0
    %4269 = vmatpush1.msra.mxu0 0.0
    %4270 = vmatprep.subr.mxu0 0.0
    %4271 = vmatpush1.msra.mxu0 0.0
    %4272 = vmatprep.subr.mxu0 0.0
    %4273 = vmatpush1.msra.mxu0 0.0
    %4274 = vmatprep.subr.mxu0 0.0
    %4275 = vmatpush1.msra.mxu0 0.0
    %4276 = vmatprep.subr.mxu0 0.0
    %4277 = vmatpush1.msra.mxu0 0.0
    %4278 = vmatprep.subr.mxu0 0.0
    %4279 = vmatpush1.msra.mxu0 0.0
    %4280 = vmatprep.subr.mxu0 0.0
    %4281 = vmatpush1.msra.mxu0 0.0
    %4282 = vmatprep.subr.mxu0 0.0
    %4283 = vmatpush1.msra.mxu0 0.0
    %4284 = vmatprep.subr.mxu0 0.0
    %4285 = vmatpush1.msra.mxu0 0.0
    %4286 = vmatprep.subr.mxu0 0.0
    %4287 = vmatpush1.msra.mxu0 0.0
    %4288 = vmatprep.subr.mxu0 0.0
    %4289 = vmatpush1.msra.mxu0 0.0
    %4290 = vmatprep.subr.mxu0 0.0
    %4291 = vmatpush1.msra.mxu0 0.0
    %4292 = vmatprep.subr.mxu0 0.0
    %4293 = vmatpush1.msra.mxu0 0.0
    %4294 = vmatprep.subr.mxu0 0.0
    %4295 = vmatpush1.msra.mxu0 0.0
    %4296 = vmatprep.subr.mxu0 0.0
    %4297 = vmatpush1.msra.mxu0 0.0
    %4298 = vmatprep.subr.mxu0 0.0
    %4299 = vmatpush1.msra.mxu0 0.0
    %4300 = vmatprep.subr.mxu0 0.0
    %4301 = vmatpush1.msra.mxu0 0.0
    %4302 = vmatprep.subr.mxu0 0.0
    %4303 = vmatpush1.msra.mxu0 0.0
    %4304 = vmatprep.subr.mxu0 0.0
    %4305 = vmatpush1.msra.mxu0 0.0
    %4306 = vmatprep.subr.mxu0 0.0
    %4307 = vmatpush1.msra.mxu0 0.0
    %4308 = vmatprep.subr.mxu0 0.0
    %4309 = vmatpush1.msra.mxu0 0.0
    %4310 = vmatprep.subr.mxu0 0.0
    %4311 = vmatpush1.msra.mxu0 0.0
    %4312 = vmatprep.subr.mxu0 0.0
    %4313 = vmatpush1.msra.mxu0 0.0
    %4314 = vmatprep.subr.mxu0 0.0
    %4315 = vmatpush1.msra.mxu0 0.0
    %4316 = vmatprep.subr.mxu0 0.0
    %4317 = vmatpush1.msra.mxu0 0.0
    %4318 = vmatprep.subr.mxu0 0.0
    %4319 = vmatpush1.msra.mxu0 0.0
    %4320 = vmatprep.subr.mxu0 0.0
    %4321 = vmatpush1.msra.mxu0 0.0
    %4322 = vmatprep.subr.mxu0 0.0
    %4323 = vmatpush1.msra.mxu0 0.0
    %4324 = vmatprep.mubr.f32.mxu0 0.0
    %4325 = vmatmul.mubr.f32.gmra.mrb[0].mxu0 %v4258
    %v4326 = vpop.f32.mrb[0].mxu0
    %v4327 = vadd.f32 %v4251, %v4326
    %v4328 = vpop.f32.mrb[0].mxu0
    %4329 = vdwg.mxu0
    %v4332 = vunpack.c.l.s4 1966171168
    %v4333 = vunpack.c.0.s8 %v4332
    %v4334 = vlaneseq
    %v4335 = vshrl.u32 %v4334, 7
    %v4336 = vsub.s32 %v4333, %v4335
    %v4337 = vrot.slane %v4327, %v4336
    %v4338 = vcombine.high %v4337, %v4337
    %v4340 = vunpack.c.l.s4 1966171168
    %v4341 = vunpack.c.0.s8 %v4340
    %v4342 = vlaneseq
    %v4343 = vshrl.u32 %v4342, 7
    %v4344 = vsub.s32 %v4341, %v4343
    %v4345 = vrot.slane %v4337, %v4344
    %v4347 = vunpack.c.l.s4 1966171168
    %v4348 = vunpack.c.0.s8 %v4347
    %v4349 = vlaneseq
    %v4350 = vshrl.u32 %v4349, 7
    %v4351 = vsub.s32 %v4348, %v4350
    %v4352 = vrot.slane %v4338, %v4351
    %vm4355 = vcmask 122880
    %4356 = vst.msk [vmem:[#allocation7] sm:$0x1] %vm4355, %v4345
    %4357 = vst.msk [vmem:[#allocation7 + $0x1] sm:$0x1] %vm4355, %v4352
    // Predicated region
    $region38: #{tpu_custom_call.1} parent=1 // pred_check
      _
    $region39: #{tpu_custom_call.1} parent=1 // pred_check_branch
      %4359 = sbr.rel (0) target = $region41
    $region40: #{tpu_custom_call.1} parent=1 // pred_region
      %s4361 = ssub.s32 32, 32
      %4362 = vsyncadd [#allocation4], %s4361
      %s4363 = sshll.u32 [#allocation7], 4
      %s4364 = int_to_ptr.vmem [resolvable:$true] %s4363
      %4369 = dma.vmem_to_hbm [thread:$0]  %s4364, 32, %s7, [#allocation4], 16, 16, 1
    $region41: #{tpu_custom_call.1} parent=1 // pred_fallthru
      _
    // Predicated region
    $region42: #{tpu_custom_call.1} parent=1 // pred_check
      _
    $region43: #{tpu_custom_call.1} parent=1 // pred_check_branch
      %4371 = sbr.rel (0) target = $region45
    $region44: #{tpu_custom_call.1} parent=1 // pred_region
      %4372 = dma.done [#allocation4], 32
    $region45: #{tpu_custom_call.1} parent=1 // pred_fallthru
      _
    %4373 = vsyncpa [#allocation3], 1
    %4374 = vsyncpa [#allocation6], 1
    %4375 = vsyncpa [#allocation4], 1

</llo_original>
